<compile_context>
chip_gen: v7x
topology: tpu7x:2x2x1
jax: 0.10.0
libtpu: 0.0.40
codegen_flags: <defaults>
</compile_context>

<pallas_src>
import functools

import jax
import jax.numpy as jnp
from jax.experimental import pallas as pl
from jax.experimental.pallas import tpu as pltpu

KSIZE = 7
PAD = 3


# ----------------------------------------------------------------------------
# One-time (import-time) pltpu.roll direction resolution.
# We need shifted[l] = x[(l + off) % n]; with the numpy convention
# (out[i] = in[i - s]) that is s = (-off) % n, i.e. sign = -1.
# ----------------------------------------------------------------------------
def _detect_roll_sign():
    try:
        def probe(x_ref, o_ref):
            o_ref[...] = pltpu.roll(x_ref[...], 1, axis=1)

        x = jnp.arange(8 * 128, dtype=jnp.float32).reshape(8, 128)
        y = pl.pallas_call(
            probe, out_shape=jax.ShapeDtypeStruct((8, 128), jnp.float32))(x)
        return -1 if bool(y[0, 1] == x[0, 0]) else 1
    except Exception:
        return -1          # documented numpy-matching convention


_ROLL_SIGN = _detect_roll_sign()


# ----------------------------------------------------------------------------
# Kernel: one grid step processes a (Bb, C, H*W) slab of the batch.
# ----------------------------------------------------------------------------
def _cbam_kernel(x_ref, w1_ref, w2_ref, wsp_ref, mask_ref, o_ref, *, W, roll_sign):
    """
    x_ref   : (Bb, C, HW) VMEM  input features (C on sublanes, HW on lanes)
    w1_ref  : (C, Cr)     VMEM  channel-MLP fc1 (1x1 conv, no bias)
    w2_ref  : (Cr, C)     VMEM  channel-MLP fc2 (1x1 conv, no bias)
    wsp_ref : (2, 49)     SMEM  7x7 spatial-conv weights (row 0: avg map, 1: max map)
    mask_ref: (49, HW)    VMEM  precomputed zero-padding masks, one row per tap
    o_ref   : (Bb, C, HW) VMEM  output
    """
    Bb, C, HW = x_ref.shape
    x = x_ref[...]                                   # native dtype, no f32 copy

    # ---------------- Channel attention ----------------
    avg = jnp.mean(x, axis=2)                        # (Bb, C)  lane reduce over HW
    mx = jnp.max(x, axis=2)                          # (Bb, C)
    pooled = jnp.concatenate([avg, mx], axis=0).astype(jnp.float32)   # (2Bb, C)
    hid = jnp.maximum(
        jnp.dot(pooled, w1_ref[...].astype(jnp.float32),
                preferred_element_type=jnp.float32), 0.0)
    z = jnp.dot(hid, w2_ref[...].astype(jnp.float32),
                preferred_element_type=jnp.float32)  # (2Bb, C)
    ca = jax.nn.sigmoid(z[:Bb] + z[Bb:])             # (Bb, C) f32
    ca_n = ca.astype(x.dtype)

    ca_x = x * ca_n[:, :, None]                      # (Bb, C, HW) channel-gated feats

    # ---------------- Spatial attention ----------------
    # NOTE: on v7x the channel-mean could be offloaded to the (idle) MXU via a
    # batched einsum of ca with x; kept as a sublane reduce here for robustness.
    a_map = jnp.mean(ca_x, axis=1)                   # (Bb, HW) channel mean
    m_map = jnp.max(ca_x, axis=1)                    # (Bb, HW) channel max
    maps = jnp.concatenate([a_map, m_map], axis=0).astype(jnp.float32)   # (2Bb, HW)

    sub = jax.lax.broadcasted_iota(jnp.int32, (2 * Bb, 1), 0)
    is_avg_row = sub < Bb                            # rows [0,Bb): avg map, rest: max

    # 7x7 cross-correlation (PyTorch Conv2d, padding=3) as 49 masked lane
    # rotations of the flattened spatial axis: tap (kh, kw) == lane offset kh*W+kw.
    # Four interleaved accumulators break the serial add chain; padding masks
    # come from the small VMEM table instead of live boolean vregs.
    accs = [jnp.zeros((2 * Bb, HW), jnp.float32) for _ in range(4)]
    for kh in range(-PAD, PAD + 1):
        for kw in range(-PAD, PAD + 1):
            k = (kh + PAD) * KSIZE + (kw + PAD)
            off = kh * W + kw
            rolled = maps if off == 0 else pltpu.roll(
                maps, (roll_sign * off) % HW, axis=1)
            mrow = mask_ref[pl.ds(k, 1), :]                               # (1, HW)
            wk = jnp.where(is_avg_row, wsp_ref[0, k], wsp_ref[1, k])      # (2Bb, 1)
            accs[k % 4] = accs[k % 4] + (rolled * mrow) * wk
    acc = (accs[0] + accs[1]) + (accs[2] + accs[3])

    conv = acc[:Bb] + acc[Bb:]                       # (Bb, HW): avg-branch + max-branch
    sa = jax.nn.sigmoid(conv).astype(x.dtype)        # spatial attention map

    # CBAM.forward: out = spatial_attention_map * ORIGINAL input.
    o_ref[...] = (x * sa[:, None, :]).astype(o_ref.dtype)


# ----------------------------------------------------------------------------
# Wrapper helpers
# ----------------------------------------------------------------------------
def _vmem_capacity_bytes():
    """Physical VMEM per core; conservative 64 MiB fallback if unknown."""
    try:
        info = pltpu.get_tpu_info()
        cap = int(getattr(info, "vmem_capacity_bytes", 0))
        if cap > 0:
            return cap
    except Exception:
        pass
    return 64 * 1024 * 1024


def _choose_block_n(N, per_batch_bytes, budget_bytes, two_core_chip):
    """Largest divisor of N that fits the VMEM budget, preferring multiples of 8.
    Only on 2-TensorCore parts do we keep >= 2 grid steps so both TCs get work."""
    cap = int(max(1, min(N, budget_bytes // max(per_batch_bytes, 1))))
    if two_core_chip and N > 1:
        cap = min(cap, max(1, N // 2))
    best, best8 = 1, 0
    for d in range(1, cap + 1):
        if N % d == 0:
            best = d
            if d % 8 == 0:
                best8 = d
    return best8 if best8 else best


def _build_tap_masks(H, W):
    """(49, H*W) f32 table: mask[k, l] == 1 iff tap k of the 7x7 window read at
    flattened output position l stays inside the (zero-padded) image."""
    HW = H * W
    lane = jnp.arange(HW, dtype=jnp.int32)
    r = lane // W
    c = lane % W
    rows = []
    for kh in range(-PAD, PAD + 1):
        for kw in range(-PAD, PAD + 1):
            ok = (r + kh >= 0) & (r + kh < H) & (c + kw >= 0) & (c + kw < W)
            rows.append(ok.astype(jnp.float32))
    return jnp.stack(rows, axis=0)


# ----------------------------------------------------------------------------
# Wrapper
# ----------------------------------------------------------------------------
def cbam_pallas(x_nchw, w1, w2, wsp, *, block_n=None):
    """CBAM forward.  x_nchw: (N, C, H, W); w1: (C, C//r); w2: (C//r, C);
    wsp: (2, 7, 7).  Returns (N, C, H, W) in the input dtype."""
    N, C, H, W = x_nchw.shape
    HW = H * W
    Cr = w1.shape[1]

    # NCHW consumed directly as (N, C, H*W): pure reshape, lane-dense last dim.
    x3 = x_nchw.reshape(N, C, HW)
    wsp_flat = wsp.reshape(2, KSIZE * KSIZE).astype(jnp.float32)
    mask_tab = _build_tap_masks(H, W)                          # (49, HW) f32

    # --- generation-aware VMEM budgeting -------------------------------------
    vmem_cap = _vmem_capacity_bytes()
    two_core_chip = vmem_cap <= 96 * 1024 * 1024               # v7x-like: 64 MiB/TC
    budget = max(24 * 1024 * 1024,
                 min(int(0.58 * vmem_cap), 76 * 1024 * 1024))  # block-choosing budget
    vmem_limit = max(32 * 1024 * 1024,
                     min(int(0.64 * vmem_cap), 84 * 1024 * 1024))

    itemsize = x3.dtype.itemsize
    blk = C * HW * itemsize
    # Per batch element per step: double-buffered in + out blocks, the native-
    # dtype gated/product temporaries, and the f32 map-sized temporaries
    # (maps / 4 accumulators / rolled / conv).
    per_batch = 6 * blk + 24 * HW * 4
    # Resident extras: mask table, weights, compiler-internal scratch slack.
    fixed = 2 * (KSIZE * KSIZE * HW * 4) + 4 * (C * Cr + Cr * C) * 4 + 2 * 1024 * 1024

    if block_n is None:
        block_n = _choose_block_n(N, per_batch, max(budget - fixed, per_batch),
                                  two_core_chip)
    grid = (N // block_n,)

    kernel = functools.partial(_cbam_kernel, W=W, roll_sign=_ROLL_SIGN)

    out3 = pl.pallas_call(
        kernel,
        out_shape=jax.ShapeDtypeStruct((N, C, HW), x3.dtype),
        grid=grid,
        in_specs=[
            pl.BlockSpec((block_n, C, HW), lambda n: (n, 0, 0)),
            pl.BlockSpec((C, Cr), lambda n: (0, 0)),
            pl.BlockSpec((Cr, C), lambda n: (0, 0)),
            pl.BlockSpec(memory_space=pltpu.MemorySpace.SMEM),
            pl.BlockSpec((KSIZE * KSIZE, HW), lambda n: (0, 0)),
        ],
        out_specs=pl.BlockSpec((block_n, C, HW), lambda n: (n, 0, 0)),
        compiler_params=pltpu.CompilerParams(
            dimension_semantics=("parallel",),
            vmem_limit_bytes=vmem_limit),
    )(x3, w1, w2, wsp_flat, mask_tab)

    return out3.reshape(N, C, H, W)


# ----------------------------------------------------------------------------
# Pure-JAX reference mirroring the PyTorch CBAM forward (NCHW)
# ----------------------------------------------------------------------------
def cbam_reference(x_nchw, w1, w2, wsp):
    N, C, H, W = x_nchw.shape
    avg = x_nchw.mean(axis=(2, 3))              # (N, C)
    mx = x_nchw.max(axis=(2, 3))                # (N, C)

    def mlp(v):
        return jnp.maximum(v @ w1, 0.0) @ w2

    ca = jax.nn.sigmoid(mlp(avg) + mlp(mx))     # (N, C)
    ca_x = x_nchw * ca[:, :, None, None]

    a_map = ca_x.mean(axis=1)                   # (N, H, W)
    m_map = ca_x.max(axis=1)                    # (N, H, W)
    a_p = jnp.pad(a_map, ((0, 0), (PAD, PAD), (PAD, PAD)))
    m_p = jnp.pad(m_map, ((0, 0), (PAD, PAD), (PAD, PAD)))

    conv = jnp.zeros((N, H, W), jnp.float32)
    for dh in range(KSIZE):
        for dw in range(KSIZE):
            conv = conv + wsp[0, dh, dw] * a_p[:, dh:dh + H, dw:dw + W] \
                        + wsp[1, dh, dw] * m_p[:, dh:dh + H, dw:dw + W]
    sa = jax.nn.sigmoid(conv)                   # (N, H, W)
    # CBAM.forward multiplies the spatial map by the ORIGINAL input.
    return x_nchw * sa[:, None, :, :]


if __name__ == "__main__":
    N, C, H, W = 2, 32, 16, 16                  # ratio=16 -> hidden channels = 2
    Cr = C // 16

    key = jax.random.PRNGKey(0)
    kx, k1, k2, k3 = jax.random.split(key, 4)
    x = jax.random.normal(kx, (N, C, H, W), jnp.float32)
    w1 = 0.2 * jax.random.normal(k1, (C, Cr), jnp.float32)             # fc1 (1x1 conv, no bias)
    w2 = 0.2 * jax.random.normal(k2, (Cr, C), jnp.float32)             # fc2 (1x1 conv, no bias)
    wsp = 0.1 * jax.random.normal(k3, (2, KSIZE, KSIZE), jnp.float32)  # 7x7 conv, no bias

    out = jax.block_until_ready(cbam_pallas(x, w1, w2, wsp))
    ref = cbam_reference(x, w1, w2, wsp)

    assert out.shape == (N, C, H, W), out.shape
    err = float(jnp.abs(out - ref).max())
    assert jnp.allclose(out, ref, atol=1e-4, rtol=1e-4), err
    print("KERNEL_OK")
</pallas_src>

<mosaic_0001>
module attributes {stable_mosaic.version = 11 : i64} {
  func.func @probe(%arg0: memref<8x128xf32, #tpu.memory_space<vmem>>, %arg1: memref<8x128xf32, #tpu.memory_space<vmem>>) attributes {dimension_semantics = [], scalar_prefetch = 0 : i64, scratch_operands = 0 : i64, tpu.core_type = #tpu.core_type<tc>} {
    %c0 = arith.constant 0 : index
    %c0_0 = arith.constant 0 : index
    %0 = vector.load %arg0[%c0, %c0_0] : memref<8x128xf32, #tpu.memory_space<vmem>>, vector<8x128xf32>
    %c1_i32 = arith.constant 1 : i32
    %1 = tpu.dynamic_rotate %0 by %c1_i32 dim 1 : vector<8x128xf32>, i32 -> vector<8x128xf32>
    %c0_1 = arith.constant 0 : index
    %c0_2 = arith.constant 0 : index
    %2 = vector.load %arg1[%c0_1, %c0_2] : memref<8x128xf32, #tpu.memory_space<vmem>>, vector<8x128xf32>
    tpu.vector_store %arg1[%c0_1, %c0_2], %1 {strides = array<i32>} : memref<8x128xf32, #tpu.memory_space<vmem>>, vector<8x128xf32>,
    return
  }
}

module attributes {stable_mosaic.version = 11 : i64} {
  func.func @_cbam_kernel(%arg0: i32, %arg1: memref<1x32x256xf32, #tpu.memory_space<vmem>>, %arg2: memref<32x2xf32, #tpu.memory_space<vmem>>, %arg3: memref<2x32xf32, #tpu.memory_space<vmem>>, %arg4: memref<2x49xf32, #tpu.memory_space<smem>>, %arg5: memref<49x256xf32, #tpu.memory_space<vmem>>, %arg6: memref<1x32x256xf32, #tpu.memory_space<vmem>>) attributes {dimension_semantics = [#tpu.dimension_semantics<parallel>], iteration_bounds = array<i64: 2>, scalar_prefetch = 0 : i64, scratch_operands = 0 : i64, tpu.core_type = #tpu.core_type<tc>, window_params = [{transform_indices = @transform_0, window_bounds = array<i64: 1, 32, 256>}, {pipeline_mode = #tpu.pipeline_mode<synchronous>, transform_indices = @transform_1, window_bounds = array<i64: 32, 2>}, {pipeline_mode = #tpu.pipeline_mode<synchronous>, transform_indices = @transform_2, window_bounds = array<i64: 2, 32>}, {transform_indices = @transform_3, window_bounds = array<i64: 2, 49>}, {pipeline_mode = #tpu.pipeline_mode<synchronous>, transform_indices = @transform_4, window_bounds = array<i64: 49, 256>}, {transform_indices = @transform_5, window_bounds = array<i64: 1, 32, 256>}]} {
    %c0 = arith.constant 0 : index
    %c0_0 = arith.constant 0 : index
    %c0_1 = arith.constant 0 : index
    %0 = vector.load %arg1[%c0, %c0_0, %c0_1] : memref<1x32x256xf32, #tpu.memory_space<vmem>>, vector<1x32x256xf32>
    %cst = arith.constant dense<0.000000e+00> : vector<1x32xf32>
    %1 = vector.multi_reduction <add>, %0, %cst [2] : vector<1x32x256xf32> to vector<1x32xf32>
    %cst_2 = arith.constant 2.560000e+02 : f32
    %2 = vector.broadcast %cst_2 : f32 to vector<1x32xf32>
    %3 = arith.divf %1, %2 : vector<1x32xf32>
    %cst_3 = arith.constant dense<0xFF800000> : vector<1x32xf32>
    %4 = vector.multi_reduction <maximumf>, %0, %cst_3 [2] : vector<1x32x256xf32> to vector<1x32xf32>
    %5 = tpu.concatenate %3, %4 in 0 : vector<1x32xf32>, vector<1x32xf32> -> vector<2x32xf32>
    %c0_4 = arith.constant 0 : index
    %c0_5 = arith.constant 0 : index
    %6 = vector.load %arg2[%c0_4, %c0_5] : memref<32x2xf32, #tpu.memory_space<vmem>>, vector<32x2xf32>
    %cst_6 = arith.constant dense<0.000000e+00> : vector<2x2xf32>
    %7 = tpu.matmul %5, %6, %cst_6 {dimension_numbers = #tpu.dot_dimension_numbers<[1], [0], [0], [1], [0, 0, 1, 1], [], []>} : vector<2x32xf32>, vector<32x2xf32>, vector<2x2xf32> -> vector<2x2xf32>
    %cst_7 = arith.constant 0.000000e+00 : f32
    %8 = vector.broadcast %cst_7 : f32 to vector<2x2xf32>
    %9 = arith.maximumf %7, %8 : vector<2x2xf32>
    %c0_8 = arith.constant 0 : index
    %c0_9 = arith.constant 0 : index
    %10 = vector.load %arg3[%c0_8, %c0_9] : memref<2x32xf32, #tpu.memory_space<vmem>>, vector<2x32xf32>
    %cst_10 = arith.constant dense<0.000000e+00> : vector<2x32xf32>
    %11 = tpu.matmul %9, %10, %cst_10 {dimension_numbers = #tpu.dot_dimension_numbers<[1], [0], [0], [1], [0, 0, 1, 1], [], []>} : vector<2x2xf32>, vector<2x32xf32>, vector<2x32xf32> -> vector<2x32xf32>
    %12 = vector.extract_strided_slice %11 {offsets = [0, 0], sizes = [1, 32], strides = [1, 1]} : vector<2x32xf32> to vector<1x32xf32>
    %13 = vector.extract_strided_slice %11 {offsets = [1, 0], sizes = [1, 32], strides = [1, 1]} : vector<2x32xf32> to vector<1x32xf32>
    %14 = arith.addf %12, %13 : vector<1x32xf32>
    %15 = arith.negf %14 : vector<1x32xf32>
    %16 = math.exp %15 : vector<1x32xf32>
    %cst_11 = arith.constant 1.000000e+00 : f32
    %17 = vector.broadcast %cst_11 : f32 to vector<1x32xf32>
    %18 = arith.addf %17, %16 : vector<1x32xf32>
    %19 = arith.divf %17, %18 : vector<1x32xf32>
    %20 = vector.shape_cast %19 : vector<1x32xf32> to vector<1x32x1xf32>
    %21 = vector.broadcast %20 : vector<1x32x1xf32> to vector<1x32x256xf32>
    %22 = arith.mulf %0, %21 : vector<1x32x256xf32>
    %cst_12 = arith.constant dense<0.000000e+00> : vector<1x256xf32>
    %23 = vector.multi_reduction <add>, %22, %cst_12 [1] : vector<1x32x256xf32> to vector<1x256xf32>
    %cst_13 = arith.constant 3.200000e+01 : f32
    %24 = vector.broadcast %cst_13 : f32 to vector<1x256xf32>
    %25 = arith.divf %23, %24 : vector<1x256xf32>
    %cst_14 = arith.constant dense<0xFF800000> : vector<1x256xf32>
    %26 = vector.multi_reduction <maximumf>, %22, %cst_14 [1] : vector<1x32x256xf32> to vector<1x256xf32>
    %27 = tpu.concatenate %25, %26 in 0 : vector<1x256xf32>, vector<1x256xf32> -> vector<2x256xf32>
    %28 = tpu.iota {dimensions = array<i32: 0>} : vector<2x1xi32>
    %c1_i32 = arith.constant 1 : i32
    %29 = vector.broadcast %c1_i32 : i32 to vector<2x1xi32>
    %30 = arith.cmpi slt, %28, %29 : vector<2x1xi32>
    %cst_15 = arith.constant 0.000000e+00 : f32
    %31 = vector.broadcast %cst_15 : f32 to vector<2x256xf32>
    %cst_16 = arith.constant 0.000000e+00 : f32
    %32 = vector.broadcast %cst_16 : f32 to vector<2x256xf32>
    %cst_17 = arith.constant 0.000000e+00 : f32
    %33 = vector.broadcast %cst_17 : f32 to vector<2x256xf32>
    %cst_18 = arith.constant 0.000000e+00 : f32
    %34 = vector.broadcast %cst_18 : f32 to vector<2x256xf32>
    %c51_i32 = arith.constant 51 : i32
    %35 = tpu.dynamic_rotate %27 by %c51_i32 dim 1 : vector<2x256xf32>, i32 -> vector<2x256xf32>
    %c0_19 = arith.constant 0 : index
    %c0_20 = arith.constant 0 : index
    %36 = vector.load %arg5[%c0_19, %c0_20] : memref<49x256xf32, #tpu.memory_space<vmem>>, vector<1x256xf32>
    %c0_21 = arith.constant 0 : index
    %c0_22 = arith.constant 0 : index
    %37 = memref.load %arg4[%c0_21, %c0_22] : memref<2x49xf32, #tpu.memory_space<smem>>
    %c1 = arith.constant 1 : index
    %c0_23 = arith.constant 0 : index
    %38 = memref.load %arg4[%c1, %c0_23] : memref<2x49xf32, #tpu.memory_space<smem>>
    %39 = vector.broadcast %37 : f32 to vector<2x1xf32>
    %40 = vector.broadcast %38 : f32 to vector<2x1xf32>
    %41 = arith.select %30, %39, %40 : vector<2x1xi1>, vector<2x1xf32>
    %42 = vector.broadcast %36 : vector<1x256xf32> to vector<2x256xf32>
    %43 = arith.mulf %35, %42 : vector<2x256xf32>
    %44 = vector.broadcast %41 : vector<2x1xf32> to vector<2x256xf32>
    %45 = arith.mulf %43, %44 : vector<2x256xf32>
    %46 = arith.addf %31, %45 : vector<2x256xf32>
    %c50_i32 = arith.constant 50 : i32
    %47 = tpu.dynamic_rotate %27 by %c50_i32 dim 1 : vector<2x256xf32>, i32 -> vector<2x256xf32>
    %c1_24 = arith.constant 1 : index
    %c0_25 = arith.constant 0 : index
    %48 = vector.load %arg5[%c1_24, %c0_25] : memref<49x256xf32, #tpu.memory_space<vmem>>, vector<1x256xf32>
    %c0_26 = arith.constant 0 : index
    %c1_27 = arith.constant 1 : index
    %49 = memref.load %arg4[%c0_26, %c1_27] : memref<2x49xf32, #tpu.memory_space<smem>>
    %c1_28 = arith.constant 1 : index
    %c1_29 = arith.constant 1 : index
    %50 = memref.load %arg4[%c1_28, %c1_29] : memref<2x49xf32, #tpu.memory_space<smem>>
    %51 = vector.broadcast %49 : f32 to vector<2x1xf32>
    %52 = vector.broadcast %50 : f32 to vector<2x1xf32>
    %53 = arith.select %30, %51, %52 : vector<2x1xi1>, vector<2x1xf32>
    %54 = vector.broadcast %48 : vector<1x256xf32> to vector<2x256xf32>
    %55 = arith.mulf %47, %54 : vector<2x256xf32>
    %56 = vector.broadcast %53 : vector<2x1xf32> to vector<2x256xf32>
    %57 = arith.mulf %55, %56 : vector<2x256xf32>
    %58 = arith.addf %32, %57 : vector<2x256xf32>
    %c49_i32 = arith.constant 49 : i32
    %59 = tpu.dynamic_rotate %27 by %c49_i32 dim 1 : vector<2x256xf32>, i32 -> vector<2x256xf32>
    %c2 = arith.constant 2 : index
    %c0_30 = arith.constant 0 : index
    %60 = vector.load %arg5[%c2, %c0_30] : memref<49x256xf32, #tpu.memory_space<vmem>>, vector<1x256xf32>
    %c0_31 = arith.constant 0 : index
    %c2_32 = arith.constant 2 : index
    %61 = memref.load %arg4[%c0_31, %c2_32] : memref<2x49xf32, #tpu.memory_space<smem>>
    %c1_33 = arith.constant 1 : index
    %c2_34 = arith.constant 2 : index
    %62 = memref.load %arg4[%c1_33, %c2_34] : memref<2x49xf32, #tpu.memory_space<smem>>
    %63 = vector.broadcast %61 : f32 to vector<2x1xf32>
    %64 = vector.broadcast %62 : f32 to vector<2x1xf32>
    %65 = arith.select %30, %63, %64 : vector<2x1xi1>, vector<2x1xf32>
    %66 = vector.broadcast %60 : vector<1x256xf32> to vector<2x256xf32>
    %67 = arith.mulf %59, %66 : vector<2x256xf32>
    %68 = vector.broadcast %65 : vector<2x1xf32> to vector<2x256xf32>
    %69 = arith.mulf %67, %68 : vector<2x256xf32>
    %70 = arith.addf %33, %69 : vector<2x256xf32>
    %c48_i32 = arith.constant 48 : i32
    %71 = tpu.dynamic_rotate %27 by %c48_i32 dim 1 : vector<2x256xf32>, i32 -> vector<2x256xf32>
    %c3 = arith.constant 3 : index
    %c0_35 = arith.constant 0 : index
    %72 = vector.load %arg5[%c3, %c0_35] : memref<49x256xf32, #tpu.memory_space<vmem>>, vector<1x256xf32>
    %c0_36 = arith.constant 0 : index
    %c3_37 = arith.constant 3 : index
    %73 = memref.load %arg4[%c0_36, %c3_37] : memref<2x49xf32, #tpu.memory_space<smem>>
    %c1_38 = arith.constant 1 : index
    %c3_39 = arith.constant 3 : index
    %74 = memref.load %arg4[%c1_38, %c3_39] : memref<2x49xf32, #tpu.memory_space<smem>>
    %75 = vector.broadcast %73 : f32 to vector<2x1xf32>
    %76 = vector.broadcast %74 : f32 to vector<2x1xf32>
    %77 = arith.select %30, %75, %76 : vector<2x1xi1>, vector<2x1xf32>
    %78 = vector.broadcast %72 : vector<1x256xf32> to vector<2x256xf32>
    %79 = arith.mulf %71, %78 : vector<2x256xf32>
    %80 = vector.broadcast %77 : vector<2x1xf32> to vector<2x256xf32>
    %81 = arith.mulf %79, %80 : vector<2x256xf32>
    %82 = arith.addf %34, %81 : vector<2x256xf32>
    %c47_i32 = arith.constant 47 : i32
    %83 = tpu.dynamic_rotate %27 by %c47_i32 dim 1 : vector<2x256xf32>, i32 -> vector<2x256xf32>
    %c4 = arith.constant 4 : index
    %c0_40 = arith.constant 0 : index
    %84 = vector.load %arg5[%c4, %c0_40] : memref<49x256xf32, #tpu.memory_space<vmem>>, vector<1x256xf32>
    %c0_41 = arith.constant 0 : index
    %c4_42 = arith.constant 4 : index
    %85 = memref.load %arg4[%c0_41, %c4_42] : memref<2x49xf32, #tpu.memory_space<smem>>
    %c1_43 = arith.constant 1 : index
    %c4_44 = arith.constant 4 : index
    %86 = memref.load %arg4[%c1_43, %c4_44] : memref<2x49xf32, #tpu.memory_space<smem>>
    %87 = vector.broadcast %85 : f32 to vector<2x1xf32>
    %88 = vector.broadcast %86 : f32 to vector<2x1xf32>
    %89 = arith.select %30, %87, %88 : vector<2x1xi1>, vector<2x1xf32>
    %90 = vector.broadcast %84 : vector<1x256xf32> to vector<2x256xf32>
    %91 = arith.mulf %83, %90 : vector<2x256xf32>
    %92 = vector.broadcast %89 : vector<2x1xf32> to vector<2x256xf32>
    %93 = arith.mulf %91, %92 : vector<2x256xf32>
    %94 = arith.addf %46, %93 : vector<2x256xf32>
    %c46_i32 = arith.constant 46 : i32
    %95 = tpu.dynamic_rotate %27 by %c46_i32 dim 1 : vector<2x256xf32>, i32 -> vector<2x256xf32>
    %c5 = arith.constant 5 : index
    %c0_45 = arith.constant 0 : index
    %96 = vector.load %arg5[%c5, %c0_45] : memref<49x256xf32, #tpu.memory_space<vmem>>, vector<1x256xf32>
    %c0_46 = arith.constant 0 : index
    %c5_47 = arith.constant 5 : index
    %97 = memref.load %arg4[%c0_46, %c5_47] : memref<2x49xf32, #tpu.memory_space<smem>>
    %c1_48 = arith.constant 1 : index
    %c5_49 = arith.constant 5 : index
    %98 = memref.load %arg4[%c1_48, %c5_49] : memref<2x49xf32, #tpu.memory_space<smem>>
    %99 = vector.broadcast %97 : f32 to vector<2x1xf32>
    %100 = vector.broadcast %98 : f32 to vector<2x1xf32>
    %101 = arith.select %30, %99, %100 : vector<2x1xi1>, vector<2x1xf32>
    %102 = vector.broadcast %96 : vector<1x256xf32> to vector<2x256xf32>
    %103 = arith.mulf %95, %102 : vector<2x256xf32>
    %104 = vector.broadcast %101 : vector<2x1xf32> to vector<2x256xf32>
    %105 = arith.mulf %103, %104 : vector<2x256xf32>
    %106 = arith.addf %58, %105 : vector<2x256xf32>
    %c45_i32 = arith.constant 45 : i32
    %107 = tpu.dynamic_rotate %27 by %c45_i32 dim 1 : vector<2x256xf32>, i32 -> vector<2x256xf32>
    %c6 = arith.constant 6 : index
    %c0_50 = arith.constant 0 : index
    %108 = vector.load %arg5[%c6, %c0_50] : memref<49x256xf32, #tpu.memory_space<vmem>>, vector<1x256xf32>
    %c0_51 = arith.constant 0 : index
    %c6_52 = arith.constant 6 : index
    %109 = memref.load %arg4[%c0_51, %c6_52] : memref<2x49xf32, #tpu.memory_space<smem>>
    %c1_53 = arith.constant 1 : index
    %c6_54 = arith.constant 6 : index
    %110 = memref.load %arg4[%c1_53, %c6_54] : memref<2x49xf32, #tpu.memory_space<smem>>
    %111 = vector.broadcast %109 : f32 to vector<2x1xf32>
    %112 = vector.broadcast %110 : f32 to vector<2x1xf32>
    %113 = arith.select %30, %111, %112 : vector<2x1xi1>, vector<2x1xf32>
    %114 = vector.broadcast %108 : vector<1x256xf32> to vector<2x256xf32>
    %115 = arith.mulf %107, %114 : vector<2x256xf32>
    %116 = vector.broadcast %113 : vector<2x1xf32> to vector<2x256xf32>
    %117 = arith.mulf %115, %116 : vector<2x256xf32>
    %118 = arith.addf %70, %117 : vector<2x256xf32>
    %c35_i32 = arith.constant 35 : i32
    %119 = tpu.dynamic_rotate %27 by %c35_i32 dim 1 : vector<2x256xf32>, i32 -> vector<2x256xf32>
    %c7 = arith.constant 7 : index
    %c0_55 = arith.constant 0 : index
    %120 = vector.load %arg5[%c7, %c0_55] : memref<49x256xf32, #tpu.memory_space<vmem>>, vector<1x256xf32>
    %c0_56 = arith.constant 0 : index
    %c7_57 = arith.constant 7 : index
    %121 = memref.load %arg4[%c0_56, %c7_57] : memref<2x49xf32, #tpu.memory_space<smem>>
    %c1_58 = arith.constant 1 : index
    %c7_59 = arith.constant 7 : index
    %122 = memref.load %arg4[%c1_58, %c7_59] : memref<2x49xf32, #tpu.memory_space<smem>>
    %123 = vector.broadcast %121 : f32 to vector<2x1xf32>
    %124 = vector.broadcast %122 : f32 to vector<2x1xf32>
    %125 = arith.select %30, %123, %124 : vector<2x1xi1>, vector<2x1xf32>
    %126 = vector.broadcast %120 : vector<1x256xf32> to vector<2x256xf32>
    %127 = arith.mulf %119, %126 : vector<2x256xf32>
    %128 = vector.broadcast %125 : vector<2x1xf32> to vector<2x256xf32>
    %129 = arith.mulf %127, %128 : vector<2x256xf32>
    %130 = arith.addf %82, %129 : vector<2x256xf32>
    %c34_i32 = arith.constant 34 : i32
    %131 = tpu.dynamic_rotate %27 by %c34_i32 dim 1 : vector<2x256xf32>, i32 -> vector<2x256xf32>
    %c8 = arith.constant 8 : index
    %c0_60 = arith.constant 0 : index
    %132 = vector.load %arg5[%c8, %c0_60] : memref<49x256xf32, #tpu.memory_space<vmem>>, vector<1x256xf32>
    %c0_61 = arith.constant 0 : index
    %c8_62 = arith.constant 8 : index
    %133 = memref.load %arg4[%c0_61, %c8_62] : memref<2x49xf32, #tpu.memory_space<smem>>
    %c1_63 = arith.constant 1 : index
    %c8_64 = arith.constant 8 : index
    %134 = memref.load %arg4[%c1_63, %c8_64] : memref<2x49xf32, #tpu.memory_space<smem>>
    %135 = vector.broadcast %133 : f32 to vector<2x1xf32>
    %136 = vector.broadcast %134 : f32 to vector<2x1xf32>
    %137 = arith.select %30, %135, %136 : vector<2x1xi1>, vector<2x1xf32>
    %138 = vector.broadcast %132 : vector<1x256xf32> to vector<2x256xf32>
    %139 = arith.mulf %131, %138 : vector<2x256xf32>
    %140 = vector.broadcast %137 : vector<2x1xf32> to vector<2x256xf32>
    %141 = arith.mulf %139, %140 : vector<2x256xf32>
    %142 = arith.addf %94, %141 : vector<2x256xf32>
    %c33_i32 = arith.constant 33 : i32
    %143 = tpu.dynamic_rotate %27 by %c33_i32 dim 1 : vector<2x256xf32>, i32 -> vector<2x256xf32>
    %c9 = arith.constant 9 : index
    %c0_65 = arith.constant 0 : index
    %144 = vector.load %arg5[%c9, %c0_65] : memref<49x256xf32, #tpu.memory_space<vmem>>, vector<1x256xf32>
    %c0_66 = arith.constant 0 : index
    %c9_67 = arith.constant 9 : index
    %145 = memref.load %arg4[%c0_66, %c9_67] : memref<2x49xf32, #tpu.memory_space<smem>>
    %c1_68 = arith.constant 1 : index
    %c9_69 = arith.constant 9 : index
    %146 = memref.load %arg4[%c1_68, %c9_69] : memref<2x49xf32, #tpu.memory_space<smem>>
    %147 = vector.broadcast %145 : f32 to vector<2x1xf32>
    %148 = vector.broadcast %146 : f32 to vector<2x1xf32>
    %149 = arith.select %30, %147, %148 : vector<2x1xi1>, vector<2x1xf32>
    %150 = vector.broadcast %144 : vector<1x256xf32> to vector<2x256xf32>
    %151 = arith.mulf %143, %150 : vector<2x256xf32>
    %152 = vector.broadcast %149 : vector<2x1xf32> to vector<2x256xf32>
    %153 = arith.mulf %151, %152 : vector<2x256xf32>
    %154 = arith.addf %106, %153 : vector<2x256xf32>
    %c32_i32 = arith.constant 32 : i32
    %155 = tpu.dynamic_rotate %27 by %c32_i32 dim 1 : vector<2x256xf32>, i32 -> vector<2x256xf32>
    %c10 = arith.constant 10 : index
    %c0_70 = arith.constant 0 : index
    %156 = vector.load %arg5[%c10, %c0_70] : memref<49x256xf32, #tpu.memory_space<vmem>>, vector<1x256xf32>
    %c0_71 = arith.constant 0 : index
    %c10_72 = arith.constant 10 : index
    %157 = memref.load %arg4[%c0_71, %c10_72] : memref<2x49xf32, #tpu.memory_space<smem>>
    %c1_73 = arith.constant 1 : index
    %c10_74 = arith.constant 10 : index
    %158 = memref.load %arg4[%c1_73, %c10_74] : memref<2x49xf32, #tpu.memory_space<smem>>
    %159 = vector.broadcast %157 : f32 to vector<2x1xf32>
    %160 = vector.broadcast %158 : f32 to vector<2x1xf32>
    %161 = arith.select %30, %159, %160 : vector<2x1xi1>, vector<2x1xf32>
    %162 = vector.broadcast %156 : vector<1x256xf32> to vector<2x256xf32>
    %163 = arith.mulf %155, %162 : vector<2x256xf32>
    %164 = vector.broadcast %161 : vector<2x1xf32> to vector<2x256xf32>
    %165 = arith.mulf %163, %164 : vector<2x256xf32>
    %166 = arith.addf %118, %165 : vector<2x256xf32>
    %c31_i32 = arith.constant 31 : i32
    %167 = tpu.dynamic_rotate %27 by %c31_i32 dim 1 : vector<2x256xf32>, i32 -> vector<2x256xf32>
    %c11 = arith.constant 11 : index
    %c0_75 = arith.constant 0 : index
    %168 = vector.load %arg5[%c11, %c0_75] : memref<49x256xf32, #tpu.memory_space<vmem>>, vector<1x256xf32>
    %c0_76 = arith.constant 0 : index
    %c11_77 = arith.constant 11 : index
    %169 = memref.load %arg4[%c0_76, %c11_77] : memref<2x49xf32, #tpu.memory_space<smem>>
    %c1_78 = arith.constant 1 : index
    %c11_79 = arith.constant 11 : index
    %170 = memref.load %arg4[%c1_78, %c11_79] : memref<2x49xf32, #tpu.memory_space<smem>>
    %171 = vector.broadcast %169 : f32 to vector<2x1xf32>
    %172 = vector.broadcast %170 : f32 to vector<2x1xf32>
    %173 = arith.select %30, %171, %172 : vector<2x1xi1>, vector<2x1xf32>
    %174 = vector.broadcast %168 : vector<1x256xf32> to vector<2x256xf32>
    %175 = arith.mulf %167, %174 : vector<2x256xf32>
    %176 = vector.broadcast %173 : vector<2x1xf32> to vector<2x256xf32>
    %177 = arith.mulf %175, %176 : vector<2x256xf32>
    %178 = arith.addf %130, %177 : vector<2x256xf32>
    %c30_i32 = arith.constant 30 : i32
    %179 = tpu.dynamic_rotate %27 by %c30_i32 dim 1 : vector<2x256xf32>, i32 -> vector<2x256xf32>
    %c12 = arith.constant 12 : index
    %c0_80 = arith.constant 0 : index
    %180 = vector.load %arg5[%c12, %c0_80] : memref<49x256xf32, #tpu.memory_space<vmem>>, vector<1x256xf32>
    %c0_81 = arith.constant 0 : index
    %c12_82 = arith.constant 12 : index
    %181 = memref.load %arg4[%c0_81, %c12_82] : memref<2x49xf32, #tpu.memory_space<smem>>
    %c1_83 = arith.constant 1 : index
    %c12_84 = arith.constant 12 : index
    %182 = memref.load %arg4[%c1_83, %c12_84] : memref<2x49xf32, #tpu.memory_space<smem>>
    %183 = vector.broadcast %181 : f32 to vector<2x1xf32>
    %184 = vector.broadcast %182 : f32 to vector<2x1xf32>
    %185 = arith.select %30, %183, %184 : vector<2x1xi1>, vector<2x1xf32>
    %186 = vector.broadcast %180 : vector<1x256xf32> to vector<2x256xf32>
    %187 = arith.mulf %179, %186 : vector<2x256xf32>
    %188 = vector.broadcast %185 : vector<2x1xf32> to vector<2x256xf32>
    %189 = arith.mulf %187, %188 : vector<2x256xf32>
    %190 = arith.addf %142, %189 : vector<2x256xf32>
    %c29_i32 = arith.constant 29 : i32
    %191 = tpu.dynamic_rotate %27 by %c29_i32 dim 1 : vector<2x256xf32>, i32 -> vector<2x256xf32>
    %c13 = arith.constant 13 : index
    %c0_85 = arith.constant 0 : index
    %192 = vector.load %arg5[%c13, %c0_85] : memref<49x256xf32, #tpu.memory_space<vmem>>, vector<1x256xf32>
    %c0_86 = arith.constant 0 : index
    %c13_87 = arith.constant 13 : index
    %193 = memref.load %arg4[%c0_86, %c13_87] : memref<2x49xf32, #tpu.memory_space<smem>>
    %c1_88 = arith.constant 1 : index
    %c13_89 = arith.constant 13 : index
    %194 = memref.load %arg4[%c1_88, %c13_89] : memref<2x49xf32, #tpu.memory_space<smem>>
    %195 = vector.broadcast %193 : f32 to vector<2x1xf32>
    %196 = vector.broadcast %194 : f32 to vector<2x1xf32>
    %197 = arith.select %30, %195, %196 : vector<2x1xi1>, vector<2x1xf32>
    %198 = vector.broadcast %192 : vector<1x256xf32> to vector<2x256xf32>
    %199 = arith.mulf %191, %198 : vector<2x256xf32>
    %200 = vector.broadcast %197 : vector<2x1xf32> to vector<2x256xf32>
    %201 = arith.mulf %199, %200 : vector<2x256xf32>
    %202 = arith.addf %154, %201 : vector<2x256xf32>
    %c19_i32 = arith.constant 19 : i32
    %203 = tpu.dynamic_rotate %27 by %c19_i32 dim 1 : vector<2x256xf32>, i32 -> vector<2x256xf32>
    %c14 = arith.constant 14 : index
    %c0_90 = arith.constant 0 : index
    %204 = vector.load %arg5[%c14, %c0_90] : memref<49x256xf32, #tpu.memory_space<vmem>>, vector<1x256xf32>
    %c0_91 = arith.constant 0 : index
    %c14_92 = arith.constant 14 : index
    %205 = memref.load %arg4[%c0_91, %c14_92] : memref<2x49xf32, #tpu.memory_space<smem>>
    %c1_93 = arith.constant 1 : index
    %c14_94 = arith.constant 14 : index
    %206 = memref.load %arg4[%c1_93, %c14_94] : memref<2x49xf32, #tpu.memory_space<smem>>
    %207 = vector.broadcast %205 : f32 to vector<2x1xf32>
    %208 = vector.broadcast %206 : f32 to vector<2x1xf32>
    %209 = arith.select %30, %207, %208 : vector<2x1xi1>, vector<2x1xf32>
    %210 = vector.broadcast %204 : vector<1x256xf32> to vector<2x256xf32>
    %211 = arith.mulf %203, %210 : vector<2x256xf32>
    %212 = vector.broadcast %209 : vector<2x1xf32> to vector<2x256xf32>
    %213 = arith.mulf %211, %212 : vector<2x256xf32>
    %214 = arith.addf %166, %213 : vector<2x256xf32>
    %c18_i32 = arith.constant 18 : i32
    %215 = tpu.dynamic_rotate %27 by %c18_i32 dim 1 : vector<2x256xf32>, i32 -> vector<2x256xf32>
    %c15 = arith.constant 15 : index
    %c0_95 = arith.constant 0 : index
    %216 = vector.load %arg5[%c15, %c0_95] : memref<49x256xf32, #tpu.memory_space<vmem>>, vector<1x256xf32>
    %c0_96 = arith.constant 0 : index
    %c15_97 = arith.constant 15 : index
    %217 = memref.load %arg4[%c0_96, %c15_97] : memref<2x49xf32, #tpu.memory_space<smem>>
    %c1_98 = arith.constant 1 : index
    %c15_99 = arith.constant 15 : index
    %218 = memref.load %arg4[%c1_98, %c15_99] : memref<2x49xf32, #tpu.memory_space<smem>>
    %219 = vector.broadcast %217 : f32 to vector<2x1xf32>
    %220 = vector.broadcast %218 : f32 to vector<2x1xf32>
    %221 = arith.select %30, %219, %220 : vector<2x1xi1>, vector<2x1xf32>
    %222 = vector.broadcast %216 : vector<1x256xf32> to vector<2x256xf32>
    %223 = arith.mulf %215, %222 : vector<2x256xf32>
    %224 = vector.broadcast %221 : vector<2x1xf32> to vector<2x256xf32>
    %225 = arith.mulf %223, %224 : vector<2x256xf32>
    %226 = arith.addf %178, %225 : vector<2x256xf32>
    %c17_i32 = arith.constant 17 : i32
    %227 = tpu.dynamic_rotate %27 by %c17_i32 dim 1 : vector<2x256xf32>, i32 -> vector<2x256xf32>
    %c16 = arith.constant 16 : index
    %c0_100 = arith.constant 0 : index
    %228 = vector.load %arg5[%c16, %c0_100] : memref<49x256xf32, #tpu.memory_space<vmem>>, vector<1x256xf32>
    %c0_101 = arith.constant 0 : index
    %c16_102 = arith.constant 16 : index
    %229 = memref.load %arg4[%c0_101, %c16_102] : memref<2x49xf32, #tpu.memory_space<smem>>
    %c1_103 = arith.constant 1 : index
    %c16_104 = arith.constant 16 : index
    %230 = memref.load %arg4[%c1_103, %c16_104] : memref<2x49xf32, #tpu.memory_space<smem>>
    %231 = vector.broadcast %229 : f32 to vector<2x1xf32>
    %232 = vector.broadcast %230 : f32 to vector<2x1xf32>
    %233 = arith.select %30, %231, %232 : vector<2x1xi1>, vector<2x1xf32>
    %234 = vector.broadcast %228 : vector<1x256xf32> to vector<2x256xf32>
    %235 = arith.mulf %227, %234 : vector<2x256xf32>
    %236 = vector.broadcast %233 : vector<2x1xf32> to vector<2x256xf32>
    %237 = arith.mulf %235, %236 : vector<2x256xf32>
    %238 = arith.addf %190, %237 : vector<2x256xf32>
    %c16_i32 = arith.constant 16 : i32
    %239 = tpu.dynamic_rotate %27 by %c16_i32 dim 1 : vector<2x256xf32>, i32 -> vector<2x256xf32>
    %c17 = arith.constant 17 : index
    %c0_105 = arith.constant 0 : index
    %240 = vector.load %arg5[%c17, %c0_105] : memref<49x256xf32, #tpu.memory_space<vmem>>, vector<1x256xf32>
    %c0_106 = arith.constant 0 : index
    %c17_107 = arith.constant 17 : index
    %241 = memref.load %arg4[%c0_106, %c17_107] : memref<2x49xf32, #tpu.memory_space<smem>>
    %c1_108 = arith.constant 1 : index
    %c17_109 = arith.constant 17 : index
    %242 = memref.load %arg4[%c1_108, %c17_109] : memref<2x49xf32, #tpu.memory_space<smem>>
    %243 = vector.broadcast %241 : f32 to vector<2x1xf32>
    %244 = vector.broadcast %242 : f32 to vector<2x1xf32>
    %245 = arith.select %30, %243, %244 : vector<2x1xi1>, vector<2x1xf32>
    %246 = vector.broadcast %240 : vector<1x256xf32> to vector<2x256xf32>
    %247 = arith.mulf %239, %246 : vector<2x256xf32>
    %248 = vector.broadcast %245 : vector<2x1xf32> to vector<2x256xf32>
    %249 = arith.mulf %247, %248 : vector<2x256xf32>
    %250 = arith.addf %202, %249 : vector<2x256xf32>
    %c15_i32 = arith.constant 15 : i32
    %251 = tpu.dynamic_rotate %27 by %c15_i32 dim 1 : vector<2x256xf32>, i32 -> vector<2x256xf32>
    %c18 = arith.constant 18 : index
    %c0_110 = arith.constant 0 : index
    %252 = vector.load %arg5[%c18, %c0_110] : memref<49x256xf32, #tpu.memory_space<vmem>>, vector<1x256xf32>
    %c0_111 = arith.constant 0 : index
    %c18_112 = arith.constant 18 : index
    %253 = memref.load %arg4[%c0_111, %c18_112] : memref<2x49xf32, #tpu.memory_space<smem>>
    %c1_113 = arith.constant 1 : index
    %c18_114 = arith.constant 18 : index
    %254 = memref.load %arg4[%c1_113, %c18_114] : memref<2x49xf32, #tpu.memory_space<smem>>
    %255 = vector.broadcast %253 : f32 to vector<2x1xf32>
    %256 = vector.broadcast %254 : f32 to vector<2x1xf32>
    %257 = arith.select %30, %255, %256 : vector<2x1xi1>, vector<2x1xf32>
    %258 = vector.broadcast %252 : vector<1x256xf32> to vector<2x256xf32>
    %259 = arith.mulf %251, %258 : vector<2x256xf32>
    %260 = vector.broadcast %257 : vector<2x1xf32> to vector<2x256xf32>
    %261 = arith.mulf %259, %260 : vector<2x256xf32>
    %262 = arith.addf %214, %261 : vector<2x256xf32>
    %c14_i32 = arith.constant 14 : i32
    %263 = tpu.dynamic_rotate %27 by %c14_i32 dim 1 : vector<2x256xf32>, i32 -> vector<2x256xf32>
    %c19 = arith.constant 19 : index
    %c0_115 = arith.constant 0 : index
    %264 = vector.load %arg5[%c19, %c0_115] : memref<49x256xf32, #tpu.memory_space<vmem>>, vector<1x256xf32>
    %c0_116 = arith.constant 0 : index
    %c19_117 = arith.constant 19 : index
    %265 = memref.load %arg4[%c0_116, %c19_117] : memref<2x49xf32, #tpu.memory_space<smem>>
    %c1_118 = arith.constant 1 : index
    %c19_119 = arith.constant 19 : index
    %266 = memref.load %arg4[%c1_118, %c19_119] : memref<2x49xf32, #tpu.memory_space<smem>>
    %267 = vector.broadcast %265 : f32 to vector<2x1xf32>
    %268 = vector.broadcast %266 : f32 to vector<2x1xf32>
    %269 = arith.select %30, %267, %268 : vector<2x1xi1>, vector<2x1xf32>
    %270 = vector.broadcast %264 : vector<1x256xf32> to vector<2x256xf32>
    %271 = arith.mulf %263, %270 : vector<2x256xf32>
    %272 = vector.broadcast %269 : vector<2x1xf32> to vector<2x256xf32>
    %273 = arith.mulf %271, %272 : vector<2x256xf32>
    %274 = arith.addf %226, %273 : vector<2x256xf32>
    %c13_i32 = arith.constant 13 : i32
    %275 = tpu.dynamic_rotate %27 by %c13_i32 dim 1 : vector<2x256xf32>, i32 -> vector<2x256xf32>
    %c20 = arith.constant 20 : index
    %c0_120 = arith.constant 0 : index
    %276 = vector.load %arg5[%c20, %c0_120] : memref<49x256xf32, #tpu.memory_space<vmem>>, vector<1x256xf32>
    %c0_121 = arith.constant 0 : index
    %c20_122 = arith.constant 20 : index
    %277 = memref.load %arg4[%c0_121, %c20_122] : memref<2x49xf32, #tpu.memory_space<smem>>
    %c1_123 = arith.constant 1 : index
    %c20_124 = arith.constant 20 : index
    %278 = memref.load %arg4[%c1_123, %c20_124] : memref<2x49xf32, #tpu.memory_space<smem>>
    %279 = vector.broadcast %277 : f32 to vector<2x1xf32>
    %280 = vector.broadcast %278 : f32 to vector<2x1xf32>
    %281 = arith.select %30, %279, %280 : vector<2x1xi1>, vector<2x1xf32>
    %282 = vector.broadcast %276 : vector<1x256xf32> to vector<2x256xf32>
    %283 = arith.mulf %275, %282 : vector<2x256xf32>
    %284 = vector.broadcast %281 : vector<2x1xf32> to vector<2x256xf32>
    %285 = arith.mulf %283, %284 : vector<2x256xf32>
    %286 = arith.addf %238, %285 : vector<2x256xf32>
    %c3_i32 = arith.constant 3 : i32
    %287 = tpu.dynamic_rotate %27 by %c3_i32 dim 1 : vector<2x256xf32>, i32 -> vector<2x256xf32>
    %c21 = arith.constant 21 : index
    %c0_125 = arith.constant 0 : index
    %288 = vector.load %arg5[%c21, %c0_125] : memref<49x256xf32, #tpu.memory_space<vmem>>, vector<1x256xf32>
    %c0_126 = arith.constant 0 : index
    %c21_127 = arith.constant 21 : index
    %289 = memref.load %arg4[%c0_126, %c21_127] : memref<2x49xf32, #tpu.memory_space<smem>>
    %c1_128 = arith.constant 1 : index
    %c21_129 = arith.constant 21 : index
    %290 = memref.load %arg4[%c1_128, %c21_129] : memref<2x49xf32, #tpu.memory_space<smem>>
    %291 = vector.broadcast %289 : f32 to vector<2x1xf32>
    %292 = vector.broadcast %290 : f32 to vector<2x1xf32>
    %293 = arith.select %30, %291, %292 : vector<2x1xi1>, vector<2x1xf32>
    %294 = vector.broadcast %288 : vector<1x256xf32> to vector<2x256xf32>
    %295 = arith.mulf %287, %294 : vector<2x256xf32>
    %296 = vector.broadcast %293 : vector<2x1xf32> to vector<2x256xf32>
    %297 = arith.mulf %295, %296 : vector<2x256xf32>
    %298 = arith.addf %250, %297 : vector<2x256xf32>
    %c2_i32 = arith.constant 2 : i32
    %299 = tpu.dynamic_rotate %27 by %c2_i32 dim 1 : vector<2x256xf32>, i32 -> vector<2x256xf32>
    %c22 = arith.constant 22 : index
    %c0_130 = arith.constant 0 : index
    %300 = vector.load %arg5[%c22, %c0_130] : memref<49x256xf32, #tpu.memory_space<vmem>>, vector<1x256xf32>
    %c0_131 = arith.constant 0 : index
    %c22_132 = arith.constant 22 : index
    %301 = memref.load %arg4[%c0_131, %c22_132] : memref<2x49xf32, #tpu.memory_space<smem>>
    %c1_133 = arith.constant 1 : index
    %c22_134 = arith.constant 22 : index
    %302 = memref.load %arg4[%c1_133, %c22_134] : memref<2x49xf32, #tpu.memory_space<smem>>
    %303 = vector.broadcast %301 : f32 to vector<2x1xf32>
    %304 = vector.broadcast %302 : f32 to vector<2x1xf32>
    %305 = arith.select %30, %303, %304 : vector<2x1xi1>, vector<2x1xf32>
    %306 = vector.broadcast %300 : vector<1x256xf32> to vector<2x256xf32>
    %307 = arith.mulf %299, %306 : vector<2x256xf32>
    %308 = vector.broadcast %305 : vector<2x1xf32> to vector<2x256xf32>
    %309 = arith.mulf %307, %308 : vector<2x256xf32>
    %310 = arith.addf %262, %309 : vector<2x256xf32>
    %c1_i32_135 = arith.constant 1 : i32
    %311 = tpu.dynamic_rotate %27 by %c1_i32_135 dim 1 : vector<2x256xf32>, i32 -> vector<2x256xf32>
    %c23 = arith.constant 23 : index
    %c0_136 = arith.constant 0 : index
    %312 = vector.load %arg5[%c23, %c0_136] : memref<49x256xf32, #tpu.memory_space<vmem>>, vector<1x256xf32>
    %c0_137 = arith.constant 0 : index
    %c23_138 = arith.constant 23 : index
    %313 = memref.load %arg4[%c0_137, %c23_138] : memref<2x49xf32, #tpu.memory_space<smem>>
    %c1_139 = arith.constant 1 : index
    %c23_140 = arith.constant 23 : index
    %314 = memref.load %arg4[%c1_139, %c23_140] : memref<2x49xf32, #tpu.memory_space<smem>>
    %315 = vector.broadcast %313 : f32 to vector<2x1xf32>
    %316 = vector.broadcast %314 : f32 to vector<2x1xf32>
    %317 = arith.select %30, %315, %316 : vector<2x1xi1>, vector<2x1xf32>
    %318 = vector.broadcast %312 : vector<1x256xf32> to vector<2x256xf32>
    %319 = arith.mulf %311, %318 : vector<2x256xf32>
    %320 = vector.broadcast %317 : vector<2x1xf32> to vector<2x256xf32>
    %321 = arith.mulf %319, %320 : vector<2x256xf32>
    %322 = arith.addf %274, %321 : vector<2x256xf32>
    %c24 = arith.constant 24 : index
    %c0_141 = arith.constant 0 : index
    %323 = vector.load %arg5[%c24, %c0_141] : memref<49x256xf32, #tpu.memory_space<vmem>>, vector<1x256xf32>
    %c0_142 = arith.constant 0 : index
    %c24_143 = arith.constant 24 : index
    %324 = memref.load %arg4[%c0_142, %c24_143] : memref<2x49xf32, #tpu.memory_space<smem>>
    %c1_144 = arith.constant 1 : index
    %c24_145 = arith.constant 24 : index
    %325 = memref.load %arg4[%c1_144, %c24_145] : memref<2x49xf32, #tpu.memory_space<smem>>
    %326 = vector.broadcast %324 : f32 to vector<2x1xf32>
    %327 = vector.broadcast %325 : f32 to vector<2x1xf32>
    %328 = arith.select %30, %326, %327 : vector<2x1xi1>, vector<2x1xf32>
    %329 = vector.broadcast %323 : vector<1x256xf32> to vector<2x256xf32>
    %330 = arith.mulf %27, %329 : vector<2x256xf32>
    %331 = vector.broadcast %328 : vector<2x1xf32> to vector<2x256xf32>
    %332 = arith.mulf %330, %331 : vector<2x256xf32>
    %333 = arith.addf %286, %332 : vector<2x256xf32>
    %c255_i32 = arith.constant 255 : i32
    %334 = tpu.dynamic_rotate %27 by %c255_i32 dim 1 : vector<2x256xf32>, i32 -> vector<2x256xf32>
    %c25 = arith.constant 25 : index
    %c0_146 = arith.constant 0 : index
    %335 = vector.load %arg5[%c25, %c0_146] : memref<49x256xf32, #tpu.memory_space<vmem>>, vector<1x256xf32>
    %c0_147 = arith.constant 0 : index
    %c25_148 = arith.constant 25 : index
    %336 = memref.load %arg4[%c0_147, %c25_148] : memref<2x49xf32, #tpu.memory_space<smem>>
    %c1_149 = arith.constant 1 : index
    %c25_150 = arith.constant 25 : index
    %337 = memref.load %arg4[%c1_149, %c25_150] : memref<2x49xf32, #tpu.memory_space<smem>>
    %338 = vector.broadcast %336 : f32 to vector<2x1xf32>
    %339 = vector.broadcast %337 : f32 to vector<2x1xf32>
    %340 = arith.select %30, %338, %339 : vector<2x1xi1>, vector<2x1xf32>
    %341 = vector.broadcast %335 : vector<1x256xf32> to vector<2x256xf32>
    %342 = arith.mulf %334, %341 : vector<2x256xf32>
    %343 = vector.broadcast %340 : vector<2x1xf32> to vector<2x256xf32>
    %344 = arith.mulf %342, %343 : vector<2x256xf32>
    %345 = arith.addf %298, %344 : vector<2x256xf32>
    %c254_i32 = arith.constant 254 : i32
    %346 = tpu.dynamic_rotate %27 by %c254_i32 dim 1 : vector<2x256xf32>, i32 -> vector<2x256xf32>
    %c26 = arith.constant 26 : index
    %c0_151 = arith.constant 0 : index
    %347 = vector.load %arg5[%c26, %c0_151] : memref<49x256xf32, #tpu.memory_space<vmem>>, vector<1x256xf32>
    %c0_152 = arith.constant 0 : index
    %c26_153 = arith.constant 26 : index
    %348 = memref.load %arg4[%c0_152, %c26_153] : memref<2x49xf32, #tpu.memory_space<smem>>
    %c1_154 = arith.constant 1 : index
    %c26_155 = arith.constant 26 : index
    %349 = memref.load %arg4[%c1_154, %c26_155] : memref<2x49xf32, #tpu.memory_space<smem>>
    %350 = vector.broadcast %348 : f32 to vector<2x1xf32>
    %351 = vector.broadcast %349 : f32 to vector<2x1xf32>
    %352 = arith.select %30, %350, %351 : vector<2x1xi1>, vector<2x1xf32>
    %353 = vector.broadcast %347 : vector<1x256xf32> to vector<2x256xf32>
    %354 = arith.mulf %346, %353 : vector<2x256xf32>
    %355 = vector.broadcast %352 : vector<2x1xf32> to vector<2x256xf32>
    %356 = arith.mulf %354, %355 : vector<2x256xf32>
    %357 = arith.addf %310, %356 : vector<2x256xf32>
    %c253_i32 = arith.constant 253 : i32
    %358 = tpu.dynamic_rotate %27 by %c253_i32 dim 1 : vector<2x256xf32>, i32 -> vector<2x256xf32>
    %c27 = arith.constant 27 : index
    %c0_156 = arith.constant 0 : index
    %359 = vector.load %arg5[%c27, %c0_156] : memref<49x256xf32, #tpu.memory_space<vmem>>, vector<1x256xf32>
    %c0_157 = arith.constant 0 : index
    %c27_158 = arith.constant 27 : index
    %360 = memref.load %arg4[%c0_157, %c27_158] : memref<2x49xf32, #tpu.memory_space<smem>>
    %c1_159 = arith.constant 1 : index
    %c27_160 = arith.constant 27 : index
    %361 = memref.load %arg4[%c1_159, %c27_160] : memref<2x49xf32, #tpu.memory_space<smem>>
    %362 = vector.broadcast %360 : f32 to vector<2x1xf32>
    %363 = vector.broadcast %361 : f32 to vector<2x1xf32>
    %364 = arith.select %30, %362, %363 : vector<2x1xi1>, vector<2x1xf32>
    %365 = vector.broadcast %359 : vector<1x256xf32> to vector<2x256xf32>
    %366 = arith.mulf %358, %365 : vector<2x256xf32>
    %367 = vector.broadcast %364 : vector<2x1xf32> to vector<2x256xf32>
    %368 = arith.mulf %366, %367 : vector<2x256xf32>
    %369 = arith.addf %322, %368 : vector<2x256xf32>
    %c243_i32 = arith.constant 243 : i32
    %370 = tpu.dynamic_rotate %27 by %c243_i32 dim 1 : vector<2x256xf32>, i32 -> vector<2x256xf32>
    %c28 = arith.constant 28 : index
    %c0_161 = arith.constant 0 : index
    %371 = vector.load %arg5[%c28, %c0_161] : memref<49x256xf32, #tpu.memory_space<vmem>>, vector<1x256xf32>
    %c0_162 = arith.constant 0 : index
    %c28_163 = arith.constant 28 : index
    %372 = memref.load %arg4[%c0_162, %c28_163] : memref<2x49xf32, #tpu.memory_space<smem>>
    %c1_164 = arith.constant 1 : index
    %c28_165 = arith.constant 28 : index
    %373 = memref.load %arg4[%c1_164, %c28_165] : memref<2x49xf32, #tpu.memory_space<smem>>
    %374 = vector.broadcast %372 : f32 to vector<2x1xf32>
    %375 = vector.broadcast %373 : f32 to vector<2x1xf32>
    %376 = arith.select %30, %374, %375 : vector<2x1xi1>, vector<2x1xf32>
    %377 = vector.broadcast %371 : vector<1x256xf32> to vector<2x256xf32>
    %378 = arith.mulf %370, %377 : vector<2x256xf32>
    %379 = vector.broadcast %376 : vector<2x1xf32> to vector<2x256xf32>
    %380 = arith.mulf %378, %379 : vector<2x256xf32>
    %381 = arith.addf %333, %380 : vector<2x256xf32>
    %c242_i32 = arith.constant 242 : i32
    %382 = tpu.dynamic_rotate %27 by %c242_i32 dim 1 : vector<2x256xf32>, i32 -> vector<2x256xf32>
    %c29 = arith.constant 29 : index
    %c0_166 = arith.constant 0 : index
    %383 = vector.load %arg5[%c29, %c0_166] : memref<49x256xf32, #tpu.memory_space<vmem>>, vector<1x256xf32>
    %c0_167 = arith.constant 0 : index
    %c29_168 = arith.constant 29 : index
    %384 = memref.load %arg4[%c0_167, %c29_168] : memref<2x49xf32, #tpu.memory_space<smem>>
    %c1_169 = arith.constant 1 : index
    %c29_170 = arith.constant 29 : index
    %385 = memref.load %arg4[%c1_169, %c29_170] : memref<2x49xf32, #tpu.memory_space<smem>>
    %386 = vector.broadcast %384 : f32 to vector<2x1xf32>
    %387 = vector.broadcast %385 : f32 to vector<2x1xf32>
    %388 = arith.select %30, %386, %387 : vector<2x1xi1>, vector<2x1xf32>
    %389 = vector.broadcast %383 : vector<1x256xf32> to vector<2x256xf32>
    %390 = arith.mulf %382, %389 : vector<2x256xf32>
    %391 = vector.broadcast %388 : vector<2x1xf32> to vector<2x256xf32>
    %392 = arith.mulf %390, %391 : vector<2x256xf32>
    %393 = arith.addf %345, %392 : vector<2x256xf32>
    %c241_i32 = arith.constant 241 : i32
    %394 = tpu.dynamic_rotate %27 by %c241_i32 dim 1 : vector<2x256xf32>, i32 -> vector<2x256xf32>
    %c30 = arith.constant 30 : index
    %c0_171 = arith.constant 0 : index
    %395 = vector.load %arg5[%c30, %c0_171] : memref<49x256xf32, #tpu.memory_space<vmem>>, vector<1x256xf32>
    %c0_172 = arith.constant 0 : index
    %c30_173 = arith.constant 30 : index
    %396 = memref.load %arg4[%c0_172, %c30_173] : memref<2x49xf32, #tpu.memory_space<smem>>
    %c1_174 = arith.constant 1 : index
    %c30_175 = arith.constant 30 : index
    %397 = memref.load %arg4[%c1_174, %c30_175] : memref<2x49xf32, #tpu.memory_space<smem>>
    %398 = vector.broadcast %396 : f32 to vector<2x1xf32>
    %399 = vector.broadcast %397 : f32 to vector<2x1xf32>
    %400 = arith.select %30, %398, %399 : vector<2x1xi1>, vector<2x1xf32>
    %401 = vector.broadcast %395 : vector<1x256xf32> to vector<2x256xf32>
    %402 = arith.mulf %394, %401 : vector<2x256xf32>
    %403 = vector.broadcast %400 : vector<2x1xf32> to vector<2x256xf32>
    %404 = arith.mulf %402, %403 : vector<2x256xf32>
    %405 = arith.addf %357, %404 : vector<2x256xf32>
    %c240_i32 = arith.constant 240 : i32
    %406 = tpu.dynamic_rotate %27 by %c240_i32 dim 1 : vector<2x256xf32>, i32 -> vector<2x256xf32>
    %c31 = arith.constant 31 : index
    %c0_176 = arith.constant 0 : index
    %407 = vector.load %arg5[%c31, %c0_176] : memref<49x256xf32, #tpu.memory_space<vmem>>, vector<1x256xf32>
    %c0_177 = arith.constant 0 : index
    %c31_178 = arith.constant 31 : index
    %408 = memref.load %arg4[%c0_177, %c31_178] : memref<2x49xf32, #tpu.memory_space<smem>>
    %c1_179 = arith.constant 1 : index
    %c31_180 = arith.constant 31 : index
    %409 = memref.load %arg4[%c1_179, %c31_180] : memref<2x49xf32, #tpu.memory_space<smem>>
    %410 = vector.broadcast %408 : f32 to vector<2x1xf32>
    %411 = vector.broadcast %409 : f32 to vector<2x1xf32>
    %412 = arith.select %30, %410, %411 : vector<2x1xi1>, vector<2x1xf32>
    %413 = vector.broadcast %407 : vector<1x256xf32> to vector<2x256xf32>
    %414 = arith.mulf %406, %413 : vector<2x256xf32>
    %415 = vector.broadcast %412 : vector<2x1xf32> to vector<2x256xf32>
    %416 = arith.mulf %414, %415 : vector<2x256xf32>
    %417 = arith.addf %369, %416 : vector<2x256xf32>
    %c239_i32 = arith.constant 239 : i32
    %418 = tpu.dynamic_rotate %27 by %c239_i32 dim 1 : vector<2x256xf32>, i32 -> vector<2x256xf32>
    %c32 = arith.constant 32 : index
    %c0_181 = arith.constant 0 : index
    %419 = vector.load %arg5[%c32, %c0_181] : memref<49x256xf32, #tpu.memory_space<vmem>>, vector<1x256xf32>
    %c0_182 = arith.constant 0 : index
    %c32_183 = arith.constant 32 : index
    %420 = memref.load %arg4[%c0_182, %c32_183] : memref<2x49xf32, #tpu.memory_space<smem>>
    %c1_184 = arith.constant 1 : index
    %c32_185 = arith.constant 32 : index
    %421 = memref.load %arg4[%c1_184, %c32_185] : memref<2x49xf32, #tpu.memory_space<smem>>
    %422 = vector.broadcast %420 : f32 to vector<2x1xf32>
    %423 = vector.broadcast %421 : f32 to vector<2x1xf32>
    %424 = arith.select %30, %422, %423 : vector<2x1xi1>, vector<2x1xf32>
    %425 = vector.broadcast %419 : vector<1x256xf32> to vector<2x256xf32>
    %426 = arith.mulf %418, %425 : vector<2x256xf32>
    %427 = vector.broadcast %424 : vector<2x1xf32> to vector<2x256xf32>
    %428 = arith.mulf %426, %427 : vector<2x256xf32>
    %429 = arith.addf %381, %428 : vector<2x256xf32>
    %c238_i32 = arith.constant 238 : i32
    %430 = tpu.dynamic_rotate %27 by %c238_i32 dim 1 : vector<2x256xf32>, i32 -> vector<2x256xf32>
    %c33 = arith.constant 33 : index
    %c0_186 = arith.constant 0 : index
    %431 = vector.load %arg5[%c33, %c0_186] : memref<49x256xf32, #tpu.memory_space<vmem>>, vector<1x256xf32>
    %c0_187 = arith.constant 0 : index
    %c33_188 = arith.constant 33 : index
    %432 = memref.load %arg4[%c0_187, %c33_188] : memref<2x49xf32, #tpu.memory_space<smem>>
    %c1_189 = arith.constant 1 : index
    %c33_190 = arith.constant 33 : index
    %433 = memref.load %arg4[%c1_189, %c33_190] : memref<2x49xf32, #tpu.memory_space<smem>>
    %434 = vector.broadcast %432 : f32 to vector<2x1xf32>
    %435 = vector.broadcast %433 : f32 to vector<2x1xf32>
    %436 = arith.select %30, %434, %435 : vector<2x1xi1>, vector<2x1xf32>
    %437 = vector.broadcast %431 : vector<1x256xf32> to vector<2x256xf32>
    %438 = arith.mulf %430, %437 : vector<2x256xf32>
    %439 = vector.broadcast %436 : vector<2x1xf32> to vector<2x256xf32>
    %440 = arith.mulf %438, %439 : vector<2x256xf32>
    %441 = arith.addf %393, %440 : vector<2x256xf32>
    %c237_i32 = arith.constant 237 : i32
    %442 = tpu.dynamic_rotate %27 by %c237_i32 dim 1 : vector<2x256xf32>, i32 -> vector<2x256xf32>
    %c34 = arith.constant 34 : index
    %c0_191 = arith.constant 0 : index
    %443 = vector.load %arg5[%c34, %c0_191] : memref<49x256xf32, #tpu.memory_space<vmem>>, vector<1x256xf32>
    %c0_192 = arith.constant 0 : index
    %c34_193 = arith.constant 34 : index
    %444 = memref.load %arg4[%c0_192, %c34_193] : memref<2x49xf32, #tpu.memory_space<smem>>
    %c1_194 = arith.constant 1 : index
    %c34_195 = arith.constant 34 : index
    %445 = memref.load %arg4[%c1_194, %c34_195] : memref<2x49xf32, #tpu.memory_space<smem>>
    %446 = vector.broadcast %444 : f32 to vector<2x1xf32>
    %447 = vector.broadcast %445 : f32 to vector<2x1xf32>
    %448 = arith.select %30, %446, %447 : vector<2x1xi1>, vector<2x1xf32>
    %449 = vector.broadcast %443 : vector<1x256xf32> to vector<2x256xf32>
    %450 = arith.mulf %442, %449 : vector<2x256xf32>
    %451 = vector.broadcast %448 : vector<2x1xf32> to vector<2x256xf32>
    %452 = arith.mulf %450, %451 : vector<2x256xf32>
    %453 = arith.addf %405, %452 : vector<2x256xf32>
    %c227_i32 = arith.constant 227 : i32
    %454 = tpu.dynamic_rotate %27 by %c227_i32 dim 1 : vector<2x256xf32>, i32 -> vector<2x256xf32>
    %c35 = arith.constant 35 : index
    %c0_196 = arith.constant 0 : index
    %455 = vector.load %arg5[%c35, %c0_196] : memref<49x256xf32, #tpu.memory_space<vmem>>, vector<1x256xf32>
    %c0_197 = arith.constant 0 : index
    %c35_198 = arith.constant 35 : index
    %456 = memref.load %arg4[%c0_197, %c35_198] : memref<2x49xf32, #tpu.memory_space<smem>>
    %c1_199 = arith.constant 1 : index
    %c35_200 = arith.constant 35 : index
    %457 = memref.load %arg4[%c1_199, %c35_200] : memref<2x49xf32, #tpu.memory_space<smem>>
    %458 = vector.broadcast %456 : f32 to vector<2x1xf32>
    %459 = vector.broadcast %457 : f32 to vector<2x1xf32>
    %460 = arith.select %30, %458, %459 : vector<2x1xi1>, vector<2x1xf32>
    %461 = vector.broadcast %455 : vector<1x256xf32> to vector<2x256xf32>
    %462 = arith.mulf %454, %461 : vector<2x256xf32>
    %463 = vector.broadcast %460 : vector<2x1xf32> to vector<2x256xf32>
    %464 = arith.mulf %462, %463 : vector<2x256xf32>
    %465 = arith.addf %417, %464 : vector<2x256xf32>
    %c226_i32 = arith.constant 226 : i32
    %466 = tpu.dynamic_rotate %27 by %c226_i32 dim 1 : vector<2x256xf32>, i32 -> vector<2x256xf32>
    %c36 = arith.constant 36 : index
    %c0_201 = arith.constant 0 : index
    %467 = vector.load %arg5[%c36, %c0_201] : memref<49x256xf32, #tpu.memory_space<vmem>>, vector<1x256xf32>
    %c0_202 = arith.constant 0 : index
    %c36_203 = arith.constant 36 : index
    %468 = memref.load %arg4[%c0_202, %c36_203] : memref<2x49xf32, #tpu.memory_space<smem>>
    %c1_204 = arith.constant 1 : index
    %c36_205 = arith.constant 36 : index
    %469 = memref.load %arg4[%c1_204, %c36_205] : memref<2x49xf32, #tpu.memory_space<smem>>
    %470 = vector.broadcast %468 : f32 to vector<2x1xf32>
    %471 = vector.broadcast %469 : f32 to vector<2x1xf32>
    %472 = arith.select %30, %470, %471 : vector<2x1xi1>, vector<2x1xf32>
    %473 = vector.broadcast %467 : vector<1x256xf32> to vector<2x256xf32>
    %474 = arith.mulf %466, %473 : vector<2x256xf32>
    %475 = vector.broadcast %472 : vector<2x1xf32> to vector<2x256xf32>
    %476 = arith.mulf %474, %475 : vector<2x256xf32>
    %477 = arith.addf %429, %476 : vector<2x256xf32>
    %c225_i32 = arith.constant 225 : i32
    %478 = tpu.dynamic_rotate %27 by %c225_i32 dim 1 : vector<2x256xf32>, i32 -> vector<2x256xf32>
    %c37 = arith.constant 37 : index
    %c0_206 = arith.constant 0 : index
    %479 = vector.load %arg5[%c37, %c0_206] : memref<49x256xf32, #tpu.memory_space<vmem>>, vector<1x256xf32>
    %c0_207 = arith.constant 0 : index
    %c37_208 = arith.constant 37 : index
    %480 = memref.load %arg4[%c0_207, %c37_208] : memref<2x49xf32, #tpu.memory_space<smem>>
    %c1_209 = arith.constant 1 : index
    %c37_210 = arith.constant 37 : index
    %481 = memref.load %arg4[%c1_209, %c37_210] : memref<2x49xf32, #tpu.memory_space<smem>>
    %482 = vector.broadcast %480 : f32 to vector<2x1xf32>
    %483 = vector.broadcast %481 : f32 to vector<2x1xf32>
    %484 = arith.select %30, %482, %483 : vector<2x1xi1>, vector<2x1xf32>
    %485 = vector.broadcast %479 : vector<1x256xf32> to vector<2x256xf32>
    %486 = arith.mulf %478, %485 : vector<2x256xf32>
    %487 = vector.broadcast %484 : vector<2x1xf32> to vector<2x256xf32>
    %488 = arith.mulf %486, %487 : vector<2x256xf32>
    %489 = arith.addf %441, %488 : vector<2x256xf32>
    %c224_i32 = arith.constant 224 : i32
    %490 = tpu.dynamic_rotate %27 by %c224_i32 dim 1 : vector<2x256xf32>, i32 -> vector<2x256xf32>
    %c38 = arith.constant 38 : index
    %c0_211 = arith.constant 0 : index
    %491 = vector.load %arg5[%c38, %c0_211] : memref<49x256xf32, #tpu.memory_space<vmem>>, vector<1x256xf32>
    %c0_212 = arith.constant 0 : index
    %c38_213 = arith.constant 38 : index
    %492 = memref.load %arg4[%c0_212, %c38_213] : memref<2x49xf32, #tpu.memory_space<smem>>
    %c1_214 = arith.constant 1 : index
    %c38_215 = arith.constant 38 : index
    %493 = memref.load %arg4[%c1_214, %c38_215] : memref<2x49xf32, #tpu.memory_space<smem>>
    %494 = vector.broadcast %492 : f32 to vector<2x1xf32>
    %495 = vector.broadcast %493 : f32 to vector<2x1xf32>
    %496 = arith.select %30, %494, %495 : vector<2x1xi1>, vector<2x1xf32>
    %497 = vector.broadcast %491 : vector<1x256xf32> to vector<2x256xf32>
    %498 = arith.mulf %490, %497 : vector<2x256xf32>
    %499 = vector.broadcast %496 : vector<2x1xf32> to vector<2x256xf32>
    %500 = arith.mulf %498, %499 : vector<2x256xf32>
    %501 = arith.addf %453, %500 : vector<2x256xf32>
    %c223_i32 = arith.constant 223 : i32
    %502 = tpu.dynamic_rotate %27 by %c223_i32 dim 1 : vector<2x256xf32>, i32 -> vector<2x256xf32>
    %c39 = arith.constant 39 : index
    %c0_216 = arith.constant 0 : index
    %503 = vector.load %arg5[%c39, %c0_216] : memref<49x256xf32, #tpu.memory_space<vmem>>, vector<1x256xf32>
    %c0_217 = arith.constant 0 : index
    %c39_218 = arith.constant 39 : index
    %504 = memref.load %arg4[%c0_217, %c39_218] : memref<2x49xf32, #tpu.memory_space<smem>>
    %c1_219 = arith.constant 1 : index
    %c39_220 = arith.constant 39 : index
    %505 = memref.load %arg4[%c1_219, %c39_220] : memref<2x49xf32, #tpu.memory_space<smem>>
    %506 = vector.broadcast %504 : f32 to vector<2x1xf32>
    %507 = vector.broadcast %505 : f32 to vector<2x1xf32>
    %508 = arith.select %30, %506, %507 : vector<2x1xi1>, vector<2x1xf32>
    %509 = vector.broadcast %503 : vector<1x256xf32> to vector<2x256xf32>
    %510 = arith.mulf %502, %509 : vector<2x256xf32>
    %511 = vector.broadcast %508 : vector<2x1xf32> to vector<2x256xf32>
    %512 = arith.mulf %510, %511 : vector<2x256xf32>
    %513 = arith.addf %465, %512 : vector<2x256xf32>
    %c222_i32 = arith.constant 222 : i32
    %514 = tpu.dynamic_rotate %27 by %c222_i32 dim 1 : vector<2x256xf32>, i32 -> vector<2x256xf32>
    %c40 = arith.constant 40 : index
    %c0_221 = arith.constant 0 : index
    %515 = vector.load %arg5[%c40, %c0_221] : memref<49x256xf32, #tpu.memory_space<vmem>>, vector<1x256xf32>
    %c0_222 = arith.constant 0 : index
    %c40_223 = arith.constant 40 : index
    %516 = memref.load %arg4[%c0_222, %c40_223] : memref<2x49xf32, #tpu.memory_space<smem>>
    %c1_224 = arith.constant 1 : index
    %c40_225 = arith.constant 40 : index
    %517 = memref.load %arg4[%c1_224, %c40_225] : memref<2x49xf32, #tpu.memory_space<smem>>
    %518 = vector.broadcast %516 : f32 to vector<2x1xf32>
    %519 = vector.broadcast %517 : f32 to vector<2x1xf32>
    %520 = arith.select %30, %518, %519 : vector<2x1xi1>, vector<2x1xf32>
    %521 = vector.broadcast %515 : vector<1x256xf32> to vector<2x256xf32>
    %522 = arith.mulf %514, %521 : vector<2x256xf32>
    %523 = vector.broadcast %520 : vector<2x1xf32> to vector<2x256xf32>
    %524 = arith.mulf %522, %523 : vector<2x256xf32>
    %525 = arith.addf %477, %524 : vector<2x256xf32>
    %c221_i32 = arith.constant 221 : i32
    %526 = tpu.dynamic_rotate %27 by %c221_i32 dim 1 : vector<2x256xf32>, i32 -> vector<2x256xf32>
    %c41 = arith.constant 41 : index
    %c0_226 = arith.constant 0 : index
    %527 = vector.load %arg5[%c41, %c0_226] : memref<49x256xf32, #tpu.memory_space<vmem>>, vector<1x256xf32>
    %c0_227 = arith.constant 0 : index
    %c41_228 = arith.constant 41 : index
    %528 = memref.load %arg4[%c0_227, %c41_228] : memref<2x49xf32, #tpu.memory_space<smem>>
    %c1_229 = arith.constant 1 : index
    %c41_230 = arith.constant 41 : index
    %529 = memref.load %arg4[%c1_229, %c41_230] : memref<2x49xf32, #tpu.memory_space<smem>>
    %530 = vector.broadcast %528 : f32 to vector<2x1xf32>
    %531 = vector.broadcast %529 : f32 to vector<2x1xf32>
    %532 = arith.select %30, %530, %531 : vector<2x1xi1>, vector<2x1xf32>
    %533 = vector.broadcast %527 : vector<1x256xf32> to vector<2x256xf32>
    %534 = arith.mulf %526, %533 : vector<2x256xf32>
    %535 = vector.broadcast %532 : vector<2x1xf32> to vector<2x256xf32>
    %536 = arith.mulf %534, %535 : vector<2x256xf32>
    %537 = arith.addf %489, %536 : vector<2x256xf32>
    %c211_i32 = arith.constant 211 : i32
    %538 = tpu.dynamic_rotate %27 by %c211_i32 dim 1 : vector<2x256xf32>, i32 -> vector<2x256xf32>
    %c42 = arith.constant 42 : index
    %c0_231 = arith.constant 0 : index
    %539 = vector.load %arg5[%c42, %c0_231] : memref<49x256xf32, #tpu.memory_space<vmem>>, vector<1x256xf32>
    %c0_232 = arith.constant 0 : index
    %c42_233 = arith.constant 42 : index
    %540 = memref.load %arg4[%c0_232, %c42_233] : memref<2x49xf32, #tpu.memory_space<smem>>
    %c1_234 = arith.constant 1 : index
    %c42_235 = arith.constant 42 : index
    %541 = memref.load %arg4[%c1_234, %c42_235] : memref<2x49xf32, #tpu.memory_space<smem>>
    %542 = vector.broadcast %540 : f32 to vector<2x1xf32>
    %543 = vector.broadcast %541 : f32 to vector<2x1xf32>
    %544 = arith.select %30, %542, %543 : vector<2x1xi1>, vector<2x1xf32>
    %545 = vector.broadcast %539 : vector<1x256xf32> to vector<2x256xf32>
    %546 = arith.mulf %538, %545 : vector<2x256xf32>
    %547 = vector.broadcast %544 : vector<2x1xf32> to vector<2x256xf32>
    %548 = arith.mulf %546, %547 : vector<2x256xf32>
    %549 = arith.addf %501, %548 : vector<2x256xf32>
    %c210_i32 = arith.constant 210 : i32
    %550 = tpu.dynamic_rotate %27 by %c210_i32 dim 1 : vector<2x256xf32>, i32 -> vector<2x256xf32>
    %c43 = arith.constant 43 : index
    %c0_236 = arith.constant 0 : index
    %551 = vector.load %arg5[%c43, %c0_236] : memref<49x256xf32, #tpu.memory_space<vmem>>, vector<1x256xf32>
    %c0_237 = arith.constant 0 : index
    %c43_238 = arith.constant 43 : index
    %552 = memref.load %arg4[%c0_237, %c43_238] : memref<2x49xf32, #tpu.memory_space<smem>>
    %c1_239 = arith.constant 1 : index
    %c43_240 = arith.constant 43 : index
    %553 = memref.load %arg4[%c1_239, %c43_240] : memref<2x49xf32, #tpu.memory_space<smem>>
    %554 = vector.broadcast %552 : f32 to vector<2x1xf32>
    %555 = vector.broadcast %553 : f32 to vector<2x1xf32>
    %556 = arith.select %30, %554, %555 : vector<2x1xi1>, vector<2x1xf32>
    %557 = vector.broadcast %551 : vector<1x256xf32> to vector<2x256xf32>
    %558 = arith.mulf %550, %557 : vector<2x256xf32>
    %559 = vector.broadcast %556 : vector<2x1xf32> to vector<2x256xf32>
    %560 = arith.mulf %558, %559 : vector<2x256xf32>
    %561 = arith.addf %513, %560 : vector<2x256xf32>
    %c209_i32 = arith.constant 209 : i32
    %562 = tpu.dynamic_rotate %27 by %c209_i32 dim 1 : vector<2x256xf32>, i32 -> vector<2x256xf32>
    %c44 = arith.constant 44 : index
    %c0_241 = arith.constant 0 : index
    %563 = vector.load %arg5[%c44, %c0_241] : memref<49x256xf32, #tpu.memory_space<vmem>>, vector<1x256xf32>
    %c0_242 = arith.constant 0 : index
    %c44_243 = arith.constant 44 : index
    %564 = memref.load %arg4[%c0_242, %c44_243] : memref<2x49xf32, #tpu.memory_space<smem>>
    %c1_244 = arith.constant 1 : index
    %c44_245 = arith.constant 44 : index
    %565 = memref.load %arg4[%c1_244, %c44_245] : memref<2x49xf32, #tpu.memory_space<smem>>
    %566 = vector.broadcast %564 : f32 to vector<2x1xf32>
    %567 = vector.broadcast %565 : f32 to vector<2x1xf32>
    %568 = arith.select %30, %566, %567 : vector<2x1xi1>, vector<2x1xf32>
    %569 = vector.broadcast %563 : vector<1x256xf32> to vector<2x256xf32>
    %570 = arith.mulf %562, %569 : vector<2x256xf32>
    %571 = vector.broadcast %568 : vector<2x1xf32> to vector<2x256xf32>
    %572 = arith.mulf %570, %571 : vector<2x256xf32>
    %573 = arith.addf %525, %572 : vector<2x256xf32>
    %c208_i32 = arith.constant 208 : i32
    %574 = tpu.dynamic_rotate %27 by %c208_i32 dim 1 : vector<2x256xf32>, i32 -> vector<2x256xf32>
    %c45 = arith.constant 45 : index
    %c0_246 = arith.constant 0 : index
    %575 = vector.load %arg5[%c45, %c0_246] : memref<49x256xf32, #tpu.memory_space<vmem>>, vector<1x256xf32>
    %c0_247 = arith.constant 0 : index
    %c45_248 = arith.constant 45 : index
    %576 = memref.load %arg4[%c0_247, %c45_248] : memref<2x49xf32, #tpu.memory_space<smem>>
    %c1_249 = arith.constant 1 : index
    %c45_250 = arith.constant 45 : index
    %577 = memref.load %arg4[%c1_249, %c45_250] : memref<2x49xf32, #tpu.memory_space<smem>>
    %578 = vector.broadcast %576 : f32 to vector<2x1xf32>
    %579 = vector.broadcast %577 : f32 to vector<2x1xf32>
    %580 = arith.select %30, %578, %579 : vector<2x1xi1>, vector<2x1xf32>
    %581 = vector.broadcast %575 : vector<1x256xf32> to vector<2x256xf32>
    %582 = arith.mulf %574, %581 : vector<2x256xf32>
    %583 = vector.broadcast %580 : vector<2x1xf32> to vector<2x256xf32>
    %584 = arith.mulf %582, %583 : vector<2x256xf32>
    %585 = arith.addf %537, %584 : vector<2x256xf32>
    %c207_i32 = arith.constant 207 : i32
    %586 = tpu.dynamic_rotate %27 by %c207_i32 dim 1 : vector<2x256xf32>, i32 -> vector<2x256xf32>
    %c46 = arith.constant 46 : index
    %c0_251 = arith.constant 0 : index
    %587 = vector.load %arg5[%c46, %c0_251] : memref<49x256xf32, #tpu.memory_space<vmem>>, vector<1x256xf32>
    %c0_252 = arith.constant 0 : index
    %c46_253 = arith.constant 46 : index
    %588 = memref.load %arg4[%c0_252, %c46_253] : memref<2x49xf32, #tpu.memory_space<smem>>
    %c1_254 = arith.constant 1 : index
    %c46_255 = arith.constant 46 : index
    %589 = memref.load %arg4[%c1_254, %c46_255] : memref<2x49xf32, #tpu.memory_space<smem>>
    %590 = vector.broadcast %588 : f32 to vector<2x1xf32>
    %591 = vector.broadcast %589 : f32 to vector<2x1xf32>
    %592 = arith.select %30, %590, %591 : vector<2x1xi1>, vector<2x1xf32>
    %593 = vector.broadcast %587 : vector<1x256xf32> to vector<2x256xf32>
    %594 = arith.mulf %586, %593 : vector<2x256xf32>
    %595 = vector.broadcast %592 : vector<2x1xf32> to vector<2x256xf32>
    %596 = arith.mulf %594, %595 : vector<2x256xf32>
    %597 = arith.addf %549, %596 : vector<2x256xf32>
    %c206_i32 = arith.constant 206 : i32
    %598 = tpu.dynamic_rotate %27 by %c206_i32 dim 1 : vector<2x256xf32>, i32 -> vector<2x256xf32>
    %c47 = arith.constant 47 : index
    %c0_256 = arith.constant 0 : index
    %599 = vector.load %arg5[%c47, %c0_256] : memref<49x256xf32, #tpu.memory_space<vmem>>, vector<1x256xf32>
    %c0_257 = arith.constant 0 : index
    %c47_258 = arith.constant 47 : index
    %600 = memref.load %arg4[%c0_257, %c47_258] : memref<2x49xf32, #tpu.memory_space<smem>>
    %c1_259 = arith.constant 1 : index
    %c47_260 = arith.constant 47 : index
    %601 = memref.load %arg4[%c1_259, %c47_260] : memref<2x49xf32, #tpu.memory_space<smem>>
    %602 = vector.broadcast %600 : f32 to vector<2x1xf32>
    %603 = vector.broadcast %601 : f32 to vector<2x1xf32>
    %604 = arith.select %30, %602, %603 : vector<2x1xi1>, vector<2x1xf32>
    %605 = vector.broadcast %599 : vector<1x256xf32> to vector<2x256xf32>
    %606 = arith.mulf %598, %605 : vector<2x256xf32>
    %607 = vector.broadcast %604 : vector<2x1xf32> to vector<2x256xf32>
    %608 = arith.mulf %606, %607 : vector<2x256xf32>
    %609 = arith.addf %561, %608 : vector<2x256xf32>
    %c205_i32 = arith.constant 205 : i32
    %610 = tpu.dynamic_rotate %27 by %c205_i32 dim 1 : vector<2x256xf32>, i32 -> vector<2x256xf32>
    %c48 = arith.constant 48 : index
    %c0_261 = arith.constant 0 : index
    %611 = vector.load %arg5[%c48, %c0_261] : memref<49x256xf32, #tpu.memory_space<vmem>>, vector<1x256xf32>
    %c0_262 = arith.constant 0 : index
    %c48_263 = arith.constant 48 : index
    %612 = memref.load %arg4[%c0_262, %c48_263] : memref<2x49xf32, #tpu.memory_space<smem>>
    %c1_264 = arith.constant 1 : index
    %c48_265 = arith.constant 48 : index
    %613 = memref.load %arg4[%c1_264, %c48_265] : memref<2x49xf32, #tpu.memory_space<smem>>
    %614 = vector.broadcast %612 : f32 to vector<2x1xf32>
    %615 = vector.broadcast %613 : f32 to vector<2x1xf32>
    %616 = arith.select %30, %614, %615 : vector<2x1xi1>, vector<2x1xf32>
    %617 = vector.broadcast %611 : vector<1x256xf32> to vector<2x256xf32>
    %618 = arith.mulf %610, %617 : vector<2x256xf32>
    %619 = vector.broadcast %616 : vector<2x1xf32> to vector<2x256xf32>
    %620 = arith.mulf %618, %619 : vector<2x256xf32>
    %621 = arith.addf %573, %620 : vector<2x256xf32>
    %622 = arith.addf %621, %585 : vector<2x256xf32>
    %623 = arith.addf %597, %609 : vector<2x256xf32>
    %624 = arith.addf %622, %623 : vector<2x256xf32>
    %625 = vector.extract_strided_slice %624 {offsets = [0, 0], sizes = [1, 256], strides = [1, 1]} : vector<2x256xf32> to vector<1x256xf32>
    %626 = vector.extract_strided_slice %624 {offsets = [1, 0], sizes = [1, 256], strides = [1, 1]} : vector<2x256xf32> to vector<1x256xf32>
    %627 = arith.addf %625, %626 : vector<1x256xf32>
    %628 = arith.negf %627 : vector<1x256xf32>
    %629 = math.exp %628 : vector<1x256xf32>
    %cst_266 = arith.constant 1.000000e+00 : f32
    %630 = vector.broadcast %cst_266 : f32 to vector<1x256xf32>
    %631 = arith.addf %630, %629 : vector<1x256xf32>
    %632 = arith.divf %630, %631 : vector<1x256xf32>
    %633 = vector.shape_cast %632 : vector<1x256xf32> to vector<1x1x256xf32>
    %634 = vector.broadcast %633 : vector<1x1x256xf32> to vector<1x32x256xf32>
    %635 = arith.mulf %0, %634 : vector<1x32x256xf32>
    %c0_267 = arith.constant 0 : index
    %c0_268 = arith.constant 0 : index
    %c0_269 = arith.constant 0 : index
    %636 = vector.load %arg6[%c0_267, %c0_268, %c0_269] : memref<1x32x256xf32, #tpu.memory_space<vmem>>, vector<1x32x256xf32>
    tpu.vector_store %arg6[%c0_267, %c0_268, %c0_269], %635 {strides = array<i32>} : memref<1x32x256xf32, #tpu.memory_space<vmem>>, vector<1x32x256xf32>,
    return
  }
  func.func @transform_0(%arg0: i32) -> (i32, i32, i32) {
    %c0_i32 = arith.constant 0 : i32
    %c0_i32_0 = arith.constant 0 : i32
    %c0_i32_1 = arith.constant 0 : i32
    return %arg0, %c0_i32, %c0_i32_0 : i32, i32, i32
  }
  func.func @transform_1(%arg0: i32) -> (i32, i32) {
    %c0_i32 = arith.constant 0 : i32
    %c0_i32_0 = arith.constant 0 : i32
    %c0_i32_1 = arith.constant 0 : i32
    return %c0_i32, %c0_i32_0 : i32, i32
  }
  func.func @transform_2(%arg0: i32) -> (i32, i32) {
    %c0_i32 = arith.constant 0 : i32
    %c0_i32_0 = arith.constant 0 : i32
    %c0_i32_1 = arith.constant 0 : i32
    return %c0_i32, %c0_i32_0 : i32, i32
  }
  func.func @transform_3(%arg0: i32) -> (i32, i32) {
    %c0_i32 = arith.constant 0 : i32
    %c0_i32_0 = arith.constant 0 : i32
    %c0_i32_1 = arith.constant 0 : i32
    return %c0_i32, %c0_i32_0 : i32, i32
  }
  func.func @transform_4(%arg0: i32) -> (i32, i32) {
    %c0_i32 = arith.constant 0 : i32
    %c0_i32_0 = arith.constant 0 : i32
    %c0_i32_1 = arith.constant 0 : i32
    return %c0_i32, %c0_i32_0 : i32, i32
  }
  func.func @transform_5(%arg0: i32) -> (i32, i32, i32) {
    %c0_i32 = arith.constant 0 : i32
    %c0_i32_0 = arith.constant 0 : i32
    %c0_i32_1 = arith.constant 0 : i32
    return %arg0, %c0_i32, %c0_i32_0 : i32, i32, i32
  }
}

</mosaic_0001>

<llo_original>
// kernel: tpu_custom_call.1
$region0: #{tpu_custom_call.1}
  #allocation0 [shape = 'u32[]', space=smem, size = 0x4, offset = 0x4, fixed_abs, tag = 'smem constant byte address 0x4 - core index']
  #allocation1 [shape = 'u32[144,128]{1,0:T(1,128)}', space=vmem, size = 0x12000, scoped, tag = 'internal scratch']
  %s0 = inlined_call_operand.hbm [shape: f32[8,128], index: 0, kind: input, shape index: {}]
  %s1 = inlined_call_operand.hbm [shape: f32[8,128], index: 1, kind: output, shape index: {}]
  %s2 = sld [smem:[#allocation0]]
  $region18: #{tpu_custom_call.1} parent=0
    _
  %s4 = ssub.s32 1, %s2
  %s5 = scalar_select 0, %s4, %s2
  $region1: #{tpu_custom_call.1} parent=0
    #allocation2 [shape = 'u8[4096]{0}', space=vmem, size = 0x1000, scoped, tag = 'input window, operand 0, single buffered']
    #allocation3 [shape = 's32[1]{0}', space=sflag, size = 0x4, scoped, tag = 'scoped memory for tpu_custom_call.1']
    #allocation4 [shape = 's32[1]{0}', space=sflag, size = 0x4, scoped, tag = 'scoped memory for tpu_custom_call.1']
    #allocation5 [shape = 'u8[4096]{0}', space=vmem, size = 0x1000, scoped, tag = 'output window, operand 0, single buffered']
    %6 = vsyncpa [#allocation3], 0
    %7 = vsyncpa [#allocation4], 0
    // Predicated region
    $region2: #{tpu_custom_call.1} parent=1 // pred_check
      _
    $region3: #{tpu_custom_call.1} parent=1 // pred_check_branch
      %9 = sbr.rel (0) target = $region5
    $region4: #{tpu_custom_call.1} parent=1 // pred_region
      %s11 = ssub.s32 128, 128
      %12 = vsyncadd [#allocation3], %s11
      %s14 = sshll.u32 [#allocation2], 4
      %s15 = int_to_ptr.vmem [resolvable:$true] %s14
      %17 = dma.hbm_to_vmem [thread:$0]  %s0, 128, %s15, [#allocation3]
    $region5: #{tpu_custom_call.1} parent=1 // pred_fallthru
      _
    // Predicated region
    $region6: #{tpu_custom_call.1} parent=1 // pred_check
      _
    $region7: #{tpu_custom_call.1} parent=1 // pred_check_branch
      %19 = sbr.rel (0) target = $region9
    $region8: #{tpu_custom_call.1} parent=1 // pred_region
      %20 = dma.done [#allocation3], 128
    $region9: #{tpu_custom_call.1} parent=1 // pred_fallthru
      _
    %v21 = vld [vmem:[#allocation2] sm:$0xff]
    %22 = vrot.lane.b32.xlu0 %v21, 1
    %v23 = vpop.permute.xlu0 %22
    %24 = vst [vmem:[#allocation5] sm:$0xff] %v23
    // Predicated region
    $region10: #{tpu_custom_call.1} parent=1 // pred_check
      _
    $region11: #{tpu_custom_call.1} parent=1 // pred_check_branch
      %26 = sbr.rel (0) target = $region13
    $region12: #{tpu_custom_call.1} parent=1 // pred_region
      %s28 = ssub.s32 128, 128
      %29 = vsyncadd [#allocation4], %s28
      %s31 = sshll.u32 [#allocation5], 4
      %s32 = int_to_ptr.vmem [resolvable:$true] %s31
      %34 = dma.vmem_to_hbm [thread:$0]  %s32, 128, %s1, [#allocation4]
    $region13: #{tpu_custom_call.1} parent=1 // pred_fallthru
      _
    // Predicated region
    $region14: #{tpu_custom_call.1} parent=1 // pred_check
      _
    $region15: #{tpu_custom_call.1} parent=1 // pred_check_branch
      %36 = sbr.rel (0) target = $region17
    $region16: #{tpu_custom_call.1} parent=1 // pred_region
      %37 = dma.done [#allocation4], 128
    $region17: #{tpu_custom_call.1} parent=1 // pred_fallthru
      _
    %38 = vsyncpa [#allocation3], 1
    %39 = vsyncpa [#allocation4], 1

// kernel: tpu_custom_call.1
$region0: #{tpu_custom_call.1}
  #allocation0 [shape = 'u32[]', space=smem, size = 0x4, offset = 0x4, fixed_abs, tag = 'smem constant byte address 0x4 - core index']
  #allocation1 [shape = 'u32[144,128]{1,0:T(1,128)}', space=vmem, size = 0x12000, scoped, tag = 'internal scratch']
  %s0 = inlined_call_operand.hbm [shape: f32[2,32,256], index: 0, kind: input, shape index: {}]
  %s1 = inlined_call_operand.vmem [shape: f32[32,2], index: 1, kind: input, shape index: {}]
  %s2 = inlined_call_operand.vmem [shape: f32[2,32], index: 2, kind: input, shape index: {}]
  %s3 = inlined_call_operand.vmem [shape: f32[2,49], index: 3, kind: input, shape index: {}]
  %s4 = inlined_call_operand.hbm [shape: f32[49,256], index: 4, kind: input, shape index: {}]
  %s5 = inlined_call_operand.hbm [shape: f32[2,32,256], index: 5, kind: output, shape index: {}]
  %s6 = sld [smem:[#allocation0]]
  $region65: #{tpu_custom_call.1} parent=0
    _
  %s8 = ssub.s32 1, %s6
  %s9 = scalar_select 0, %s8, %s6
  $region1: #{tpu_custom_call.1} parent=0
    #allocation2 [shape = 'u8[65536]{0}', space=vmem, size = 0x10000, scoped, tag = 'input window, operand 0']
    #allocation3 [shape = 's32[2]{0}', space=sflag, size = 0x8, scoped, tag = 'scoped memory for tpu_custom_call.1']
    #allocation4 [shape = 's32[2]{0}', space=sflag, size = 0x8, scoped, tag = 'scoped memory for tpu_custom_call.1']
    #allocation5 [shape = 's32[2]{0}', space=sflag, size = 0x8, scoped, tag = 'scoped memory for tpu_custom_call.1']
    #allocation6 [shape = 'u8[1024]{0}', space=smem, size = 0x400, scoped, tag = 'input window, operand 3, single buffered']
    #allocation7 [shape = 'u8[57344]{0}', space=vmem, size = 0xe000, scoped, tag = 'input window, operand 4, single buffered']
    #allocation8 [shape = 's32[1]{0}', space=sflag, size = 0x4, scoped, tag = 'scoped memory for tpu_custom_call.1']
    #allocation9 [shape = 'u8[65536]{0}', space=vmem, size = 0x10000, scoped, tag = 'output window, operand 0']
    %10 = vsyncpa [#allocation3], 0
    %s11 = scalar_lea.sflag [#allocation3], 1
    %12 = vsyncpa %s11, 0
    %13 = vsyncpa [#allocation5], 0
    %14 = vsyncpa [#allocation8], 0
    %15 = vsyncpa [#allocation4], 0
    %s16 = scalar_lea.sflag [#allocation4], 1
    %17 = vsyncpa %s16, 0
    loop: start=0, step=1, limit=4
    $region2: #{tpu_custom_call.1} parent=1 // loop_pre_header
      _
    $region3: #{tpu_custom_call.1} parent=1 // loop_header
      %s19 = sphi 0, %s23
      %p20 = scmp.ge.s32.totalorder %s19, 4
      %s29 = sphi 0, %s31
      %s32 = sphi 0, %s29
      %s33 = sphi 0, %s32
      %s49 = sphi 0, %s33
      %s53 = sphi 0, %s53
      %s55 = sphi 0, %s53
      %s56 = sphi 0, %s55
      %s70 = sphi 0, %s56
      %s74 = sphi 0, %s74
      %s76 = sphi 0, %s74
      %s77 = sphi 0, %s76
      %s91 = sphi 0, %s77
      %s95 = sphi 0, %s95
      %s97 = sphi 0, %s95
      %s98 = sphi 0, %s97
      %s112 = sphi 0, %s98
      %s116 = sphi 0, %s116
      %s118 = sphi 0, %s116
      %s119 = sphi 0, %s118
      %s133 = sphi 0, %s119
      %s139 = sphi 0, %s141
      %s142 = sphi 0, %s139
      %s143 = sphi 0, %s142
      %s159 = sphi 0, %s143
    $region4: #{tpu_custom_call.1} parent=1 // loop_header_branch
      %22 = sbr.rel (%p20) target = $region8
    $region5: #{tpu_custom_call.1} parent=1 // loop_body
      %s24 = ssub.s32 %s19, 1
      %s25 = ssub.s32 %s19, 2
      %s26 = sadd.s32 %s19, 1
      %s27 = ssub.s32 %s19, %s26
      %p28 = scmp.eq.s32.totalorder %s27, 0
      %s30 = sadd.s32 %s29, 1
      %s31 = scalar_select %p28, %s29, %s30
      %p34 = pneg %p28
      %p35 = scmp.eq.s32.totalorder %s19, 1
      %p36 = por %p34, %p35
      %p37 = scmp.ne.s32.totalorder %s29, %s32
      %p38 = scmp.eq.s32.totalorder %s19, 0
      %p39 = por %p37, %p38
      %p40 = scmp.ne.s32.totalorder %s29, %s32
      %p41 = scmp.eq.s32.totalorder %s24, 1
      %p42 = por %p40, %p41
      %p43 = scmp.ne.s32.totalorder %s32, %s33
      %p44 = scmp.eq.s32.totalorder %s24, 0
      %p45 = por %p43, %p44
      %p46 = scmp.ne.s32.totalorder %s32, %s33
      %p47 = scmp.eq.s32.totalorder %s25, 1
      %p48 = por %p46, %p47
      %p50 = scmp.ne.s32.totalorder %s33, %s49
      %p51 = scmp.eq.s32.totalorder %s25, 0
      %p52 = por %p50, %p51
      %s54 = sadd.s32 %s53, 1
      %p57 = scmp.eq.s32.totalorder %s19, 1
      %p58 = scmp.ne.s32.totalorder %s53, %s55
      %p59 = scmp.eq.s32.totalorder %s19, 0
      %p60 = por %p58, %p59
      %p61 = scmp.ne.s32.totalorder %s53, %s55
      %p62 = scmp.eq.s32.totalorder %s24, 1
      %p63 = por %p61, %p62
      %p64 = scmp.ne.s32.totalorder %s55, %s56
      %p65 = scmp.eq.s32.totalorder %s24, 0
      %p66 = por %p64, %p65
      %p67 = scmp.ne.s32.totalorder %s55, %s56
      %p68 = scmp.eq.s32.totalorder %s25, 1
      %p69 = por %p67, %p68
      %p71 = scmp.ne.s32.totalorder %s56, %s70
      %p72 = scmp.eq.s32.totalorder %s25, 0
      %p73 = por %p71, %p72
      %s75 = sadd.s32 %s74, 1
      %p78 = scmp.eq.s32.totalorder %s19, 1
      %p79 = scmp.ne.s32.totalorder %s74, %s76
      %p80 = scmp.eq.s32.totalorder %s19, 0
      %p81 = por %p79, %p80
      %p82 = scmp.ne.s32.totalorder %s74, %s76
      %p83 = scmp.eq.s32.totalorder %s24, 1
      %p84 = por %p82, %p83
      %p85 = scmp.ne.s32.totalorder %s76, %s77
      %p86 = scmp.eq.s32.totalorder %s24, 0
      %p87 = por %p85, %p86
      %p88 = scmp.ne.s32.totalorder %s76, %s77
      %p89 = scmp.eq.s32.totalorder %s25, 1
      %p90 = por %p88, %p89
      %p92 = scmp.ne.s32.totalorder %s77, %s91
      %p93 = scmp.eq.s32.totalorder %s25, 0
      %p94 = por %p92, %p93
      %s96 = sadd.s32 %s95, 1
      %p99 = scmp.eq.s32.totalorder %s19, 1
      %p100 = scmp.ne.s32.totalorder %s95, %s97
      %p101 = scmp.eq.s32.totalorder %s19, 0
      %p102 = por %p100, %p101
      %p103 = scmp.ne.s32.totalorder %s95, %s97
      %p104 = scmp.eq.s32.totalorder %s24, 1
      %p105 = por %p103, %p104
      %p106 = scmp.ne.s32.totalorder %s97, %s98
      %p107 = scmp.eq.s32.totalorder %s24, 0
      %p108 = por %p106, %p107
      %p109 = scmp.ne.s32.totalorder %s97, %s98
      %p110 = scmp.eq.s32.totalorder %s25, 1
      %p111 = por %p109, %p110
      %p113 = scmp.ne.s32.totalorder %s98, %s112
      %p114 = scmp.eq.s32.totalorder %s25, 0
      %p115 = por %p113, %p114
      %s117 = sadd.s32 %s116, 1
      %p120 = scmp.eq.s32.totalorder %s19, 1
      %p121 = scmp.ne.s32.totalorder %s116, %s118
      %p122 = scmp.eq.s32.totalorder %s19, 0
      %p123 = por %p121, %p122
      %p124 = scmp.ne.s32.totalorder %s116, %s118
      %p125 = scmp.eq.s32.totalorder %s24, 1
      %p126 = por %p124, %p125
      %p127 = scmp.ne.s32.totalorder %s118, %s119
      %p128 = scmp.eq.s32.totalorder %s24, 0
      %p129 = por %p127, %p128
      %p130 = scmp.ne.s32.totalorder %s118, %s119
      %p131 = scmp.eq.s32.totalorder %s25, 1
      %p132 = por %p130, %p131
      %p134 = scmp.ne.s32.totalorder %s119, %s133
      %p135 = scmp.eq.s32.totalorder %s25, 0
      %p136 = por %p134, %p135
      %s137 = ssub.s32 %s19, %s26
      %p138 = scmp.eq.s32.totalorder %s137, 0
      %s140 = sadd.s32 %s139, 1
      %s141 = scalar_select %p138, %s139, %s140
      %p144 = pneg %p138
      %p145 = scmp.eq.s32.totalorder %s19, 1
      %p146 = por %p144, %p145
      %p147 = scmp.ne.s32.totalorder %s139, %s142
      %p148 = scmp.eq.s32.totalorder %s19, 0
      %p149 = por %p147, %p148
      %p150 = scmp.ne.s32.totalorder %s139, %s142
      %p151 = scmp.eq.s32.totalorder %s24, 1
      %p152 = por %p150, %p151
      %p153 = scmp.ne.s32.totalorder %s142, %s143
      %p154 = scmp.eq.s32.totalorder %s24, 0
      %p155 = por %p153, %p154
      %p156 = scmp.ne.s32.totalorder %s142, %s143
      %p157 = scmp.eq.s32.totalorder %s25, 1
      %p158 = por %p156, %p157
      %p160 = scmp.ne.s32.totalorder %s143, %s159
      %p161 = scmp.eq.s32.totalorder %s25, 0
      %p162 = por %p160, %p161
      %p163 = scmp.le.s32.totalorder 1, %s19
      %p164 = scmp.lt.s32.totalorder %s19, 3
      %p165 = pnand %p163, %p164
      %p166 = pneg %p165
      // Predicated region
      $region9: #{tpu_custom_call.1} parent=5 // pred_check
        _
      $region10: #{tpu_custom_call.1} parent=5 // pred_check_branch
        %168 = sbr.rel (%p165) target = $region12
      $region11: #{tpu_custom_call.1} parent=5 // pred_region
        %s169 = ssub.s32 %s19, 1
        // Predicated region
        $region13: #{tpu_custom_call.1} parent=11 // pred_check
          %p170 = pneg %p66
        $region14: #{tpu_custom_call.1} parent=11 // pred_check_branch
          %172 = sbr.rel (%p170) target = $region16
        $region15: #{tpu_custom_call.1} parent=11 // pred_region
          _
        $region16: #{tpu_custom_call.1} parent=11 // pred_fallthru
          _
        // Predicated region
        $region17: #{tpu_custom_call.1} parent=11 // pred_check
          %p173 = pneg %p87
        $region18: #{tpu_custom_call.1} parent=11 // pred_check_branch
          %175 = sbr.rel (%p173) target = $region20
        $region19: #{tpu_custom_call.1} parent=11 // pred_region
          _
        $region20: #{tpu_custom_call.1} parent=11 // pred_fallthru
          _
        // Predicated region
        $region21: #{tpu_custom_call.1} parent=11 // pred_check
          %p176 = pneg %p108
        $region22: #{tpu_custom_call.1} parent=11 // pred_check_branch
          %178 = sbr.rel (%p176) target = $region24
        $region23: #{tpu_custom_call.1} parent=11 // pred_region
          %s180 = ssub.s32 32, 32
          %181 = vsyncadd [#allocation5], %s180
          %s183 = sshll.u32 %s3, 4
          %s184 = int_to_ptr.vmem [resolvable:$true] %s183
          %186 = dma.vmem_to_smem %s184, 32, [#allocation6], [#allocation5]
        $region24: #{tpu_custom_call.1} parent=11 // pred_fallthru
          _
        // Predicated region
        $region25: #{tpu_custom_call.1} parent=11 // pred_check
          %p187 = pneg %p129
        $region26: #{tpu_custom_call.1} parent=11 // pred_check_branch
          %189 = sbr.rel (%p187) target = $region28
        $region27: #{tpu_custom_call.1} parent=11 // pred_region
          %s191 = ssub.s32 1792, 1792
          %192 = vsyncadd [#allocation8], %s191
          %s193 = sshll.u32 [#allocation7], 4
          %s194 = int_to_ptr.vmem [resolvable:$true] %s193
          %199 = dma.hbm_to_vmem [thread:$0]  %s4, 1792, %s194, [#allocation8], 256, 256, 16
        $region28: #{tpu_custom_call.1} parent=11 // pred_fallthru
          _
      $region12: #{tpu_custom_call.1} parent=5 // pred_fallthru
        _
      %p200 = scmp.lt.s32.totalorder %s19, 2
      // Predicated region
      $region29: #{tpu_custom_call.1} parent=5 // pred_check
        %p201 = pneg %p200
      $region30: #{tpu_custom_call.1} parent=5 // pred_check_branch
        %203 = sbr.rel (%p201) target = $region32
      $region31: #{tpu_custom_call.1} parent=5 // pred_region
        // Predicated region
        $region33: #{tpu_custom_call.1} parent=31 // pred_check
          %p204 = pneg %p39
        $region34: #{tpu_custom_call.1} parent=31 // pred_check_branch
          %206 = sbr.rel (%p204) target = $region36
        $region35: #{tpu_custom_call.1} parent=31 // pred_region
          %s207 = sand.u32 %s29, 1
          %s208 = scalar_lea.sflag [#allocation3], %s207
          %s209 = sand.u32 %s29, 1
          %s210 = smul.addr %s209, 64
          %s211 = scalar_lea.vmem [#allocation2], %s210
          %s213 = ssub.s32 1024, 1024
          %214 = vsyncadd %s208, %s213
          %s215 = smul.addr %s19, 8
          %s216 = smul.addr %s215, 128
          %s217 = scalar_lea.hbm %s0, %s216
          %s218 = sshll.u32 %s211, 4
          %s219 = int_to_ptr.vmem [resolvable:$true] %s218
          %224 = dma.hbm_to_vmem [thread:$0]  %s217, 1024, %s219, %s208, 256, 256, 16
        $region36: #{tpu_custom_call.1} parent=31 // pred_fallthru
          _
      $region32: #{tpu_custom_call.1} parent=5 // pred_fallthru
        _
      %p225 = scmp.le.s32.totalorder 1, %s19
      %p226 = scmp.lt.s32.totalorder %s19, 3
      %p227 = pnand %p225, %p226
      %p228 = pneg %p227
      // Predicated region
      $region37: #{tpu_custom_call.1} parent=5 // pred_check
        _
      $region38: #{tpu_custom_call.1} parent=5 // pred_check_branch
        %230 = sbr.rel (%p227) target = $region40
      $region39: #{tpu_custom_call.1} parent=5 // pred_region
        %s231 = ssub.s32 %s19, 1
        %s232 = sand.u32 %s32, 1
        %s233 = scalar_lea.sflag [#allocation3], %s232
        %s234 = sand.u32 %s32, 1
        %s235 = smul.addr %s234, 64
        %s236 = scalar_lea.vmem [#allocation2], %s235
        // Predicated region
        $region41: #{tpu_custom_call.1} parent=39 // pred_check
          %p237 = pneg %p45
        $region42: #{tpu_custom_call.1} parent=39 // pred_check_branch
          %239 = sbr.rel (%p237) target = $region44
        $region43: #{tpu_custom_call.1} parent=39 // pred_region
          %240 = dma.done %s233, 1024
        $region44: #{tpu_custom_call.1} parent=39 // pred_fallthru
          _
        // Predicated region
        $region45: #{tpu_custom_call.1} parent=39 // pred_check
          %p241 = pneg %p108
        $region46: #{tpu_custom_call.1} parent=39 // pred_check_branch
          %243 = sbr.rel (%p241) target = $region48
        $region47: #{tpu_custom_call.1} parent=39 // pred_region
          %244 = dma.done [#allocation5], 32
        $region48: #{tpu_custom_call.1} parent=39 // pred_fallthru
          _
        // Predicated region
        $region49: #{tpu_custom_call.1} parent=39 // pred_check
          %p245 = pneg %p129
        $region50: #{tpu_custom_call.1} parent=39 // pred_check_branch
          %247 = sbr.rel (%p245) target = $region52
        $region51: #{tpu_custom_call.1} parent=39 // pred_region
          %248 = dma.done [#allocation8], 1792
        $region52: #{tpu_custom_call.1} parent=39 // pred_fallthru
          _
        %249 = sfence
        %s250 = sand.u32 %s32, 1
        %s251 = scalar_lea.sflag [#allocation3], %s250
        %s252 = sand.u32 %s32, 1
        %s253 = smul.addr %s252, 64
        %s254 = scalar_lea.vmem [#allocation2], %s253
        %p255 = pneg %p45
        %p256 = pneg %p42
        %p257 = pneg %p66
        %p258 = pneg %p63
        %p259 = pneg %p87
        %p260 = pneg %p84
        %p261 = pneg %p108
        %p262 = pneg %p105
        %p263 = pneg %p129
        %p264 = pneg %p126
        %p265 = pneg %p155
        %p266 = pneg %p152
        %s267 = sand.u32 %s142, 1
        %s268 = scalar_lea.sflag [#allocation4], %s267
        %s269 = sand.u32 %s142, 1
        %s270 = smul.addr %s269, 64
        %s271 = scalar_lea.vmem [#allocation9], %s270
        %v272 = vld [vmem:[%s236] sm:$0xff]
        %v273 = vld [vmem:[%s236 + $0x8] sm:$0xff]
        %v274 = vld [vmem:[%s236 + $0x10] sm:$0xff]
        %v275 = vld [vmem:[%s236 + $0x18] sm:$0xff]
        %v276 = vld [vmem:[%s236 + $0x20] sm:$0xff]
        %v277 = vld [vmem:[%s236 + $0x28] sm:$0xff]
        %v278 = vld [vmem:[%s236 + $0x30] sm:$0xff]
        %v279 = vld [vmem:[%s236 + $0x38] sm:$0xff]
        %v280 = vadd.f32 %v272, %v273
        %281 = vadd.xlane.f32.xlu0 %v280
        %v282 = vpop.xlane.xlu0 %281
        %v283 = vadd.f32 %v274, %v275
        %284 = vadd.xlane.f32.xlu0 %v283
        %v285 = vpop.xlane.xlu0 %284
        %v286 = vadd.f32 %v276, %v277
        %287 = vadd.xlane.f32.xlu0 %v286
        %v288 = vpop.xlane.xlu0 %287
        %v289 = vadd.f32 %v278, %v279
        %290 = vadd.xlane.f32.xlu0 %v289
        %v291 = vpop.xlane.xlu0 %290
        %v292 = vrcp.pop 256.0
        %v293 = vmul.f32 %v282, %v292
        %v294 = vmul.f32 %v285, %v292
        %v295 = vmul.f32 %v288, %v292
        %v296 = vmul.f32 %v291, %v292
        %v297 = vmax.f32 %v272, %v273
        %298 = vmax.xlane.f32.xlu0 %v297
        %v299 = vpop.xlane.xlu0 %298
        %v300 = vmax.f32 %v274, %v275
        %301 = vmax.xlane.f32.xlu0 %v300
        %v302 = vpop.xlane.xlu0 %301
        %v303 = vmax.f32 %v276, %v277
        %304 = vmax.xlane.f32.xlu0 %v303
        %v305 = vpop.xlane.xlu0 %304
        %v306 = vmax.f32 %v278, %v279
        %307 = vmax.xlane.f32.xlu0 %v306
        %v308 = vpop.xlane.xlu0 %307
        %v313 = vlaneseq
        %v314 = vand.u32 %v313, 127
        %v315 = vlaneseq
        %v316 = vshrl.u32 %v315, 7
        %v317 = vsub.s32 %v314, %v316
        %v318 = vrot.slane %v293, %v317
        %v319 = vadd.s32 %v314, 4294967288
        %v320 = vlaneseq
        %v321 = vshrl.u32 %v320, 7
        %v322 = vsub.s32 %v319, %v321
        %v323 = vrot.slane %v294, %v322
        %vm324 = vcmask 130112
        %v325 = vsel %vm324, %v323, %v318
        %v326 = vadd.s32 %v314, 4294967280
        %v327 = vlaneseq
        %v328 = vshrl.u32 %v327, 7
        %v329 = vsub.s32 %v326, %v328
        %v330 = vrot.slane %v295, %v329
        %vm331 = vcmask 195712
        %v332 = vsel %vm331, %v330, %v325
        %v333 = vadd.s32 %v314, 4294967272
        %v334 = vlaneseq
        %v335 = vshrl.u32 %v334, 7
        %v336 = vsub.s32 %v333, %v335
        %v337 = vrot.slane %v296, %v336
        %vm338 = vcmask 261312
        %v339 = vsel %vm338, %v337, %v332
        %v345 = vlaneseq
        %v346 = vshrl.u32 %v345, 7
        %v347 = vsub.s32 %v314, %v346
        %v348 = vrot.slane %v299, %v347
        %v349 = vlaneseq
        %v350 = vshrl.u32 %v349, 7
        %v351 = vsub.s32 %v319, %v350
        %v352 = vrot.slane %v302, %v351
        %v353 = vsel %vm324, %v352, %v348
        %v354 = vlaneseq
        %v355 = vshrl.u32 %v354, 7
        %v356 = vsub.s32 %v326, %v355
        %v357 = vrot.slane %v305, %v356
        %v358 = vsel %vm331, %v357, %v353
        %v359 = vlaneseq
        %v360 = vshrl.u32 %v359, 7
        %v361 = vsub.s32 %v333, %v360
        %v362 = vrot.slane %v308, %v361
        %v363 = vsel %vm338, %v362, %v358
        %vm365 = vcmask 1040384
        %v366 = vsel %vm365, %v339, %v363
        %v367 = vld [vmem:[%s1] sm:$0xff]
        %v368 = vld [vmem:[%s1 + $0x8] sm:$0xff]
        %v369 = vld [vmem:[%s1 + $0x10] sm:$0xff]
        %v370 = vld [vmem:[%s1 + $0x18] sm:$0xff]
        %vm371 = vcmask 261120
        %v373 = vsel %vm371, %v366, 0
        %375 = vmatprep.subr.mxu0 0.0
        %376 = vmatpush1.msra.mxu0 %v367
        %377 = vmatprep.subr.mxu0 0.0
        %378 = vmatpush1.msra.mxu0 %v368
        %379 = vmatprep.subr.mxu0 0.0
        %380 = vmatpush1.msra.mxu0 %v369
        %381 = vmatprep.subr.mxu0 0.0
        %382 = vmatpush1.msra.mxu0 %v370
        %383 = vmatprep.subr.mxu0 0.0
        %384 = vmatpush1.msra.mxu0 0.0
        %385 = vmatprep.subr.mxu0 0.0
        %386 = vmatpush1.msra.mxu0 0.0
        %387 = vmatprep.subr.mxu0 0.0
        %388 = vmatpush1.msra.mxu0 0.0
        %389 = vmatprep.subr.mxu0 0.0
        %390 = vmatpush1.msra.mxu0 0.0
        %391 = vmatprep.subr.mxu0 0.0
        %392 = vmatpush1.msra.mxu0 0.0
        %393 = vmatprep.subr.mxu0 0.0
        %394 = vmatpush1.msra.mxu0 0.0
        %395 = vmatprep.subr.mxu0 0.0
        %396 = vmatpush1.msra.mxu0 0.0
        %397 = vmatprep.subr.mxu0 0.0
        %398 = vmatpush1.msra.mxu0 0.0
        %399 = vmatprep.subr.mxu0 0.0
        %400 = vmatpush1.msra.mxu0 0.0
        %401 = vmatprep.subr.mxu0 0.0
        %402 = vmatpush1.msra.mxu0 0.0
        %403 = vmatprep.subr.mxu0 0.0
        %404 = vmatpush1.msra.mxu0 0.0
        %405 = vmatprep.subr.mxu0 0.0
        %406 = vmatpush1.msra.mxu0 0.0
        %407 = vmatprep.subr.mxu0 0.0
        %408 = vmatpush1.msra.mxu0 0.0
        %409 = vmatprep.subr.mxu0 0.0
        %410 = vmatpush1.msra.mxu0 0.0
        %411 = vmatprep.subr.mxu0 0.0
        %412 = vmatpush1.msra.mxu0 0.0
        %413 = vmatprep.subr.mxu0 0.0
        %414 = vmatpush1.msra.mxu0 0.0
        %415 = vmatprep.subr.mxu0 0.0
        %416 = vmatpush1.msra.mxu0 0.0
        %417 = vmatprep.subr.mxu0 0.0
        %418 = vmatpush1.msra.mxu0 0.0
        %419 = vmatprep.subr.mxu0 0.0
        %420 = vmatpush1.msra.mxu0 0.0
        %421 = vmatprep.subr.mxu0 0.0
        %422 = vmatpush1.msra.mxu0 0.0
        %423 = vmatprep.subr.mxu0 0.0
        %424 = vmatpush1.msra.mxu0 0.0
        %425 = vmatprep.subr.mxu0 0.0
        %426 = vmatpush1.msra.mxu0 0.0
        %427 = vmatprep.subr.mxu0 0.0
        %428 = vmatpush1.msra.mxu0 0.0
        %429 = vmatprep.subr.mxu0 0.0
        %430 = vmatpush1.msra.mxu0 0.0
        %431 = vmatprep.subr.mxu0 0.0
        %432 = vmatpush1.msra.mxu0 0.0
        %433 = vmatprep.subr.mxu0 0.0
        %434 = vmatpush1.msra.mxu0 0.0
        %435 = vmatprep.subr.mxu0 0.0
        %436 = vmatpush1.msra.mxu0 0.0
        %437 = vmatprep.subr.mxu0 0.0
        %438 = vmatpush1.msra.mxu0 0.0
        %439 = vmatprep.mubr.f32.mxu0 0.0
        %440 = vmatmul.mubr.f32.gmra.mrb[0].mxu0 %v373
        %v441 = vpop.f32.mrb[0].mxu0
        %v442 = vadd.f32 0.0, %v441
        %v443 = vpop.f32.mrb[0].mxu0
        %444 = vdwg.mxu0
        %v445 = vmax.f32 %v442, 0.0
        %v446 = vld [vmem:[%s2] sm:$0x3]
        %vm447 = vcmask 15360
        %v449 = vsel %vm447, %v445, 0
        %vm451 = vcmask 1041408
        %v453 = vsel %vm451, %v446, 0
        %455 = vmatprep.subr.mxu0 0.0
        %456 = vmatpush1.msra.mxu0 %v453
        %457 = vmatprep.subr.mxu0 0.0
        %458 = vmatpush1.msra.mxu0 0.0
        %459 = vmatprep.subr.mxu0 0.0
        %460 = vmatpush1.msra.mxu0 0.0
        %461 = vmatprep.subr.mxu0 0.0
        %462 = vmatpush1.msra.mxu0 0.0
        %463 = vmatprep.subr.mxu0 0.0
        %464 = vmatpush1.msra.mxu0 0.0
        %465 = vmatprep.subr.mxu0 0.0
        %466 = vmatpush1.msra.mxu0 0.0
        %467 = vmatprep.subr.mxu0 0.0
        %468 = vmatpush1.msra.mxu0 0.0
        %469 = vmatprep.subr.mxu0 0.0
        %470 = vmatpush1.msra.mxu0 0.0
        %471 = vmatprep.subr.mxu0 0.0
        %472 = vmatpush1.msra.mxu0 0.0
        %473 = vmatprep.subr.mxu0 0.0
        %474 = vmatpush1.msra.mxu0 0.0
        %475 = vmatprep.subr.mxu0 0.0
        %476 = vmatpush1.msra.mxu0 0.0
        %477 = vmatprep.subr.mxu0 0.0
        %478 = vmatpush1.msra.mxu0 0.0
        %479 = vmatprep.subr.mxu0 0.0
        %480 = vmatpush1.msra.mxu0 0.0
        %481 = vmatprep.subr.mxu0 0.0
        %482 = vmatpush1.msra.mxu0 0.0
        %483 = vmatprep.subr.mxu0 0.0
        %484 = vmatpush1.msra.mxu0 0.0
        %485 = vmatprep.subr.mxu0 0.0
        %486 = vmatpush1.msra.mxu0 0.0
        %487 = vmatprep.subr.mxu0 0.0
        %488 = vmatpush1.msra.mxu0 0.0
        %489 = vmatprep.subr.mxu0 0.0
        %490 = vmatpush1.msra.mxu0 0.0
        %491 = vmatprep.subr.mxu0 0.0
        %492 = vmatpush1.msra.mxu0 0.0
        %493 = vmatprep.subr.mxu0 0.0
        %494 = vmatpush1.msra.mxu0 0.0
        %495 = vmatprep.subr.mxu0 0.0
        %496 = vmatpush1.msra.mxu0 0.0
        %497 = vmatprep.subr.mxu0 0.0
        %498 = vmatpush1.msra.mxu0 0.0
        %499 = vmatprep.subr.mxu0 0.0
        %500 = vmatpush1.msra.mxu0 0.0
        %501 = vmatprep.subr.mxu0 0.0
        %502 = vmatpush1.msra.mxu0 0.0
        %503 = vmatprep.subr.mxu0 0.0
        %504 = vmatpush1.msra.mxu0 0.0
        %505 = vmatprep.subr.mxu0 0.0
        %506 = vmatpush1.msra.mxu0 0.0
        %507 = vmatprep.subr.mxu0 0.0
        %508 = vmatpush1.msra.mxu0 0.0
        %509 = vmatprep.subr.mxu0 0.0
        %510 = vmatpush1.msra.mxu0 0.0
        %511 = vmatprep.subr.mxu0 0.0
        %512 = vmatpush1.msra.mxu0 0.0
        %513 = vmatprep.subr.mxu0 0.0
        %514 = vmatpush1.msra.mxu0 0.0
        %515 = vmatprep.subr.mxu0 0.0
        %516 = vmatpush1.msra.mxu0 0.0
        %517 = vmatprep.subr.mxu0 0.0
        %518 = vmatpush1.msra.mxu0 0.0
        %519 = vmatprep.mubr.f32.mxu0 0.0
        %520 = vmatmul.mubr.f32.gmra.mrb[0].mxu0 %v449
        %v521 = vpop.f32.mrb[0].mxu0
        %v522 = vadd.f32 0.0, %v521
        %v523 = vpop.f32.mrb[0].mxu0
        %524 = vdwg.mxu0
        %v526 = vrot.slane %v522, 1
        %v528 = vadd.f32 %v522, %v526
        %v529 = vxor.u32 %v528, 2147483648
        %v530 = vmul.f32 %v529, 1.442695
        %v531 = vpow.pop %v530
        %v532 = vadd.f32 %v531, 1.0
        %v533 = vrcp.pop %v532
        %v534 = vmul.f32 1.0, %v533
        %v535 = vlaneseq
        %v536 = vshrl.u32 %v535, 7
        %v537 = vsub.s32 0, %v536
        %v538 = vrot.slane %v534, %v537
        %540 = vbcast.lane.b32.xlu0 %v538, 256
        %v541 = vpop.permute.xlu0 %540
        %s543 = sor.u32 256, 8
        %544 = vbcast.lane.b32.xlu0 %v538, %s543
        %v545 = vpop.permute.xlu0 %544
        %s547 = sor.u32 256, 16
        %548 = vbcast.lane.b32.xlu0 %v538, %s547
        %v549 = vpop.permute.xlu0 %548
        %s551 = sor.u32 256, 24
        %552 = vbcast.lane.b32.xlu0 %v538, %s551
        %v553 = vpop.permute.xlu0 %552
        %v554 = vmul.f32 %v272, %v541
        %v555 = vmul.f32 %v273, %v541
        %v556 = vmul.f32 %v274, %v545
        %v557 = vmul.f32 %v275, %v545
        %v558 = vmul.f32 %v276, %v549
        %v559 = vmul.f32 %v277, %v549
        %v560 = vmul.f32 %v278, %v553
        %v561 = vmul.f32 %v279, %v553
        %v562 = vadd.f32 %v554, %v556
        %v563 = vadd.f32 %v562, %v558
        %v564 = vadd.f32 %v563, %v560
        %v565 = vrot.slane %v564, 4
        %v566 = vadd.f32 %v564, %v565
        %v567 = vrot.slane %v566, 2
        %v568 = vadd.f32 %v566, %v567
        %v569 = vrot.slane %v568, 1
        %v570 = vadd.f32 %v568, %v569
        %v571 = vadd.f32 %v555, %v557
        %v572 = vadd.f32 %v571, %v559
        %v573 = vadd.f32 %v572, %v561
        %v574 = vrot.slane %v573, 4
        %v575 = vadd.f32 %v573, %v574
        %v576 = vrot.slane %v575, 2
        %v577 = vadd.f32 %v575, %v576
        %v578 = vrot.slane %v577, 1
        %v579 = vadd.f32 %v577, %v578
        %v580 = vrcp.pop 32.0
        %v581 = vmul.f32 %v570, %v580
        %v582 = vmul.f32 %v579, %v580
        %v583 = vmax.f32 %v554, %v558
        %v584 = vmax.f32 %v556, %v560
        %v585 = vmax.f32 %v583, %v584
        %v586 = vrot.slane %v585, 4
        %v587 = vmax.f32 %v585, %v586
        %v588 = vrot.slane %v587, 2
        %v589 = vmax.f32 %v587, %v588
        %v590 = vrot.slane %v589, 1
        %v591 = vmax.f32 %v589, %v590
        %v592 = vmax.f32 %v555, %v559
        %v593 = vmax.f32 %v557, %v561
        %v594 = vmax.f32 %v592, %v593
        %v595 = vrot.slane %v594, 4
        %v596 = vmax.f32 %v594, %v595
        %v597 = vrot.slane %v596, 2
        %v598 = vmax.f32 %v596, %v597
        %v599 = vrot.slane %v598, 1
        %v600 = vmax.f32 %v598, %v599
        %v601 = vsel %vm365, %v581, %v591
        %v602 = vsel %vm365, %v582, %v600
        %v603 = vlaneseq
        %v604 = vshrl.u32 %v603, 7
        %vm605 = vcmp.lt.s32.totalorder %v604, 1
        %606 = vrot.lane.b32.xlu0 %v601, 51
        %v607 = vpop.permute.xlu0 %606
        %608 = vrot.lane.b32.xlu0 %v602, 51
        %v609 = vpop.permute.xlu0 %608
        %vm610 = vcmp.lt.s32.totalorder %v314, 51
        %v611 = vsel %vm610, %v607, %v609
        %v612 = vsel %vm610, %v609, %v607
        %v613 = vld [vmem:[#allocation7] ss:$8 sm:$0x3]
        %s614 = sld [smem:[#allocation6]]
        %s615 = sld [smem:[#allocation6 + $0x80]]
        %v616 = vstv %s614
        %v617 = vstv %s615
        %v618 = vsel %vm605, %v616, %v617
        %v620 = vlaneseq
        %v621 = vshrl.u32 %v620, 7
        %v622 = vsub.s32 0, %v621
        %v623 = vrot.slane %v613, %v622
        %v624 = vlaneseq
        %v625 = vshrl.u32 %v624, 7
        %v626 = vsub.s32 1, %v625
        %v627 = vrot.slane %v613, %v626
        %v630 = vmul.f32 %v612, %v623
        %v631 = vmul.f32 %v611, %v627
        %v632 = vmul.f32 %v630, %v618
        %v633 = vmul.f32 %v631, %v618
        %v634 = vadd.f32 %v632, 0.0
        %v635 = vadd.f32 %v633, 0.0
        %636 = vrot.lane.b32.xlu0 %v601, 50
        %v637 = vpop.permute.xlu0 %636
        %638 = vrot.lane.b32.xlu0 %v602, 50
        %v639 = vpop.permute.xlu0 %638
        %vm640 = vcmp.lt.s32.totalorder %v314, 50
        %v641 = vsel %vm640, %v637, %v639
        %v642 = vsel %vm640, %v639, %v637
        %s643 = scalar_lea.vmem [#allocation7], 1
        %v644 = vld [vmem:[%s643] ss:$8 sm:$0x3]
        %s645 = sld [smem:[#allocation6 + $0x1]]
        %s646 = sld [smem:[#allocation6 + $0x81]]
        %v647 = vstv %s645
        %v648 = vstv %s646
        %v649 = vsel %vm605, %v647, %v648
        %v651 = vlaneseq
        %v652 = vshrl.u32 %v651, 7
        %v653 = vsub.s32 0, %v652
        %v654 = vrot.slane %v644, %v653
        %v655 = vlaneseq
        %v656 = vshrl.u32 %v655, 7
        %v657 = vsub.s32 1, %v656
        %v658 = vrot.slane %v644, %v657
        %v661 = vmul.f32 %v642, %v654
        %v662 = vmul.f32 %v641, %v658
        %v663 = vmul.f32 %v661, %v649
        %v664 = vmul.f32 %v662, %v649
        %v665 = vadd.f32 %v663, 0.0
        %v666 = vadd.f32 %v664, 0.0
        %667 = vrot.lane.b32.xlu0 %v601, 49
        %v668 = vpop.permute.xlu0 %667
        %669 = vrot.lane.b32.xlu0 %v602, 49
        %v670 = vpop.permute.xlu0 %669
        %vm671 = vcmp.lt.s32.totalorder %v314, 49
        %v672 = vsel %vm671, %v668, %v670
        %v673 = vsel %vm671, %v670, %v668
        %s674 = scalar_lea.vmem [#allocation7], 2
        %v675 = vld [vmem:[%s674] ss:$8 sm:$0x3]
        %s676 = sld [smem:[#allocation6 + $0x2]]
        %s677 = sld [smem:[#allocation6 + $0x82]]
        %v678 = vstv %s676
        %v679 = vstv %s677
        %v680 = vsel %vm605, %v678, %v679
        %v682 = vlaneseq
        %v683 = vshrl.u32 %v682, 7
        %v684 = vsub.s32 0, %v683
        %v685 = vrot.slane %v675, %v684
        %v686 = vlaneseq
        %v687 = vshrl.u32 %v686, 7
        %v688 = vsub.s32 1, %v687
        %v689 = vrot.slane %v675, %v688
        %v692 = vmul.f32 %v673, %v685
        %v693 = vmul.f32 %v672, %v689
        %v694 = vmul.f32 %v692, %v680
        %v695 = vmul.f32 %v693, %v680
        %v696 = vadd.f32 %v694, 0.0
        %v697 = vadd.f32 %v695, 0.0
        %698 = vrot.lane.b32.xlu0 %v601, 48
        %v699 = vpop.permute.xlu0 %698
        %700 = vrot.lane.b32.xlu0 %v602, 48
        %v701 = vpop.permute.xlu0 %700
        %vm702 = vcmp.lt.s32.totalorder %v314, 48
        %v703 = vsel %vm702, %v699, %v701
        %v704 = vsel %vm702, %v701, %v699
        %s705 = scalar_lea.vmem [#allocation7], 3
        %v706 = vld [vmem:[%s705] ss:$8 sm:$0x3]
        %s707 = sld [smem:[#allocation6 + $0x3]]
        %s708 = sld [smem:[#allocation6 + $0x83]]
        %v709 = vstv %s707
        %v710 = vstv %s708
        %v711 = vsel %vm605, %v709, %v710
        %v713 = vlaneseq
        %v714 = vshrl.u32 %v713, 7
        %v715 = vsub.s32 0, %v714
        %v716 = vrot.slane %v706, %v715
        %v717 = vlaneseq
        %v718 = vshrl.u32 %v717, 7
        %v719 = vsub.s32 1, %v718
        %v720 = vrot.slane %v706, %v719
        %v723 = vmul.f32 %v704, %v716
        %v724 = vmul.f32 %v703, %v720
        %v725 = vmul.f32 %v723, %v711
        %v726 = vmul.f32 %v724, %v711
        %v727 = vadd.f32 %v725, 0.0
        %v728 = vadd.f32 %v726, 0.0
        %729 = vrot.lane.b32.xlu0 %v601, 47
        %v730 = vpop.permute.xlu0 %729
        %731 = vrot.lane.b32.xlu0 %v602, 47
        %v732 = vpop.permute.xlu0 %731
        %vm733 = vcmp.lt.s32.totalorder %v314, 47
        %v734 = vsel %vm733, %v730, %v732
        %v735 = vsel %vm733, %v732, %v730
        %s736 = scalar_lea.vmem [#allocation7], 4
        %v737 = vld [vmem:[%s736] ss:$8 sm:$0x3]
        %s738 = sld [smem:[#allocation6 + $0x4]]
        %s739 = sld [smem:[#allocation6 + $0x84]]
        %v740 = vstv %s738
        %v741 = vstv %s739
        %v742 = vsel %vm605, %v740, %v741
        %v744 = vlaneseq
        %v745 = vshrl.u32 %v744, 7
        %v746 = vsub.s32 0, %v745
        %v747 = vrot.slane %v737, %v746
        %v748 = vlaneseq
        %v749 = vshrl.u32 %v748, 7
        %v750 = vsub.s32 1, %v749
        %v751 = vrot.slane %v737, %v750
        %v754 = vmul.f32 %v735, %v747
        %v755 = vmul.f32 %v734, %v751
        %v756 = vmul.f32 %v754, %v742
        %v757 = vmul.f32 %v755, %v742
        %v758 = vadd.f32 %v634, %v756
        %v759 = vadd.f32 %v635, %v757
        %760 = vrot.lane.b32.xlu0 %v601, 46
        %v761 = vpop.permute.xlu0 %760
        %762 = vrot.lane.b32.xlu0 %v602, 46
        %v763 = vpop.permute.xlu0 %762
        %vm764 = vcmp.lt.s32.totalorder %v314, 46
        %v765 = vsel %vm764, %v761, %v763
        %v766 = vsel %vm764, %v763, %v761
        %s767 = scalar_lea.vmem [#allocation7], 5
        %v768 = vld [vmem:[%s767] ss:$8 sm:$0x3]
        %s769 = sld [smem:[#allocation6 + $0x5]]
        %s770 = sld [smem:[#allocation6 + $0x85]]
        %v771 = vstv %s769
        %v772 = vstv %s770
        %v773 = vsel %vm605, %v771, %v772
        %v775 = vlaneseq
        %v776 = vshrl.u32 %v775, 7
        %v777 = vsub.s32 0, %v776
        %v778 = vrot.slane %v768, %v777
        %v779 = vlaneseq
        %v780 = vshrl.u32 %v779, 7
        %v781 = vsub.s32 1, %v780
        %v782 = vrot.slane %v768, %v781
        %v785 = vmul.f32 %v766, %v778
        %v786 = vmul.f32 %v765, %v782
        %v787 = vmul.f32 %v785, %v773
        %v788 = vmul.f32 %v786, %v773
        %v789 = vadd.f32 %v665, %v787
        %v790 = vadd.f32 %v666, %v788
        %791 = vrot.lane.b32.xlu0 %v601, 45
        %v792 = vpop.permute.xlu0 %791
        %793 = vrot.lane.b32.xlu0 %v602, 45
        %v794 = vpop.permute.xlu0 %793
        %vm795 = vcmp.lt.s32.totalorder %v314, 45
        %v796 = vsel %vm795, %v792, %v794
        %v797 = vsel %vm795, %v794, %v792
        %s798 = scalar_lea.vmem [#allocation7], 6
        %v799 = vld [vmem:[%s798] ss:$8 sm:$0x3]
        %s800 = sld [smem:[#allocation6 + $0x6]]
        %s801 = sld [smem:[#allocation6 + $0x86]]
        %v802 = vstv %s800
        %v803 = vstv %s801
        %v804 = vsel %vm605, %v802, %v803
        %v806 = vlaneseq
        %v807 = vshrl.u32 %v806, 7
        %v808 = vsub.s32 0, %v807
        %v809 = vrot.slane %v799, %v808
        %v810 = vlaneseq
        %v811 = vshrl.u32 %v810, 7
        %v812 = vsub.s32 1, %v811
        %v813 = vrot.slane %v799, %v812
        %v816 = vmul.f32 %v797, %v809
        %v817 = vmul.f32 %v796, %v813
        %v818 = vmul.f32 %v816, %v804
        %v819 = vmul.f32 %v817, %v804
        %v820 = vadd.f32 %v696, %v818
        %v821 = vadd.f32 %v697, %v819
        %822 = vrot.lane.b32.xlu0 %v601, 35
        %v823 = vpop.permute.xlu0 %822
        %824 = vrot.lane.b32.xlu0 %v602, 35
        %v825 = vpop.permute.xlu0 %824
        %vm826 = vcmp.lt.s32.totalorder %v314, 35
        %v827 = vsel %vm826, %v823, %v825
        %v828 = vsel %vm826, %v825, %v823
        %s829 = scalar_lea.vmem [#allocation7], 7
        %v830 = vld [vmem:[%s829] ss:$8 sm:$0x3]
        %s831 = sld [smem:[#allocation6 + $0x7]]
        %s832 = sld [smem:[#allocation6 + $0x87]]
        %v833 = vstv %s831
        %v834 = vstv %s832
        %v835 = vsel %vm605, %v833, %v834
        %v837 = vlaneseq
        %v838 = vshrl.u32 %v837, 7
        %v839 = vsub.s32 0, %v838
        %v840 = vrot.slane %v830, %v839
        %v841 = vlaneseq
        %v842 = vshrl.u32 %v841, 7
        %v843 = vsub.s32 1, %v842
        %v844 = vrot.slane %v830, %v843
        %v847 = vmul.f32 %v828, %v840
        %v848 = vmul.f32 %v827, %v844
        %v849 = vmul.f32 %v847, %v835
        %v850 = vmul.f32 %v848, %v835
        %v851 = vadd.f32 %v727, %v849
        %v852 = vadd.f32 %v728, %v850
        %853 = vrot.lane.b32.xlu0 %v601, 34
        %v854 = vpop.permute.xlu0 %853
        %855 = vrot.lane.b32.xlu0 %v602, 34
        %v856 = vpop.permute.xlu0 %855
        %vm857 = vcmp.lt.s32.totalorder %v314, 34
        %v858 = vsel %vm857, %v854, %v856
        %v859 = vsel %vm857, %v856, %v854
        %s860 = scalar_lea.vmem [#allocation7], 16
        %v861 = vld [vmem:[%s860] ss:$8 sm:$0x3]
        %s862 = sld [smem:[#allocation6 + $0x8]]
        %s863 = sld [smem:[#allocation6 + $0x88]]
        %v864 = vstv %s862
        %v865 = vstv %s863
        %v866 = vsel %vm605, %v864, %v865
        %v868 = vlaneseq
        %v869 = vshrl.u32 %v868, 7
        %v870 = vsub.s32 0, %v869
        %v871 = vrot.slane %v861, %v870
        %v872 = vlaneseq
        %v873 = vshrl.u32 %v872, 7
        %v874 = vsub.s32 1, %v873
        %v875 = vrot.slane %v861, %v874
        %v878 = vmul.f32 %v859, %v871
        %v879 = vmul.f32 %v858, %v875
        %v880 = vmul.f32 %v878, %v866
        %v881 = vmul.f32 %v879, %v866
        %v882 = vadd.f32 %v758, %v880
        %v883 = vadd.f32 %v759, %v881
        %884 = vrot.lane.b32.xlu0 %v601, 33
        %v885 = vpop.permute.xlu0 %884
        %886 = vrot.lane.b32.xlu0 %v602, 33
        %v887 = vpop.permute.xlu0 %886
        %vm888 = vcmp.lt.s32.totalorder %v314, 33
        %v889 = vsel %vm888, %v885, %v887
        %v890 = vsel %vm888, %v887, %v885
        %s891 = scalar_lea.vmem [#allocation7], 17
        %v892 = vld [vmem:[%s891] ss:$8 sm:$0x3]
        %s893 = sld [smem:[#allocation6 + $0x9]]
        %s894 = sld [smem:[#allocation6 + $0x89]]
        %v895 = vstv %s893
        %v896 = vstv %s894
        %v897 = vsel %vm605, %v895, %v896
        %v899 = vlaneseq
        %v900 = vshrl.u32 %v899, 7
        %v901 = vsub.s32 0, %v900
        %v902 = vrot.slane %v892, %v901
        %v903 = vlaneseq
        %v904 = vshrl.u32 %v903, 7
        %v905 = vsub.s32 1, %v904
        %v906 = vrot.slane %v892, %v905
        %v909 = vmul.f32 %v890, %v902
        %v910 = vmul.f32 %v889, %v906
        %v911 = vmul.f32 %v909, %v897
        %v912 = vmul.f32 %v910, %v897
        %v913 = vadd.f32 %v789, %v911
        %v914 = vadd.f32 %v790, %v912
        %915 = vrot.lane.b32.xlu0 %v601, 32
        %v916 = vpop.permute.xlu0 %915
        %917 = vrot.lane.b32.xlu0 %v602, 32
        %v918 = vpop.permute.xlu0 %917
        %vm919 = vcmp.lt.s32.totalorder %v314, 32
        %v920 = vsel %vm919, %v916, %v918
        %v921 = vsel %vm919, %v918, %v916
        %s922 = scalar_lea.vmem [#allocation7], 18
        %v923 = vld [vmem:[%s922] ss:$8 sm:$0x3]
        %s924 = sld [smem:[#allocation6 + $0xa]]
        %s925 = sld [smem:[#allocation6 + $0x8a]]
        %v926 = vstv %s924
        %v927 = vstv %s925
        %v928 = vsel %vm605, %v926, %v927
        %v930 = vlaneseq
        %v931 = vshrl.u32 %v930, 7
        %v932 = vsub.s32 0, %v931
        %v933 = vrot.slane %v923, %v932
        %v934 = vlaneseq
        %v935 = vshrl.u32 %v934, 7
        %v936 = vsub.s32 1, %v935
        %v937 = vrot.slane %v923, %v936
        %v940 = vmul.f32 %v921, %v933
        %v941 = vmul.f32 %v920, %v937
        %v942 = vmul.f32 %v940, %v928
        %v943 = vmul.f32 %v941, %v928
        %v944 = vadd.f32 %v820, %v942
        %v945 = vadd.f32 %v821, %v943
        %946 = vrot.lane.b32.xlu0 %v601, 31
        %v947 = vpop.permute.xlu0 %946
        %948 = vrot.lane.b32.xlu0 %v602, 31
        %v949 = vpop.permute.xlu0 %948
        %vm950 = vcmp.lt.s32.totalorder %v314, 31
        %v951 = vsel %vm950, %v947, %v949
        %v952 = vsel %vm950, %v949, %v947
        %s953 = scalar_lea.vmem [#allocation7], 19
        %v954 = vld [vmem:[%s953] ss:$8 sm:$0x3]
        %s955 = sld [smem:[#allocation6 + $0xb]]
        %s956 = sld [smem:[#allocation6 + $0x8b]]
        %v957 = vstv %s955
        %v958 = vstv %s956
        %v959 = vsel %vm605, %v957, %v958
        %v961 = vlaneseq
        %v962 = vshrl.u32 %v961, 7
        %v963 = vsub.s32 0, %v962
        %v964 = vrot.slane %v954, %v963
        %v965 = vlaneseq
        %v966 = vshrl.u32 %v965, 7
        %v967 = vsub.s32 1, %v966
        %v968 = vrot.slane %v954, %v967
        %v971 = vmul.f32 %v952, %v964
        %v972 = vmul.f32 %v951, %v968
        %v973 = vmul.f32 %v971, %v959
        %v974 = vmul.f32 %v972, %v959
        %v975 = vadd.f32 %v851, %v973
        %v976 = vadd.f32 %v852, %v974
        %977 = vrot.lane.b32.xlu0 %v601, 30
        %v978 = vpop.permute.xlu0 %977
        %979 = vrot.lane.b32.xlu0 %v602, 30
        %v980 = vpop.permute.xlu0 %979
        %vm981 = vcmp.lt.s32.totalorder %v314, 30
        %v982 = vsel %vm981, %v978, %v980
        %v983 = vsel %vm981, %v980, %v978
        %s984 = scalar_lea.vmem [#allocation7], 20
        %v985 = vld [vmem:[%s984] ss:$8 sm:$0x3]
        %s986 = sld [smem:[#allocation6 + $0xc]]
        %s987 = sld [smem:[#allocation6 + $0x8c]]
        %v988 = vstv %s986
        %v989 = vstv %s987
        %v990 = vsel %vm605, %v988, %v989
        %v992 = vlaneseq
        %v993 = vshrl.u32 %v992, 7
        %v994 = vsub.s32 0, %v993
        %v995 = vrot.slane %v985, %v994
        %v996 = vlaneseq
        %v997 = vshrl.u32 %v996, 7
        %v998 = vsub.s32 1, %v997
        %v999 = vrot.slane %v985, %v998
        %v1002 = vmul.f32 %v983, %v995
        %v1003 = vmul.f32 %v982, %v999
        %v1004 = vmul.f32 %v1002, %v990
        %v1005 = vmul.f32 %v1003, %v990
        %v1006 = vadd.f32 %v882, %v1004
        %v1007 = vadd.f32 %v883, %v1005
        %1008 = vrot.lane.b32.xlu0 %v601, 29
        %v1009 = vpop.permute.xlu0 %1008
        %1010 = vrot.lane.b32.xlu0 %v602, 29
        %v1011 = vpop.permute.xlu0 %1010
        %vm1012 = vcmp.lt.s32.totalorder %v314, 29
        %v1013 = vsel %vm1012, %v1009, %v1011
        %v1014 = vsel %vm1012, %v1011, %v1009
        %s1015 = scalar_lea.vmem [#allocation7], 21
        %v1016 = vld [vmem:[%s1015] ss:$8 sm:$0x3]
        %s1017 = sld [smem:[#allocation6 + $0xd]]
        %s1018 = sld [smem:[#allocation6 + $0x8d]]
        %v1019 = vstv %s1017
        %v1020 = vstv %s1018
        %v1021 = vsel %vm605, %v1019, %v1020
        %v1023 = vlaneseq
        %v1024 = vshrl.u32 %v1023, 7
        %v1025 = vsub.s32 0, %v1024
        %v1026 = vrot.slane %v1016, %v1025
        %v1027 = vlaneseq
        %v1028 = vshrl.u32 %v1027, 7
        %v1029 = vsub.s32 1, %v1028
        %v1030 = vrot.slane %v1016, %v1029
        %v1033 = vmul.f32 %v1014, %v1026
        %v1034 = vmul.f32 %v1013, %v1030
        %v1035 = vmul.f32 %v1033, %v1021
        %v1036 = vmul.f32 %v1034, %v1021
        %v1037 = vadd.f32 %v913, %v1035
        %v1038 = vadd.f32 %v914, %v1036
        %1039 = vrot.lane.b32.xlu0 %v601, 19
        %v1040 = vpop.permute.xlu0 %1039
        %1041 = vrot.lane.b32.xlu0 %v602, 19
        %v1042 = vpop.permute.xlu0 %1041
        %vm1043 = vcmp.lt.s32.totalorder %v314, 19
        %v1044 = vsel %vm1043, %v1040, %v1042
        %v1045 = vsel %vm1043, %v1042, %v1040
        %s1046 = scalar_lea.vmem [#allocation7], 22
        %v1047 = vld [vmem:[%s1046] ss:$8 sm:$0x3]
        %s1048 = sld [smem:[#allocation6 + $0xe]]
        %s1049 = sld [smem:[#allocation6 + $0x8e]]
        %v1050 = vstv %s1048
        %v1051 = vstv %s1049
        %v1052 = vsel %vm605, %v1050, %v1051
        %v1054 = vlaneseq
        %v1055 = vshrl.u32 %v1054, 7
        %v1056 = vsub.s32 0, %v1055
        %v1057 = vrot.slane %v1047, %v1056
        %v1058 = vlaneseq
        %v1059 = vshrl.u32 %v1058, 7
        %v1060 = vsub.s32 1, %v1059
        %v1061 = vrot.slane %v1047, %v1060
        %v1064 = vmul.f32 %v1045, %v1057
        %v1065 = vmul.f32 %v1044, %v1061
        %v1066 = vmul.f32 %v1064, %v1052
        %v1067 = vmul.f32 %v1065, %v1052
        %v1068 = vadd.f32 %v944, %v1066
        %v1069 = vadd.f32 %v945, %v1067
        %1070 = vrot.lane.b32.xlu0 %v601, 18
        %v1071 = vpop.permute.xlu0 %1070
        %1072 = vrot.lane.b32.xlu0 %v602, 18
        %v1073 = vpop.permute.xlu0 %1072
        %vm1074 = vcmp.lt.s32.totalorder %v314, 18
        %v1075 = vsel %vm1074, %v1071, %v1073
        %v1076 = vsel %vm1074, %v1073, %v1071
        %s1077 = scalar_lea.vmem [#allocation7], 23
        %v1078 = vld [vmem:[%s1077] ss:$8 sm:$0x3]
        %s1079 = sld [smem:[#allocation6 + $0xf]]
        %s1080 = sld [smem:[#allocation6 + $0x8f]]
        %v1081 = vstv %s1079
        %v1082 = vstv %s1080
        %v1083 = vsel %vm605, %v1081, %v1082
        %v1085 = vlaneseq
        %v1086 = vshrl.u32 %v1085, 7
        %v1087 = vsub.s32 0, %v1086
        %v1088 = vrot.slane %v1078, %v1087
        %v1089 = vlaneseq
        %v1090 = vshrl.u32 %v1089, 7
        %v1091 = vsub.s32 1, %v1090
        %v1092 = vrot.slane %v1078, %v1091
        %v1095 = vmul.f32 %v1076, %v1088
        %v1096 = vmul.f32 %v1075, %v1092
        %v1097 = vmul.f32 %v1095, %v1083
        %v1098 = vmul.f32 %v1096, %v1083
        %v1099 = vadd.f32 %v975, %v1097
        %v1100 = vadd.f32 %v976, %v1098
        %1101 = vrot.lane.b32.xlu0 %v601, 17
        %v1102 = vpop.permute.xlu0 %1101
        %1103 = vrot.lane.b32.xlu0 %v602, 17
        %v1104 = vpop.permute.xlu0 %1103
        %vm1105 = vcmp.lt.s32.totalorder %v314, 17
        %v1106 = vsel %vm1105, %v1102, %v1104
        %v1107 = vsel %vm1105, %v1104, %v1102
        %s1108 = scalar_lea.vmem [#allocation7], 32
        %v1109 = vld [vmem:[%s1108] ss:$8 sm:$0x3]
        %s1110 = sld [smem:[#allocation6 + $0x10]]
        %s1111 = sld [smem:[#allocation6 + $0x90]]
        %v1112 = vstv %s1110
        %v1113 = vstv %s1111
        %v1114 = vsel %vm605, %v1112, %v1113
        %v1116 = vlaneseq
        %v1117 = vshrl.u32 %v1116, 7
        %v1118 = vsub.s32 0, %v1117
        %v1119 = vrot.slane %v1109, %v1118
        %v1120 = vlaneseq
        %v1121 = vshrl.u32 %v1120, 7
        %v1122 = vsub.s32 1, %v1121
        %v1123 = vrot.slane %v1109, %v1122
        %v1126 = vmul.f32 %v1107, %v1119
        %v1127 = vmul.f32 %v1106, %v1123
        %v1128 = vmul.f32 %v1126, %v1114
        %v1129 = vmul.f32 %v1127, %v1114
        %v1130 = vadd.f32 %v1006, %v1128
        %v1131 = vadd.f32 %v1007, %v1129
        %1132 = vrot.lane.b32.xlu0 %v601, 16
        %v1133 = vpop.permute.xlu0 %1132
        %1134 = vrot.lane.b32.xlu0 %v602, 16
        %v1135 = vpop.permute.xlu0 %1134
        %vm1136 = vcmp.lt.s32.totalorder %v314, 16
        %v1137 = vsel %vm1136, %v1133, %v1135
        %v1138 = vsel %vm1136, %v1135, %v1133
        %s1139 = scalar_lea.vmem [#allocation7], 33
        %v1140 = vld [vmem:[%s1139] ss:$8 sm:$0x3]
        %s1141 = sld [smem:[#allocation6 + $0x11]]
        %s1142 = sld [smem:[#allocation6 + $0x91]]
        %v1143 = vstv %s1141
        %v1144 = vstv %s1142
        %v1145 = vsel %vm605, %v1143, %v1144
        %v1147 = vlaneseq
        %v1148 = vshrl.u32 %v1147, 7
        %v1149 = vsub.s32 0, %v1148
        %v1150 = vrot.slane %v1140, %v1149
        %v1151 = vlaneseq
        %v1152 = vshrl.u32 %v1151, 7
        %v1153 = vsub.s32 1, %v1152
        %v1154 = vrot.slane %v1140, %v1153
        %v1157 = vmul.f32 %v1138, %v1150
        %v1158 = vmul.f32 %v1137, %v1154
        %v1159 = vmul.f32 %v1157, %v1145
        %v1160 = vmul.f32 %v1158, %v1145
        %v1161 = vadd.f32 %v1037, %v1159
        %v1162 = vadd.f32 %v1038, %v1160
        %1163 = vrot.lane.b32.xlu0 %v601, 15
        %v1164 = vpop.permute.xlu0 %1163
        %1165 = vrot.lane.b32.xlu0 %v602, 15
        %v1166 = vpop.permute.xlu0 %1165
        %vm1167 = vcmp.lt.s32.totalorder %v314, 15
        %v1168 = vsel %vm1167, %v1164, %v1166
        %v1169 = vsel %vm1167, %v1166, %v1164
        %s1170 = scalar_lea.vmem [#allocation7], 34
        %v1171 = vld [vmem:[%s1170] ss:$8 sm:$0x3]
        %s1172 = sld [smem:[#allocation6 + $0x12]]
        %s1173 = sld [smem:[#allocation6 + $0x92]]
        %v1174 = vstv %s1172
        %v1175 = vstv %s1173
        %v1176 = vsel %vm605, %v1174, %v1175
        %v1178 = vlaneseq
        %v1179 = vshrl.u32 %v1178, 7
        %v1180 = vsub.s32 0, %v1179
        %v1181 = vrot.slane %v1171, %v1180
        %v1182 = vlaneseq
        %v1183 = vshrl.u32 %v1182, 7
        %v1184 = vsub.s32 1, %v1183
        %v1185 = vrot.slane %v1171, %v1184
        %v1188 = vmul.f32 %v1169, %v1181
        %v1189 = vmul.f32 %v1168, %v1185
        %v1190 = vmul.f32 %v1188, %v1176
        %v1191 = vmul.f32 %v1189, %v1176
        %v1192 = vadd.f32 %v1068, %v1190
        %v1193 = vadd.f32 %v1069, %v1191
        %1194 = vrot.lane.b32.xlu0 %v601, 14
        %v1195 = vpop.permute.xlu0 %1194
        %1196 = vrot.lane.b32.xlu0 %v602, 14
        %v1197 = vpop.permute.xlu0 %1196
        %vm1198 = vcmp.lt.s32.totalorder %v314, 14
        %v1199 = vsel %vm1198, %v1195, %v1197
        %v1200 = vsel %vm1198, %v1197, %v1195
        %s1201 = scalar_lea.vmem [#allocation7], 35
        %v1202 = vld [vmem:[%s1201] ss:$8 sm:$0x3]
        %s1203 = sld [smem:[#allocation6 + $0x13]]
        %s1204 = sld [smem:[#allocation6 + $0x93]]
        %v1205 = vstv %s1203
        %v1206 = vstv %s1204
        %v1207 = vsel %vm605, %v1205, %v1206
        %v1209 = vlaneseq
        %v1210 = vshrl.u32 %v1209, 7
        %v1211 = vsub.s32 0, %v1210
        %v1212 = vrot.slane %v1202, %v1211
        %v1213 = vlaneseq
        %v1214 = vshrl.u32 %v1213, 7
        %v1215 = vsub.s32 1, %v1214
        %v1216 = vrot.slane %v1202, %v1215
        %v1219 = vmul.f32 %v1200, %v1212
        %v1220 = vmul.f32 %v1199, %v1216
        %v1221 = vmul.f32 %v1219, %v1207
        %v1222 = vmul.f32 %v1220, %v1207
        %v1223 = vadd.f32 %v1099, %v1221
        %v1224 = vadd.f32 %v1100, %v1222
        %1225 = vrot.lane.b32.xlu0 %v601, 13
        %v1226 = vpop.permute.xlu0 %1225
        %1227 = vrot.lane.b32.xlu0 %v602, 13
        %v1228 = vpop.permute.xlu0 %1227
        %vm1229 = vcmp.lt.s32.totalorder %v314, 13
        %v1230 = vsel %vm1229, %v1226, %v1228
        %v1231 = vsel %vm1229, %v1228, %v1226
        %s1232 = scalar_lea.vmem [#allocation7], 36
        %v1233 = vld [vmem:[%s1232] ss:$8 sm:$0x3]
        %s1234 = sld [smem:[#allocation6 + $0x14]]
        %s1235 = sld [smem:[#allocation6 + $0x94]]
        %v1236 = vstv %s1234
        %v1237 = vstv %s1235
        %v1238 = vsel %vm605, %v1236, %v1237
        %v1240 = vlaneseq
        %v1241 = vshrl.u32 %v1240, 7
        %v1242 = vsub.s32 0, %v1241
        %v1243 = vrot.slane %v1233, %v1242
        %v1244 = vlaneseq
        %v1245 = vshrl.u32 %v1244, 7
        %v1246 = vsub.s32 1, %v1245
        %v1247 = vrot.slane %v1233, %v1246
        %v1250 = vmul.f32 %v1231, %v1243
        %v1251 = vmul.f32 %v1230, %v1247
        %v1252 = vmul.f32 %v1250, %v1238
        %v1253 = vmul.f32 %v1251, %v1238
        %v1254 = vadd.f32 %v1130, %v1252
        %v1255 = vadd.f32 %v1131, %v1253
        %1256 = vrot.lane.b32.xlu0 %v601, 3
        %v1257 = vpop.permute.xlu0 %1256
        %1258 = vrot.lane.b32.xlu0 %v602, 3
        %v1259 = vpop.permute.xlu0 %1258
        %vm1260 = vcmp.lt.s32.totalorder %v314, 3
        %v1261 = vsel %vm1260, %v1257, %v1259
        %v1262 = vsel %vm1260, %v1259, %v1257
        %s1263 = scalar_lea.vmem [#allocation7], 37
        %v1264 = vld [vmem:[%s1263] ss:$8 sm:$0x3]
        %s1265 = sld [smem:[#allocation6 + $0x15]]
        %s1266 = sld [smem:[#allocation6 + $0x95]]
        %v1267 = vstv %s1265
        %v1268 = vstv %s1266
        %v1269 = vsel %vm605, %v1267, %v1268
        %v1271 = vlaneseq
        %v1272 = vshrl.u32 %v1271, 7
        %v1273 = vsub.s32 0, %v1272
        %v1274 = vrot.slane %v1264, %v1273
        %v1275 = vlaneseq
        %v1276 = vshrl.u32 %v1275, 7
        %v1277 = vsub.s32 1, %v1276
        %v1278 = vrot.slane %v1264, %v1277
        %v1281 = vmul.f32 %v1262, %v1274
        %v1282 = vmul.f32 %v1261, %v1278
        %v1283 = vmul.f32 %v1281, %v1269
        %v1284 = vmul.f32 %v1282, %v1269
        %v1285 = vadd.f32 %v1161, %v1283
        %v1286 = vadd.f32 %v1162, %v1284
        %1287 = vrot.lane.b32.xlu0 %v601, 2
        %v1288 = vpop.permute.xlu0 %1287
        %1289 = vrot.lane.b32.xlu0 %v602, 2
        %v1290 = vpop.permute.xlu0 %1289
        %vm1291 = vcmp.lt.s32.totalorder %v314, 2
        %v1292 = vsel %vm1291, %v1288, %v1290
        %v1293 = vsel %vm1291, %v1290, %v1288
        %s1294 = scalar_lea.vmem [#allocation7], 38
        %v1295 = vld [vmem:[%s1294] ss:$8 sm:$0x3]
        %s1296 = sld [smem:[#allocation6 + $0x16]]
        %s1297 = sld [smem:[#allocation6 + $0x96]]
        %v1298 = vstv %s1296
        %v1299 = vstv %s1297
        %v1300 = vsel %vm605, %v1298, %v1299
        %v1302 = vlaneseq
        %v1303 = vshrl.u32 %v1302, 7
        %v1304 = vsub.s32 0, %v1303
        %v1305 = vrot.slane %v1295, %v1304
        %v1306 = vlaneseq
        %v1307 = vshrl.u32 %v1306, 7
        %v1308 = vsub.s32 1, %v1307
        %v1309 = vrot.slane %v1295, %v1308
        %v1312 = vmul.f32 %v1293, %v1305
        %v1313 = vmul.f32 %v1292, %v1309
        %v1314 = vmul.f32 %v1312, %v1300
        %v1315 = vmul.f32 %v1313, %v1300
        %v1316 = vadd.f32 %v1192, %v1314
        %v1317 = vadd.f32 %v1193, %v1315
        %1318 = vrot.lane.b32.xlu0 %v601, 1
        %v1319 = vpop.permute.xlu0 %1318
        %1320 = vrot.lane.b32.xlu0 %v602, 1
        %v1321 = vpop.permute.xlu0 %1320
        %vm1322 = vcmp.lt.s32.totalorder %v314, 1
        %v1323 = vsel %vm1322, %v1319, %v1321
        %v1324 = vsel %vm1322, %v1321, %v1319
        %s1325 = scalar_lea.vmem [#allocation7], 39
        %v1326 = vld [vmem:[%s1325] ss:$8 sm:$0x3]
        %s1327 = sld [smem:[#allocation6 + $0x17]]
        %s1328 = sld [smem:[#allocation6 + $0x97]]
        %v1329 = vstv %s1327
        %v1330 = vstv %s1328
        %v1331 = vsel %vm605, %v1329, %v1330
        %v1333 = vlaneseq
        %v1334 = vshrl.u32 %v1333, 7
        %v1335 = vsub.s32 0, %v1334
        %v1336 = vrot.slane %v1326, %v1335
        %v1337 = vlaneseq
        %v1338 = vshrl.u32 %v1337, 7
        %v1339 = vsub.s32 1, %v1338
        %v1340 = vrot.slane %v1326, %v1339
        %v1343 = vmul.f32 %v1324, %v1336
        %v1344 = vmul.f32 %v1323, %v1340
        %v1345 = vmul.f32 %v1343, %v1331
        %v1346 = vmul.f32 %v1344, %v1331
        %v1347 = vadd.f32 %v1223, %v1345
        %v1348 = vadd.f32 %v1224, %v1346
        %s1349 = scalar_lea.vmem [#allocation7], 48
        %v1350 = vld [vmem:[%s1349] ss:$8 sm:$0x3]
        %s1351 = sld [smem:[#allocation6 + $0x18]]
        %s1352 = sld [smem:[#allocation6 + $0x98]]
        %v1353 = vstv %s1351
        %v1354 = vstv %s1352
        %v1355 = vsel %vm605, %v1353, %v1354
        %v1357 = vlaneseq
        %v1358 = vshrl.u32 %v1357, 7
        %v1359 = vsub.s32 0, %v1358
        %v1360 = vrot.slane %v1350, %v1359
        %v1361 = vlaneseq
        %v1362 = vshrl.u32 %v1361, 7
        %v1363 = vsub.s32 1, %v1362
        %v1364 = vrot.slane %v1350, %v1363
        %v1367 = vmul.f32 %v601, %v1360
        %v1368 = vmul.f32 %v602, %v1364
        %v1369 = vmul.f32 %v1367, %v1355
        %v1370 = vmul.f32 %v1368, %v1355
        %v1371 = vadd.f32 %v1254, %v1369
        %v1372 = vadd.f32 %v1255, %v1370
        %1373 = vrot.lane.b32.xlu0 %v601, 127
        %v1374 = vpop.permute.xlu0 %1373
        %1375 = vrot.lane.b32.xlu0 %v602, 127
        %v1376 = vpop.permute.xlu0 %1375
        %vm1377 = vcmp.lt.s32.totalorder %v314, 127
        %v1378 = vsel %vm1377, %v1374, %v1376
        %v1379 = vsel %vm1377, %v1376, %v1374
        %s1380 = scalar_lea.vmem [#allocation7], 49
        %v1381 = vld [vmem:[%s1380] ss:$8 sm:$0x3]
        %s1382 = sld [smem:[#allocation6 + $0x19]]
        %s1383 = sld [smem:[#allocation6 + $0x99]]
        %v1384 = vstv %s1382
        %v1385 = vstv %s1383
        %v1386 = vsel %vm605, %v1384, %v1385
        %v1388 = vlaneseq
        %v1389 = vshrl.u32 %v1388, 7
        %v1390 = vsub.s32 0, %v1389
        %v1391 = vrot.slane %v1381, %v1390
        %v1392 = vlaneseq
        %v1393 = vshrl.u32 %v1392, 7
        %v1394 = vsub.s32 1, %v1393
        %v1395 = vrot.slane %v1381, %v1394
        %v1398 = vmul.f32 %v1378, %v1391
        %v1399 = vmul.f32 %v1379, %v1395
        %v1400 = vmul.f32 %v1398, %v1386
        %v1401 = vmul.f32 %v1399, %v1386
        %v1402 = vadd.f32 %v1285, %v1400
        %v1403 = vadd.f32 %v1286, %v1401
        %1404 = vrot.lane.b32.xlu0 %v601, 126
        %v1405 = vpop.permute.xlu0 %1404
        %1406 = vrot.lane.b32.xlu0 %v602, 126
        %v1407 = vpop.permute.xlu0 %1406
        %vm1408 = vcmp.lt.s32.totalorder %v314, 126
        %v1409 = vsel %vm1408, %v1405, %v1407
        %v1410 = vsel %vm1408, %v1407, %v1405
        %s1411 = scalar_lea.vmem [#allocation7], 50
        %v1412 = vld [vmem:[%s1411] ss:$8 sm:$0x3]
        %s1413 = sld [smem:[#allocation6 + $0x1a]]
        %s1414 = sld [smem:[#allocation6 + $0x9a]]
        %v1415 = vstv %s1413
        %v1416 = vstv %s1414
        %v1417 = vsel %vm605, %v1415, %v1416
        %v1419 = vlaneseq
        %v1420 = vshrl.u32 %v1419, 7
        %v1421 = vsub.s32 0, %v1420
        %v1422 = vrot.slane %v1412, %v1421
        %v1423 = vlaneseq
        %v1424 = vshrl.u32 %v1423, 7
        %v1425 = vsub.s32 1, %v1424
        %v1426 = vrot.slane %v1412, %v1425
        %v1429 = vmul.f32 %v1409, %v1422
        %v1430 = vmul.f32 %v1410, %v1426
        %v1431 = vmul.f32 %v1429, %v1417
        %v1432 = vmul.f32 %v1430, %v1417
        %v1433 = vadd.f32 %v1316, %v1431
        %v1434 = vadd.f32 %v1317, %v1432
        %1435 = vrot.lane.b32.xlu0 %v601, 125
        %v1436 = vpop.permute.xlu0 %1435
        %1437 = vrot.lane.b32.xlu0 %v602, 125
        %v1438 = vpop.permute.xlu0 %1437
        %vm1439 = vcmp.lt.s32.totalorder %v314, 125
        %v1440 = vsel %vm1439, %v1436, %v1438
        %v1441 = vsel %vm1439, %v1438, %v1436
        %s1442 = scalar_lea.vmem [#allocation7], 51
        %v1443 = vld [vmem:[%s1442] ss:$8 sm:$0x3]
        %s1444 = sld [smem:[#allocation6 + $0x1b]]
        %s1445 = sld [smem:[#allocation6 + $0x9b]]
        %v1446 = vstv %s1444
        %v1447 = vstv %s1445
        %v1448 = vsel %vm605, %v1446, %v1447
        %v1450 = vlaneseq
        %v1451 = vshrl.u32 %v1450, 7
        %v1452 = vsub.s32 0, %v1451
        %v1453 = vrot.slane %v1443, %v1452
        %v1454 = vlaneseq
        %v1455 = vshrl.u32 %v1454, 7
        %v1456 = vsub.s32 1, %v1455
        %v1457 = vrot.slane %v1443, %v1456
        %v1460 = vmul.f32 %v1440, %v1453
        %v1461 = vmul.f32 %v1441, %v1457
        %v1462 = vmul.f32 %v1460, %v1448
        %v1463 = vmul.f32 %v1461, %v1448
        %v1464 = vadd.f32 %v1347, %v1462
        %v1465 = vadd.f32 %v1348, %v1463
        %1466 = vrot.lane.b32.xlu0 %v601, 115
        %v1467 = vpop.permute.xlu0 %1466
        %1468 = vrot.lane.b32.xlu0 %v602, 115
        %v1469 = vpop.permute.xlu0 %1468
        %vm1470 = vcmp.lt.s32.totalorder %v314, 115
        %v1471 = vsel %vm1470, %v1467, %v1469
        %v1472 = vsel %vm1470, %v1469, %v1467
        %s1473 = scalar_lea.vmem [#allocation7], 52
        %v1474 = vld [vmem:[%s1473] ss:$8 sm:$0x3]
        %s1475 = sld [smem:[#allocation6 + $0x1c]]
        %s1476 = sld [smem:[#allocation6 + $0x9c]]
        %v1477 = vstv %s1475
        %v1478 = vstv %s1476
        %v1479 = vsel %vm605, %v1477, %v1478
        %v1481 = vlaneseq
        %v1482 = vshrl.u32 %v1481, 7
        %v1483 = vsub.s32 0, %v1482
        %v1484 = vrot.slane %v1474, %v1483
        %v1485 = vlaneseq
        %v1486 = vshrl.u32 %v1485, 7
        %v1487 = vsub.s32 1, %v1486
        %v1488 = vrot.slane %v1474, %v1487
        %v1491 = vmul.f32 %v1471, %v1484
        %v1492 = vmul.f32 %v1472, %v1488
        %v1493 = vmul.f32 %v1491, %v1479
        %v1494 = vmul.f32 %v1492, %v1479
        %v1495 = vadd.f32 %v1371, %v1493
        %v1496 = vadd.f32 %v1372, %v1494
        %1497 = vrot.lane.b32.xlu0 %v601, 114
        %v1498 = vpop.permute.xlu0 %1497
        %1499 = vrot.lane.b32.xlu0 %v602, 114
        %v1500 = vpop.permute.xlu0 %1499
        %vm1501 = vcmp.lt.s32.totalorder %v314, 114
        %v1502 = vsel %vm1501, %v1498, %v1500
        %v1503 = vsel %vm1501, %v1500, %v1498
        %s1504 = scalar_lea.vmem [#allocation7], 53
        %v1505 = vld [vmem:[%s1504] ss:$8 sm:$0x3]
        %s1506 = sld [smem:[#allocation6 + $0x1d]]
        %s1507 = sld [smem:[#allocation6 + $0x9d]]
        %v1508 = vstv %s1506
        %v1509 = vstv %s1507
        %v1510 = vsel %vm605, %v1508, %v1509
        %v1512 = vlaneseq
        %v1513 = vshrl.u32 %v1512, 7
        %v1514 = vsub.s32 0, %v1513
        %v1515 = vrot.slane %v1505, %v1514
        %v1516 = vlaneseq
        %v1517 = vshrl.u32 %v1516, 7
        %v1518 = vsub.s32 1, %v1517
        %v1519 = vrot.slane %v1505, %v1518
        %v1522 = vmul.f32 %v1502, %v1515
        %v1523 = vmul.f32 %v1503, %v1519
        %v1524 = vmul.f32 %v1522, %v1510
        %v1525 = vmul.f32 %v1523, %v1510
        %v1526 = vadd.f32 %v1402, %v1524
        %v1527 = vadd.f32 %v1403, %v1525
        %1528 = vrot.lane.b32.xlu0 %v601, 113
        %v1529 = vpop.permute.xlu0 %1528
        %1530 = vrot.lane.b32.xlu0 %v602, 113
        %v1531 = vpop.permute.xlu0 %1530
        %vm1532 = vcmp.lt.s32.totalorder %v314, 113
        %v1533 = vsel %vm1532, %v1529, %v1531
        %v1534 = vsel %vm1532, %v1531, %v1529
        %s1535 = scalar_lea.vmem [#allocation7], 54
        %v1536 = vld [vmem:[%s1535] ss:$8 sm:$0x3]
        %s1537 = sld [smem:[#allocation6 + $0x1e]]
        %s1538 = sld [smem:[#allocation6 + $0x9e]]
        %v1539 = vstv %s1537
        %v1540 = vstv %s1538
        %v1541 = vsel %vm605, %v1539, %v1540
        %v1543 = vlaneseq
        %v1544 = vshrl.u32 %v1543, 7
        %v1545 = vsub.s32 0, %v1544
        %v1546 = vrot.slane %v1536, %v1545
        %v1547 = vlaneseq
        %v1548 = vshrl.u32 %v1547, 7
        %v1549 = vsub.s32 1, %v1548
        %v1550 = vrot.slane %v1536, %v1549
        %v1553 = vmul.f32 %v1533, %v1546
        %v1554 = vmul.f32 %v1534, %v1550
        %v1555 = vmul.f32 %v1553, %v1541
        %v1556 = vmul.f32 %v1554, %v1541
        %v1557 = vadd.f32 %v1433, %v1555
        %v1558 = vadd.f32 %v1434, %v1556
        %1559 = vrot.lane.b32.xlu0 %v601, 112
        %v1560 = vpop.permute.xlu0 %1559
        %1561 = vrot.lane.b32.xlu0 %v602, 112
        %v1562 = vpop.permute.xlu0 %1561
        %vm1563 = vcmp.lt.s32.totalorder %v314, 112
        %v1564 = vsel %vm1563, %v1560, %v1562
        %v1565 = vsel %vm1563, %v1562, %v1560
        %s1566 = scalar_lea.vmem [#allocation7], 55
        %v1567 = vld [vmem:[%s1566] ss:$8 sm:$0x3]
        %s1568 = sld [smem:[#allocation6 + $0x1f]]
        %s1569 = sld [smem:[#allocation6 + $0x9f]]
        %v1570 = vstv %s1568
        %v1571 = vstv %s1569
        %v1572 = vsel %vm605, %v1570, %v1571
        %v1574 = vlaneseq
        %v1575 = vshrl.u32 %v1574, 7
        %v1576 = vsub.s32 0, %v1575
        %v1577 = vrot.slane %v1567, %v1576
        %v1578 = vlaneseq
        %v1579 = vshrl.u32 %v1578, 7
        %v1580 = vsub.s32 1, %v1579
        %v1581 = vrot.slane %v1567, %v1580
        %v1584 = vmul.f32 %v1564, %v1577
        %v1585 = vmul.f32 %v1565, %v1581
        %v1586 = vmul.f32 %v1584, %v1572
        %v1587 = vmul.f32 %v1585, %v1572
        %v1588 = vadd.f32 %v1464, %v1586
        %v1589 = vadd.f32 %v1465, %v1587
        %1590 = vrot.lane.b32.xlu0 %v601, 111
        %v1591 = vpop.permute.xlu0 %1590
        %1592 = vrot.lane.b32.xlu0 %v602, 111
        %v1593 = vpop.permute.xlu0 %1592
        %vm1594 = vcmp.lt.s32.totalorder %v314, 111
        %v1595 = vsel %vm1594, %v1591, %v1593
        %v1596 = vsel %vm1594, %v1593, %v1591
        %s1597 = scalar_lea.vmem [#allocation7], 64
        %v1598 = vld [vmem:[%s1597] ss:$8 sm:$0x3]
        %s1599 = sld [smem:[#allocation6 + $0x20]]
        %s1600 = sld [smem:[#allocation6 + $0xa0]]
        %v1601 = vstv %s1599
        %v1602 = vstv %s1600
        %v1603 = vsel %vm605, %v1601, %v1602
        %v1605 = vlaneseq
        %v1606 = vshrl.u32 %v1605, 7
        %v1607 = vsub.s32 0, %v1606
        %v1608 = vrot.slane %v1598, %v1607
        %v1609 = vlaneseq
        %v1610 = vshrl.u32 %v1609, 7
        %v1611 = vsub.s32 1, %v1610
        %v1612 = vrot.slane %v1598, %v1611
        %v1615 = vmul.f32 %v1595, %v1608
        %v1616 = vmul.f32 %v1596, %v1612
        %v1617 = vmul.f32 %v1615, %v1603
        %v1618 = vmul.f32 %v1616, %v1603
        %v1619 = vadd.f32 %v1495, %v1617
        %v1620 = vadd.f32 %v1496, %v1618
        %1621 = vrot.lane.b32.xlu0 %v601, 110
        %v1622 = vpop.permute.xlu0 %1621
        %1623 = vrot.lane.b32.xlu0 %v602, 110
        %v1624 = vpop.permute.xlu0 %1623
        %vm1625 = vcmp.lt.s32.totalorder %v314, 110
        %v1626 = vsel %vm1625, %v1622, %v1624
        %v1627 = vsel %vm1625, %v1624, %v1622
        %s1628 = scalar_lea.vmem [#allocation7], 65
        %v1629 = vld [vmem:[%s1628] ss:$8 sm:$0x3]
        %s1630 = sld [smem:[#allocation6 + $0x21]]
        %s1631 = sld [smem:[#allocation6 + $0xa1]]
        %v1632 = vstv %s1630
        %v1633 = vstv %s1631
        %v1634 = vsel %vm605, %v1632, %v1633
        %v1636 = vlaneseq
        %v1637 = vshrl.u32 %v1636, 7
        %v1638 = vsub.s32 0, %v1637
        %v1639 = vrot.slane %v1629, %v1638
        %v1640 = vlaneseq
        %v1641 = vshrl.u32 %v1640, 7
        %v1642 = vsub.s32 1, %v1641
        %v1643 = vrot.slane %v1629, %v1642
        %v1646 = vmul.f32 %v1626, %v1639
        %v1647 = vmul.f32 %v1627, %v1643
        %v1648 = vmul.f32 %v1646, %v1634
        %v1649 = vmul.f32 %v1647, %v1634
        %v1650 = vadd.f32 %v1526, %v1648
        %v1651 = vadd.f32 %v1527, %v1649
        %1652 = vrot.lane.b32.xlu0 %v601, 109
        %v1653 = vpop.permute.xlu0 %1652
        %1654 = vrot.lane.b32.xlu0 %v602, 109
        %v1655 = vpop.permute.xlu0 %1654
        %vm1656 = vcmp.lt.s32.totalorder %v314, 109
        %v1657 = vsel %vm1656, %v1653, %v1655
        %v1658 = vsel %vm1656, %v1655, %v1653
        %s1659 = scalar_lea.vmem [#allocation7], 66
        %v1660 = vld [vmem:[%s1659] ss:$8 sm:$0x3]
        %s1661 = sld [smem:[#allocation6 + $0x22]]
        %s1662 = sld [smem:[#allocation6 + $0xa2]]
        %v1663 = vstv %s1661
        %v1664 = vstv %s1662
        %v1665 = vsel %vm605, %v1663, %v1664
        %v1667 = vlaneseq
        %v1668 = vshrl.u32 %v1667, 7
        %v1669 = vsub.s32 0, %v1668
        %v1670 = vrot.slane %v1660, %v1669
        %v1671 = vlaneseq
        %v1672 = vshrl.u32 %v1671, 7
        %v1673 = vsub.s32 1, %v1672
        %v1674 = vrot.slane %v1660, %v1673
        %v1677 = vmul.f32 %v1657, %v1670
        %v1678 = vmul.f32 %v1658, %v1674
        %v1679 = vmul.f32 %v1677, %v1665
        %v1680 = vmul.f32 %v1678, %v1665
        %v1681 = vadd.f32 %v1557, %v1679
        %v1682 = vadd.f32 %v1558, %v1680
        %1683 = vrot.lane.b32.xlu0 %v601, 99
        %v1684 = vpop.permute.xlu0 %1683
        %1685 = vrot.lane.b32.xlu0 %v602, 99
        %v1686 = vpop.permute.xlu0 %1685
        %vm1687 = vcmp.lt.s32.totalorder %v314, 99
        %v1688 = vsel %vm1687, %v1684, %v1686
        %v1689 = vsel %vm1687, %v1686, %v1684
        %s1690 = scalar_lea.vmem [#allocation7], 67
        %v1691 = vld [vmem:[%s1690] ss:$8 sm:$0x3]
        %s1692 = sld [smem:[#allocation6 + $0x23]]
        %s1693 = sld [smem:[#allocation6 + $0xa3]]
        %v1694 = vstv %s1692
        %v1695 = vstv %s1693
        %v1696 = vsel %vm605, %v1694, %v1695
        %v1698 = vlaneseq
        %v1699 = vshrl.u32 %v1698, 7
        %v1700 = vsub.s32 0, %v1699
        %v1701 = vrot.slane %v1691, %v1700
        %v1702 = vlaneseq
        %v1703 = vshrl.u32 %v1702, 7
        %v1704 = vsub.s32 1, %v1703
        %v1705 = vrot.slane %v1691, %v1704
        %v1708 = vmul.f32 %v1688, %v1701
        %v1709 = vmul.f32 %v1689, %v1705
        %v1710 = vmul.f32 %v1708, %v1696
        %v1711 = vmul.f32 %v1709, %v1696
        %v1712 = vadd.f32 %v1588, %v1710
        %v1713 = vadd.f32 %v1589, %v1711
        %1714 = vrot.lane.b32.xlu0 %v601, 98
        %v1715 = vpop.permute.xlu0 %1714
        %1716 = vrot.lane.b32.xlu0 %v602, 98
        %v1717 = vpop.permute.xlu0 %1716
        %vm1718 = vcmp.lt.s32.totalorder %v314, 98
        %v1719 = vsel %vm1718, %v1715, %v1717
        %v1720 = vsel %vm1718, %v1717, %v1715
        %s1721 = scalar_lea.vmem [#allocation7], 68
        %v1722 = vld [vmem:[%s1721] ss:$8 sm:$0x3]
        %s1723 = sld [smem:[#allocation6 + $0x24]]
        %s1724 = sld [smem:[#allocation6 + $0xa4]]
        %v1725 = vstv %s1723
        %v1726 = vstv %s1724
        %v1727 = vsel %vm605, %v1725, %v1726
        %v1729 = vlaneseq
        %v1730 = vshrl.u32 %v1729, 7
        %v1731 = vsub.s32 0, %v1730
        %v1732 = vrot.slane %v1722, %v1731
        %v1733 = vlaneseq
        %v1734 = vshrl.u32 %v1733, 7
        %v1735 = vsub.s32 1, %v1734
        %v1736 = vrot.slane %v1722, %v1735
        %v1739 = vmul.f32 %v1719, %v1732
        %v1740 = vmul.f32 %v1720, %v1736
        %v1741 = vmul.f32 %v1739, %v1727
        %v1742 = vmul.f32 %v1740, %v1727
        %v1743 = vadd.f32 %v1619, %v1741
        %v1744 = vadd.f32 %v1620, %v1742
        %1745 = vrot.lane.b32.xlu0 %v601, 97
        %v1746 = vpop.permute.xlu0 %1745
        %1747 = vrot.lane.b32.xlu0 %v602, 97
        %v1748 = vpop.permute.xlu0 %1747
        %vm1749 = vcmp.lt.s32.totalorder %v314, 97
        %v1750 = vsel %vm1749, %v1746, %v1748
        %v1751 = vsel %vm1749, %v1748, %v1746
        %s1752 = scalar_lea.vmem [#allocation7], 69
        %v1753 = vld [vmem:[%s1752] ss:$8 sm:$0x3]
        %s1754 = sld [smem:[#allocation6 + $0x25]]
        %s1755 = sld [smem:[#allocation6 + $0xa5]]
        %v1756 = vstv %s1754
        %v1757 = vstv %s1755
        %v1758 = vsel %vm605, %v1756, %v1757
        %v1760 = vlaneseq
        %v1761 = vshrl.u32 %v1760, 7
        %v1762 = vsub.s32 0, %v1761
        %v1763 = vrot.slane %v1753, %v1762
        %v1764 = vlaneseq
        %v1765 = vshrl.u32 %v1764, 7
        %v1766 = vsub.s32 1, %v1765
        %v1767 = vrot.slane %v1753, %v1766
        %v1770 = vmul.f32 %v1750, %v1763
        %v1771 = vmul.f32 %v1751, %v1767
        %v1772 = vmul.f32 %v1770, %v1758
        %v1773 = vmul.f32 %v1771, %v1758
        %v1774 = vadd.f32 %v1650, %v1772
        %v1775 = vadd.f32 %v1651, %v1773
        %1776 = vrot.lane.b32.xlu0 %v601, 96
        %v1777 = vpop.permute.xlu0 %1776
        %1778 = vrot.lane.b32.xlu0 %v602, 96
        %v1779 = vpop.permute.xlu0 %1778
        %vm1780 = vcmp.lt.s32.totalorder %v314, 96
        %v1781 = vsel %vm1780, %v1777, %v1779
        %v1782 = vsel %vm1780, %v1779, %v1777
        %s1783 = scalar_lea.vmem [#allocation7], 70
        %v1784 = vld [vmem:[%s1783] ss:$8 sm:$0x3]
        %s1785 = sld [smem:[#allocation6 + $0x26]]
        %s1786 = sld [smem:[#allocation6 + $0xa6]]
        %v1787 = vstv %s1785
        %v1788 = vstv %s1786
        %v1789 = vsel %vm605, %v1787, %v1788
        %v1791 = vlaneseq
        %v1792 = vshrl.u32 %v1791, 7
        %v1793 = vsub.s32 0, %v1792
        %v1794 = vrot.slane %v1784, %v1793
        %v1795 = vlaneseq
        %v1796 = vshrl.u32 %v1795, 7
        %v1797 = vsub.s32 1, %v1796
        %v1798 = vrot.slane %v1784, %v1797
        %v1801 = vmul.f32 %v1781, %v1794
        %v1802 = vmul.f32 %v1782, %v1798
        %v1803 = vmul.f32 %v1801, %v1789
        %v1804 = vmul.f32 %v1802, %v1789
        %v1805 = vadd.f32 %v1681, %v1803
        %v1806 = vadd.f32 %v1682, %v1804
        %1807 = vrot.lane.b32.xlu0 %v601, 95
        %v1808 = vpop.permute.xlu0 %1807
        %1809 = vrot.lane.b32.xlu0 %v602, 95
        %v1810 = vpop.permute.xlu0 %1809
        %vm1811 = vcmp.lt.s32.totalorder %v314, 95
        %v1812 = vsel %vm1811, %v1808, %v1810
        %v1813 = vsel %vm1811, %v1810, %v1808
        %s1814 = scalar_lea.vmem [#allocation7], 71
        %v1815 = vld [vmem:[%s1814] ss:$8 sm:$0x3]
        %s1816 = sld [smem:[#allocation6 + $0x27]]
        %s1817 = sld [smem:[#allocation6 + $0xa7]]
        %v1818 = vstv %s1816
        %v1819 = vstv %s1817
        %v1820 = vsel %vm605, %v1818, %v1819
        %v1822 = vlaneseq
        %v1823 = vshrl.u32 %v1822, 7
        %v1824 = vsub.s32 0, %v1823
        %v1825 = vrot.slane %v1815, %v1824
        %v1826 = vlaneseq
        %v1827 = vshrl.u32 %v1826, 7
        %v1828 = vsub.s32 1, %v1827
        %v1829 = vrot.slane %v1815, %v1828
        %v1832 = vmul.f32 %v1812, %v1825
        %v1833 = vmul.f32 %v1813, %v1829
        %v1834 = vmul.f32 %v1832, %v1820
        %v1835 = vmul.f32 %v1833, %v1820
        %v1836 = vadd.f32 %v1712, %v1834
        %v1837 = vadd.f32 %v1713, %v1835
        %1838 = vrot.lane.b32.xlu0 %v601, 94
        %v1839 = vpop.permute.xlu0 %1838
        %1840 = vrot.lane.b32.xlu0 %v602, 94
        %v1841 = vpop.permute.xlu0 %1840
        %vm1842 = vcmp.lt.s32.totalorder %v314, 94
        %v1843 = vsel %vm1842, %v1839, %v1841
        %v1844 = vsel %vm1842, %v1841, %v1839
        %s1845 = scalar_lea.vmem [#allocation7], 80
        %v1846 = vld [vmem:[%s1845] ss:$8 sm:$0x3]
        %s1847 = sld [smem:[#allocation6 + $0x28]]
        %s1848 = sld [smem:[#allocation6 + $0xa8]]
        %v1849 = vstv %s1847
        %v1850 = vstv %s1848
        %v1851 = vsel %vm605, %v1849, %v1850
        %v1853 = vlaneseq
        %v1854 = vshrl.u32 %v1853, 7
        %v1855 = vsub.s32 0, %v1854
        %v1856 = vrot.slane %v1846, %v1855
        %v1857 = vlaneseq
        %v1858 = vshrl.u32 %v1857, 7
        %v1859 = vsub.s32 1, %v1858
        %v1860 = vrot.slane %v1846, %v1859
        %v1863 = vmul.f32 %v1843, %v1856
        %v1864 = vmul.f32 %v1844, %v1860
        %v1865 = vmul.f32 %v1863, %v1851
        %v1866 = vmul.f32 %v1864, %v1851
        %v1867 = vadd.f32 %v1743, %v1865
        %v1868 = vadd.f32 %v1744, %v1866
        %1869 = vrot.lane.b32.xlu0 %v601, 93
        %v1870 = vpop.permute.xlu0 %1869
        %1871 = vrot.lane.b32.xlu0 %v602, 93
        %v1872 = vpop.permute.xlu0 %1871
        %vm1873 = vcmp.lt.s32.totalorder %v314, 93
        %v1874 = vsel %vm1873, %v1870, %v1872
        %v1875 = vsel %vm1873, %v1872, %v1870
        %s1876 = scalar_lea.vmem [#allocation7], 81
        %v1877 = vld [vmem:[%s1876] ss:$8 sm:$0x3]
        %s1878 = sld [smem:[#allocation6 + $0x29]]
        %s1879 = sld [smem:[#allocation6 + $0xa9]]
        %v1880 = vstv %s1878
        %v1881 = vstv %s1879
        %v1882 = vsel %vm605, %v1880, %v1881
        %v1884 = vlaneseq
        %v1885 = vshrl.u32 %v1884, 7
        %v1886 = vsub.s32 0, %v1885
        %v1887 = vrot.slane %v1877, %v1886
        %v1888 = vlaneseq
        %v1889 = vshrl.u32 %v1888, 7
        %v1890 = vsub.s32 1, %v1889
        %v1891 = vrot.slane %v1877, %v1890
        %v1894 = vmul.f32 %v1874, %v1887
        %v1895 = vmul.f32 %v1875, %v1891
        %v1896 = vmul.f32 %v1894, %v1882
        %v1897 = vmul.f32 %v1895, %v1882
        %v1898 = vadd.f32 %v1774, %v1896
        %v1899 = vadd.f32 %v1775, %v1897
        %1900 = vrot.lane.b32.xlu0 %v601, 83
        %v1901 = vpop.permute.xlu0 %1900
        %1902 = vrot.lane.b32.xlu0 %v602, 83
        %v1903 = vpop.permute.xlu0 %1902
        %vm1904 = vcmp.lt.s32.totalorder %v314, 83
        %v1905 = vsel %vm1904, %v1901, %v1903
        %v1906 = vsel %vm1904, %v1903, %v1901
        %s1907 = scalar_lea.vmem [#allocation7], 82
        %v1908 = vld [vmem:[%s1907] ss:$8 sm:$0x3]
        %s1909 = sld [smem:[#allocation6 + $0x2a]]
        %s1910 = sld [smem:[#allocation6 + $0xaa]]
        %v1911 = vstv %s1909
        %v1912 = vstv %s1910
        %v1913 = vsel %vm605, %v1911, %v1912
        %v1915 = vlaneseq
        %v1916 = vshrl.u32 %v1915, 7
        %v1917 = vsub.s32 0, %v1916
        %v1918 = vrot.slane %v1908, %v1917
        %v1919 = vlaneseq
        %v1920 = vshrl.u32 %v1919, 7
        %v1921 = vsub.s32 1, %v1920
        %v1922 = vrot.slane %v1908, %v1921
        %v1925 = vmul.f32 %v1905, %v1918
        %v1926 = vmul.f32 %v1906, %v1922
        %v1927 = vmul.f32 %v1925, %v1913
        %v1928 = vmul.f32 %v1926, %v1913
        %v1929 = vadd.f32 %v1805, %v1927
        %v1930 = vadd.f32 %v1806, %v1928
        %1931 = vrot.lane.b32.xlu0 %v601, 82
        %v1932 = vpop.permute.xlu0 %1931
        %1933 = vrot.lane.b32.xlu0 %v602, 82
        %v1934 = vpop.permute.xlu0 %1933
        %vm1935 = vcmp.lt.s32.totalorder %v314, 82
        %v1936 = vsel %vm1935, %v1932, %v1934
        %v1937 = vsel %vm1935, %v1934, %v1932
        %s1938 = scalar_lea.vmem [#allocation7], 83
        %v1939 = vld [vmem:[%s1938] ss:$8 sm:$0x3]
        %s1940 = sld [smem:[#allocation6 + $0x2b]]
        %s1941 = sld [smem:[#allocation6 + $0xab]]
        %v1942 = vstv %s1940
        %v1943 = vstv %s1941
        %v1944 = vsel %vm605, %v1942, %v1943
        %v1946 = vlaneseq
        %v1947 = vshrl.u32 %v1946, 7
        %v1948 = vsub.s32 0, %v1947
        %v1949 = vrot.slane %v1939, %v1948
        %v1950 = vlaneseq
        %v1951 = vshrl.u32 %v1950, 7
        %v1952 = vsub.s32 1, %v1951
        %v1953 = vrot.slane %v1939, %v1952
        %v1956 = vmul.f32 %v1936, %v1949
        %v1957 = vmul.f32 %v1937, %v1953
        %v1958 = vmul.f32 %v1956, %v1944
        %v1959 = vmul.f32 %v1957, %v1944
        %v1960 = vadd.f32 %v1836, %v1958
        %v1961 = vadd.f32 %v1837, %v1959
        %1962 = vrot.lane.b32.xlu0 %v601, 81
        %v1963 = vpop.permute.xlu0 %1962
        %1964 = vrot.lane.b32.xlu0 %v602, 81
        %v1965 = vpop.permute.xlu0 %1964
        %vm1966 = vcmp.lt.s32.totalorder %v314, 81
        %v1967 = vsel %vm1966, %v1963, %v1965
        %v1968 = vsel %vm1966, %v1965, %v1963
        %s1969 = scalar_lea.vmem [#allocation7], 84
        %v1970 = vld [vmem:[%s1969] ss:$8 sm:$0x3]
        %s1971 = sld [smem:[#allocation6 + $0x2c]]
        %s1972 = sld [smem:[#allocation6 + $0xac]]
        %v1973 = vstv %s1971
        %v1974 = vstv %s1972
        %v1975 = vsel %vm605, %v1973, %v1974
        %v1977 = vlaneseq
        %v1978 = vshrl.u32 %v1977, 7
        %v1979 = vsub.s32 0, %v1978
        %v1980 = vrot.slane %v1970, %v1979
        %v1981 = vlaneseq
        %v1982 = vshrl.u32 %v1981, 7
        %v1983 = vsub.s32 1, %v1982
        %v1984 = vrot.slane %v1970, %v1983
        %v1987 = vmul.f32 %v1967, %v1980
        %v1988 = vmul.f32 %v1968, %v1984
        %v1989 = vmul.f32 %v1987, %v1975
        %v1990 = vmul.f32 %v1988, %v1975
        %v1991 = vadd.f32 %v1867, %v1989
        %v1992 = vadd.f32 %v1868, %v1990
        %1993 = vrot.lane.b32.xlu0 %v601, 80
        %v1994 = vpop.permute.xlu0 %1993
        %1995 = vrot.lane.b32.xlu0 %v602, 80
        %v1996 = vpop.permute.xlu0 %1995
        %vm1997 = vcmp.lt.s32.totalorder %v314, 80
        %v1998 = vsel %vm1997, %v1994, %v1996
        %v1999 = vsel %vm1997, %v1996, %v1994
        %s2000 = scalar_lea.vmem [#allocation7], 85
        %v2001 = vld [vmem:[%s2000] ss:$8 sm:$0x3]
        %s2002 = sld [smem:[#allocation6 + $0x2d]]
        %s2003 = sld [smem:[#allocation6 + $0xad]]
        %v2004 = vstv %s2002
        %v2005 = vstv %s2003
        %v2006 = vsel %vm605, %v2004, %v2005
        %v2008 = vlaneseq
        %v2009 = vshrl.u32 %v2008, 7
        %v2010 = vsub.s32 0, %v2009
        %v2011 = vrot.slane %v2001, %v2010
        %v2012 = vlaneseq
        %v2013 = vshrl.u32 %v2012, 7
        %v2014 = vsub.s32 1, %v2013
        %v2015 = vrot.slane %v2001, %v2014
        %v2018 = vmul.f32 %v1998, %v2011
        %v2019 = vmul.f32 %v1999, %v2015
        %v2020 = vmul.f32 %v2018, %v2006
        %v2021 = vmul.f32 %v2019, %v2006
        %v2022 = vadd.f32 %v1898, %v2020
        %v2023 = vadd.f32 %v1899, %v2021
        %2024 = vrot.lane.b32.xlu0 %v601, 79
        %v2025 = vpop.permute.xlu0 %2024
        %2026 = vrot.lane.b32.xlu0 %v602, 79
        %v2027 = vpop.permute.xlu0 %2026
        %vm2028 = vcmp.lt.s32.totalorder %v314, 79
        %v2029 = vsel %vm2028, %v2025, %v2027
        %v2030 = vsel %vm2028, %v2027, %v2025
        %s2031 = scalar_lea.vmem [#allocation7], 86
        %v2032 = vld [vmem:[%s2031] ss:$8 sm:$0x3]
        %s2033 = sld [smem:[#allocation6 + $0x2e]]
        %s2034 = sld [smem:[#allocation6 + $0xae]]
        %v2035 = vstv %s2033
        %v2036 = vstv %s2034
        %v2037 = vsel %vm605, %v2035, %v2036
        %v2039 = vlaneseq
        %v2040 = vshrl.u32 %v2039, 7
        %v2041 = vsub.s32 0, %v2040
        %v2042 = vrot.slane %v2032, %v2041
        %v2043 = vlaneseq
        %v2044 = vshrl.u32 %v2043, 7
        %v2045 = vsub.s32 1, %v2044
        %v2046 = vrot.slane %v2032, %v2045
        %v2049 = vmul.f32 %v2029, %v2042
        %v2050 = vmul.f32 %v2030, %v2046
        %v2051 = vmul.f32 %v2049, %v2037
        %v2052 = vmul.f32 %v2050, %v2037
        %v2053 = vadd.f32 %v1929, %v2051
        %v2054 = vadd.f32 %v1930, %v2052
        %2055 = vrot.lane.b32.xlu0 %v601, 78
        %v2056 = vpop.permute.xlu0 %2055
        %2057 = vrot.lane.b32.xlu0 %v602, 78
        %v2058 = vpop.permute.xlu0 %2057
        %vm2059 = vcmp.lt.s32.totalorder %v314, 78
        %v2060 = vsel %vm2059, %v2056, %v2058
        %v2061 = vsel %vm2059, %v2058, %v2056
        %s2062 = scalar_lea.vmem [#allocation7], 87
        %v2063 = vld [vmem:[%s2062] ss:$8 sm:$0x3]
        %s2064 = sld [smem:[#allocation6 + $0x2f]]
        %s2065 = sld [smem:[#allocation6 + $0xaf]]
        %v2066 = vstv %s2064
        %v2067 = vstv %s2065
        %v2068 = vsel %vm605, %v2066, %v2067
        %v2070 = vlaneseq
        %v2071 = vshrl.u32 %v2070, 7
        %v2072 = vsub.s32 0, %v2071
        %v2073 = vrot.slane %v2063, %v2072
        %v2074 = vlaneseq
        %v2075 = vshrl.u32 %v2074, 7
        %v2076 = vsub.s32 1, %v2075
        %v2077 = vrot.slane %v2063, %v2076
        %v2080 = vmul.f32 %v2060, %v2073
        %v2081 = vmul.f32 %v2061, %v2077
        %v2082 = vmul.f32 %v2080, %v2068
        %v2083 = vmul.f32 %v2081, %v2068
        %v2084 = vadd.f32 %v1960, %v2082
        %v2085 = vadd.f32 %v1961, %v2083
        %2086 = vrot.lane.b32.xlu0 %v601, 77
        %v2087 = vpop.permute.xlu0 %2086
        %2088 = vrot.lane.b32.xlu0 %v602, 77
        %v2089 = vpop.permute.xlu0 %2088
        %vm2090 = vcmp.lt.s32.totalorder %v314, 77
        %v2091 = vsel %vm2090, %v2087, %v2089
        %v2092 = vsel %vm2090, %v2089, %v2087
        %s2093 = scalar_lea.vmem [#allocation7], 96
        %v2094 = vld [vmem:[%s2093] ss:$8 sm:$0x3]
        %s2095 = sld [smem:[#allocation6 + $0x30]]
        %s2096 = sld [smem:[#allocation6 + $0xb0]]
        %v2097 = vstv %s2095
        %v2098 = vstv %s2096
        %v2099 = vsel %vm605, %v2097, %v2098
        %v2101 = vlaneseq
        %v2102 = vshrl.u32 %v2101, 7
        %v2103 = vsub.s32 0, %v2102
        %v2104 = vrot.slane %v2094, %v2103
        %v2105 = vlaneseq
        %v2106 = vshrl.u32 %v2105, 7
        %v2107 = vsub.s32 1, %v2106
        %v2108 = vrot.slane %v2094, %v2107
        %v2111 = vmul.f32 %v2091, %v2104
        %v2112 = vmul.f32 %v2092, %v2108
        %v2113 = vmul.f32 %v2111, %v2099
        %v2114 = vmul.f32 %v2112, %v2099
        %v2115 = vadd.f32 %v1991, %v2113
        %v2116 = vadd.f32 %v1992, %v2114
        %v2117 = vadd.f32 %v2115, %v2022
        %v2118 = vadd.f32 %v2116, %v2023
        %v2119 = vadd.f32 %v2053, %v2084
        %v2120 = vadd.f32 %v2054, %v2085
        %v2121 = vadd.f32 %v2117, %v2119
        %v2122 = vadd.f32 %v2118, %v2120
        %v2125 = vrot.slane %v2121, 1
        %v2126 = vrot.slane %v2122, 1
        %v2129 = vadd.f32 %v2121, %v2125
        %v2130 = vadd.f32 %v2122, %v2126
        %v2131 = vxor.u32 %v2129, 2147483648
        %v2132 = vxor.u32 %v2130, 2147483648
        %v2133 = vmul.f32 %v2131, 1.442695
        %v2134 = vpow.pop %v2133
        %v2135 = vmul.f32 %v2132, 1.442695
        %v2136 = vpow.pop %v2135
        %v2137 = vadd.f32 %v2134, 1.0
        %v2138 = vadd.f32 %v2136, 1.0
        %v2139 = vrcp.pop %v2137
        %v2140 = vmul.f32 1.0, %v2139
        %v2141 = vrcp.pop %v2138
        %v2142 = vmul.f32 1.0, %v2141
        %v2143 = vlaneseq
        %v2144 = vshrl.u32 %v2143, 7
        %v2145 = vsub.s32 0, %v2144
        %v2146 = vrot.slane %v2140, %v2145
        %v2147 = vlaneseq
        %v2148 = vshrl.u32 %v2147, 7
        %v2149 = vsub.s32 0, %v2148
        %v2150 = vrot.slane %v2142, %v2149
        %v2151 = vmul.f32 %v272, %v2146
        %v2152 = vmul.f32 %v273, %v2150
        %v2153 = vmul.f32 %v274, %v2146
        %v2154 = vmul.f32 %v275, %v2150
        %v2155 = vmul.f32 %v276, %v2146
        %v2156 = vmul.f32 %v277, %v2150
        %v2157 = vmul.f32 %v278, %v2146
        %v2158 = vmul.f32 %v279, %v2150
        %2159 = vst [vmem:[%s271] sm:$0xff] %v2151
        %2160 = vst [vmem:[%s271 + $0x8] sm:$0xff] %v2152
        %2161 = vst [vmem:[%s271 + $0x10] sm:$0xff] %v2153
        %2162 = vst [vmem:[%s271 + $0x18] sm:$0xff] %v2154
        %2163 = vst [vmem:[%s271 + $0x20] sm:$0xff] %v2155
        %2164 = vst [vmem:[%s271 + $0x28] sm:$0xff] %v2156
        %2165 = vst [vmem:[%s271 + $0x30] sm:$0xff] %v2157
        %2166 = vst [vmem:[%s271 + $0x38] sm:$0xff] %v2158
        %s2167 = sand.u32 %s142, 1
        %s2168 = scalar_lea.sflag [#allocation4], %s2167
        %s2169 = sand.u32 %s142, 1
        %s2170 = smul.addr %s2169, 64
        %s2171 = scalar_lea.vmem [#allocation9], %s2170
        // Predicated region
        $region53: #{tpu_custom_call.1} parent=39 // pred_check
          %p2172 = pneg %p152
        $region54: #{tpu_custom_call.1} parent=39 // pred_check_branch
          %2174 = sbr.rel (%p2172) target = $region56
        $region55: #{tpu_custom_call.1} parent=39 // pred_region
          %s2176 = ssub.s32 1024, 1024
          %2177 = vsyncadd %s2168, %s2176
          %s2178 = smul.addr %s24, 8
          %s2179 = smul.addr %s2178, 128
          %s2180 = scalar_lea.hbm %s5, %s2179
          %s2181 = sshll.u32 %s2171, 4
          %s2182 = int_to_ptr.vmem [resolvable:$true] %s2181
          %2187 = dma.vmem_to_hbm [thread:$0]  %s2182, 1024, %s2180, %s2168, 256, 256, 16
        $region56: #{tpu_custom_call.1} parent=39 // pred_fallthru
          _
      $region40: #{tpu_custom_call.1} parent=5 // pred_fallthru
        _
      %p2188 = scmp.le.s32.totalorder 2, %s19
      // Predicated region
      $region57: #{tpu_custom_call.1} parent=5 // pred_check
        %p2189 = pneg %p2188
      $region58: #{tpu_custom_call.1} parent=5 // pred_check_branch
        %2191 = sbr.rel (%p2189) target = $region60
      $region59: #{tpu_custom_call.1} parent=5 // pred_region
        %s2192 = ssub.s32 %s19, 2
        // Predicated region
        $region61: #{tpu_custom_call.1} parent=59 // pred_check
          %p2193 = pneg %p158
        $region62: #{tpu_custom_call.1} parent=59 // pred_check_branch
          %2195 = sbr.rel (%p2193) target = $region64
        $region63: #{tpu_custom_call.1} parent=59 // pred_region
          %s2196 = sand.u32 %s143, 1
          %s2197 = scalar_lea.sflag [#allocation4], %s2196
          %s2198 = sand.u32 %s143, 1
          %s2199 = smul.addr %s2198, 64
          %s2200 = scalar_lea.vmem [#allocation9], %s2199
          %2201 = dma.done %s2197, 1024
        $region64: #{tpu_custom_call.1} parent=59 // pred_fallthru
          _
      $region60: #{tpu_custom_call.1} parent=5 // pred_fallthru
        _
    $region6: #{tpu_custom_call.1} parent=1 // loop_footer
      %s23 = sadd.s32 1, %s19
    $region7: #{tpu_custom_call.1} parent=1 // loop_footer_branch
      %18 = sbr.rel target = $region3
    $region8: #{tpu_custom_call.1} parent=1 // loop_exit
      _
    %2202 = vsyncpa [#allocation3], 1
    %s2203 = scalar_lea.sflag [#allocation3], 1
    %2204 = vsyncpa %s2203, 1
    %2205 = vsyncpa [#allocation8], 1
    %2206 = vsyncpa [#allocation4], 1
    %s2207 = scalar_lea.sflag [#allocation4], 1
    %2208 = vsyncpa %s2207, 1
    %2209 = vsyncpa [#allocation5], 1
    %s2210 = scalar_lea.sflag [#allocation5], 1
    %2211 = vsyncpa %s2210, 1

</llo_original>
